<compile_context>
chip_gen: v6e
topology: v6e:2x2x1
jax: 0.10.0
libtpu: 0.0.40
codegen_flags: <defaults>
</compile_context>

<pallas_src>
import math
import functools

import jax
import jax.numpy as jnp
from jax import lax
from jax.experimental import pallas as pl
from jax.experimental.pallas import tpu as pltpu


def _self_attention_kernel(x_ref, wqkv_ref, bqkv_ref, wo_ref, bo_ref, o_ref,
                           *, n_heads: int, head_dim: int):
    # One grid step == one batch element.
    #   x_ref:    (1, S, D)  bf16
    #   wqkv_ref: (D, 3*D)   bf16   (query columns pre-scaled by 1/sqrt(head_dim))
    #   bqkv_ref: (1, 3*D)   f32    (query part pre-scaled)
    #   wo_ref:   (D, D)     bf16
    #   bo_ref:   (1, D)     f32
    #   o_ref:    (1, S, D)  f32
    _, S, D = x_ref.shape
    H, hd = n_heads, head_dim

    x2 = x_ref[0]                                              # (S, D) bf16

    # ---- fused QKV projection: one lane-dense MXU matmul, f32 accumulate ------
    qkv = jnp.dot(x2, wqkv_ref[...],
                  preferred_element_type=jnp.float32) + bqkv_ref[...]   # (S, 3D) f32

    # ---- split heads: (S, D) -> (H, S, hd) (small O(S*D) lane->sublane move) --
    def heads(t):                                              # t: (S, D) f32
        return t.reshape(S, H, hd).transpose(1, 0, 2)          # (H, S, hd)

    q = heads(qkv[:, :D]).astype(jnp.bfloat16)                 # scale already folded
    k = heads(qkv[:, D:2 * D]).astype(jnp.bfloat16)
    v = heads(qkv[:, 2 * D:]).astype(jnp.bfloat16)

    # ---- causal additive bias (finite fill -> no NaN risk), f32 ----------------
    row = lax.broadcasted_iota(jnp.int32, (S, S), 0)
    col = lax.broadcasted_iota(jnp.int32, (S, S), 1)
    bias = jnp.where(col <= row, jnp.float32(0.0), jnp.float32(-1e30))

    # ---- attention: bf16 MXU operands, f32 softmax, deferred normalization ----
    s = jnp.einsum('hqd,hkd->hqk', q, k,
                   preferred_element_type=jnp.float32) + bias[None]      # (H, S, S)
    m = jnp.max(s, axis=-1, keepdims=True)
    p = jnp.exp(s - m)                                                   # unnormalized
    denom = jnp.sum(p, axis=-1, keepdims=True)                           # (H, S, 1)
    ctx = jnp.einsum('hqk,hkd->hqd', p.astype(jnp.bfloat16), v,
                     preferred_element_type=jnp.float32)                 # (H, S, hd)
    # NOTE: approx reciprocal (EUP vrcp) -> softmax rows sum to 1 within ~1e-3 rel.
    ctx = ctx * pl.reciprocal(denom, approx=True)

    # ---- merge heads + single output-projection matmul -------------------------
    ctx_m = ctx.transpose(1, 0, 2).reshape(S, D)                         # (S, D) f32
    out = jnp.dot(ctx_m.astype(jnp.bfloat16), wo_ref[...],
                  preferred_element_type=jnp.float32) + bo_ref[...]      # (S, D) f32

    o_ref[0] = out.astype(o_ref.dtype)                                   # lane-dense store


def self_attention(x, w_qkv, b_qkv, w_o, b_o, *, n_heads: int):
    """x: (B, S, D); weights stored as (in, out) so y = x @ W + b. Eval-mode forward."""
    B, S, D = x.shape
    assert D % n_heads == 0, "d_model must be divisible by n_heads"
    hd = D // n_heads
    scale = 1.0 / math.sqrt(hd)

    # Parameter prep (cheap elementwise / reshape only, no per-head relayout):
    #  * fold 1/sqrt(head_dim) into the query columns of w_qkv / b_qkv
    #  * cast MXU operands to bf16, keep biases f32 and lane-dense.
    w_qkv_s = w_qkv.at[:, :D].multiply(scale).astype(jnp.bfloat16)        # (D, 3D)
    b_qkv_s = b_qkv.at[:D].multiply(scale).reshape(1, 3 * D).astype(jnp.float32)
    w_o_c = w_o.astype(jnp.bfloat16)                                      # (D, D)
    b_o_c = b_o.reshape(1, D).astype(jnp.float32)
    x_bf = x.astype(jnp.bfloat16)

    kernel = functools.partial(_self_attention_kernel, n_heads=n_heads, head_dim=hd)

    return pl.pallas_call(
        kernel,
        out_shape=jax.ShapeDtypeStruct((B, S, D), x.dtype),
        grid_spec=pltpu.PrefetchScalarGridSpec(
            num_scalar_prefetch=0,
            grid=(B,),                                    # one batch element per step
            in_specs=[
                pl.BlockSpec((1, S, D), lambda b: (b, 0, 0)),      # x
                pl.BlockSpec((D, 3 * D), lambda b: (0, 0)),        # w_qkv (VMEM-resident)
                pl.BlockSpec((1, 3 * D), lambda b: (0, 0)),        # b_qkv (resident)
                pl.BlockSpec((D, D), lambda b: (0, 0)),            # w_o   (resident)
                pl.BlockSpec((1, D), lambda b: (0, 0)),            # b_o   (resident)
            ],
            out_specs=pl.BlockSpec((1, S, D), lambda b: (b, 0, 0)),
        ),
        compiler_params=pltpu.CompilerParams(
            dimension_semantics=("parallel",)),           # v7x: shard batch across TCs
    )(x_bf, w_qkv_s, b_qkv_s, w_o_c, b_o_c)


if __name__ == "__main__":
    # Module-consistent small config: d_model=256, n_heads=8 (module defaults),
    # tiny batch/sequence.  D=256 keeps every matmul output lane-dense.
    B, Seq, D, n_heads = 2, 16, 256, 8
    hd = D // n_heads

    key = jax.random.PRNGKey(0)
    kx, k1, k2, k3, k4 = jax.random.split(key, 5)

    x = jax.random.normal(kx, (B, Seq, D), dtype=jnp.float32)

    bound = 1.0 / math.sqrt(D)
    w_qkv = jax.random.uniform(k1, (D, 3 * D), jnp.float32, -bound, bound)
    b_qkv = jax.random.uniform(k2, (3 * D,), jnp.float32, -bound, bound)
    w_o = jax.random.uniform(k3, (D, D), jnp.float32, -bound, bound)
    b_o = jax.random.uniform(k4, (D,), jnp.float32, -bound, bound)

    out = self_attention(x, w_qkv, b_qkv, w_o, b_o, n_heads=n_heads)
    jax.block_until_ready(out)
    assert out.shape == (B, Seq, D)
    assert bool(jnp.isfinite(out).all())

    # Pure-JAX f32 reference (kernel uses bf16 MXU operands + approx reciprocal,
    # so compare with a generous tolerance).
    def reference(x):
        qkv = x @ w_qkv + b_qkv
        q, k, v = jnp.split(qkv, 3, axis=-1)

        def split_heads(t):
            return t.reshape(B, Seq, n_heads, hd).transpose(0, 2, 1, 3)

        q, k, v = split_heads(q), split_heads(k), split_heads(v)
        s = (q @ jnp.swapaxes(k, -1, -2)) / math.sqrt(hd)
        mask = jnp.tril(jnp.ones((Seq, Seq), dtype=bool))
        s = jnp.where(mask[None, None], s, -jnp.inf)
        w = jax.nn.softmax(s, axis=-1)
        o = (w @ v).transpose(0, 2, 1, 3).reshape(B, Seq, D)
        return o @ w_o + b_o

    ref = reference(x)
    max_err = float(jnp.max(jnp.abs(out - ref)))
    assert max_err < 0.15, f"max abs err too large: {max_err}"

    print("KERNEL_OK")
</pallas_src>

<mosaic_0001>
module attributes {stable_mosaic.version = 11 : i64} {
  func.func @_self_attention_kernel(%arg0: i32, %arg1: memref<1x16x256xbf16, #tpu.memory_space<vmem>>, %arg2: memref<256x768xbf16, #tpu.memory_space<vmem>>, %arg3: memref<1x768xf32, #tpu.memory_space<vmem>>, %arg4: memref<256x256xbf16, #tpu.memory_space<vmem>>, %arg5: memref<1x256xf32, #tpu.memory_space<vmem>>, %arg6: memref<1x16x256xf32, #tpu.memory_space<vmem>>) attributes {dimension_semantics = [#tpu.dimension_semantics<parallel>], iteration_bounds = array<i64: 2>, scalar_prefetch = 0 : i64, scratch_operands = 0 : i64, tpu.core_type = #tpu.core_type<tc>, window_params = [{transform_indices = @transform_0, window_bounds = array<i64: 1, 16, 256>}, {pipeline_mode = #tpu.pipeline_mode<synchronous>, transform_indices = @transform_1, window_bounds = array<i64: 256, 768>}, {pipeline_mode = #tpu.pipeline_mode<synchronous>, transform_indices = @transform_2, window_bounds = array<i64: 1, 768>}, {pipeline_mode = #tpu.pipeline_mode<synchronous>, transform_indices = @transform_3, window_bounds = array<i64: 256, 256>}, {pipeline_mode = #tpu.pipeline_mode<synchronous>, transform_indices = @transform_4, window_bounds = array<i64: 1, 256>}, {transform_indices = @transform_5, window_bounds = array<i64: 1, 16, 256>}]} {
    %c0 = arith.constant 0 : index
    %c0_0 = arith.constant 0 : index
    %c0_1 = arith.constant 0 : index
    %0 = vector.load %arg1[%c0, %c0_0, %c0_1] : memref<1x16x256xbf16, #tpu.memory_space<vmem>>, vector<1x16x256xbf16>
    %1 = vector.shape_cast %0 : vector<1x16x256xbf16> to vector<16x256xbf16>
    %c0_2 = arith.constant 0 : index
    %c0_3 = arith.constant 0 : index
    %2 = vector.load %arg2[%c0_2, %c0_3] : memref<256x768xbf16, #tpu.memory_space<vmem>>, vector<256x768xbf16>
    %cst = arith.constant dense<0.000000e+00> : vector<16x768xf32>
    %3 = tpu.matmul %1, %2, %cst {dimension_numbers = #tpu.dot_dimension_numbers<[1], [0], [0], [1], [0, 0, 1, 1], [], []>} : vector<16x256xbf16>, vector<256x768xbf16>, vector<16x768xf32> -> vector<16x768xf32>
    %c0_4 = arith.constant 0 : index
    %c0_5 = arith.constant 0 : index
    %4 = vector.load %arg3[%c0_4, %c0_5] : memref<1x768xf32, #tpu.memory_space<vmem>>, vector<1x768xf32>
    %5 = vector.broadcast %4 : vector<1x768xf32> to vector<16x768xf32>
    %6 = arith.addf %3, %5 : vector<16x768xf32>
    %7 = vector.extract_strided_slice %6 {offsets = [0, 0], sizes = [16, 256], strides = [1, 1]} : vector<16x768xf32> to vector<16x256xf32>
    %8 = vector.shape_cast %7 : vector<16x256xf32> to vector<16x8x32xf32>
    %9 = tpu.transpose %8, [1, 0, 2] : vector<16x8x32xf32> -> vector<8x16x32xf32>
    %10 = arith.truncf %9 : vector<8x16x32xf32> to vector<8x16x32xbf16>
    %11 = vector.extract_strided_slice %6 {offsets = [0, 256], sizes = [16, 256], strides = [1, 1]} : vector<16x768xf32> to vector<16x256xf32>
    %12 = vector.shape_cast %11 : vector<16x256xf32> to vector<16x8x32xf32>
    %13 = tpu.transpose %12, [1, 0, 2] : vector<16x8x32xf32> -> vector<8x16x32xf32>
    %14 = arith.truncf %13 : vector<8x16x32xf32> to vector<8x16x32xbf16>
    %15 = vector.extract_strided_slice %6 {offsets = [0, 512], sizes = [16, 256], strides = [1, 1]} : vector<16x768xf32> to vector<16x256xf32>
    %16 = vector.shape_cast %15 : vector<16x256xf32> to vector<16x8x32xf32>
    %17 = tpu.transpose %16, [1, 0, 2] : vector<16x8x32xf32> -> vector<8x16x32xf32>
    %18 = arith.truncf %17 : vector<8x16x32xf32> to vector<8x16x32xbf16>
    %19 = tpu.iota {dimensions = array<i32: 0>} : vector<16x16xi32>
    %20 = tpu.iota {dimensions = array<i32: 1>} : vector<16x16xi32>
    %21 = arith.cmpi sle, %20, %19 : vector<16x16xi32>
    %cst_6 = arith.constant 0.000000e+00 : f32
    %cst_7 = arith.constant -1.000000e+30 : f32
    %22 = vector.broadcast %cst_6 : f32 to vector<16x16xf32>
    %23 = vector.broadcast %cst_7 : f32 to vector<16x16xf32>
    %24 = arith.select %21, %22, %23 : vector<16x16xi1>, vector<16x16xf32>
    "tpu.trace_start"() <{level = 10 : i32, message = "hqd,hkd->hqk"}> : () -> ()
    %cst_8 = arith.constant dense<0.000000e+00> : vector<8x16x16xf32>
    %25 = tpu.matmul %10, %14, %cst_8 {dimension_numbers = #tpu.dot_dimension_numbers<[2], [2], [1], [1], [0, 0, 0, 1, 1, 1], [0], [0]>} : vector<8x16x32xbf16>, vector<8x16x32xbf16>, vector<8x16x16xf32> -> vector<8x16x16xf32>
    "tpu.trace_stop"() : () -> ()
    %26 = vector.shape_cast %24 : vector<16x16xf32> to vector<1x16x16xf32>
    %27 = vector.broadcast %26 : vector<1x16x16xf32> to vector<8x16x16xf32>
    %28 = arith.addf %25, %27 : vector<8x16x16xf32>
    %cst_9 = arith.constant dense<0xFF800000> : vector<8x16xf32>
    %29 = vector.multi_reduction <maximumf>, %28, %cst_9 [2] : vector<8x16x16xf32> to vector<8x16xf32>
    %30 = vector.shape_cast %29 : vector<8x16xf32> to vector<8x16x1xf32>
    %31 = vector.broadcast %30 : vector<8x16x1xf32> to vector<8x16x16xf32>
    %32 = arith.subf %28, %31 : vector<8x16x16xf32>
    %33 = math.exp %32 : vector<8x16x16xf32>
    %cst_10 = arith.constant dense<0.000000e+00> : vector<8x16xf32>
    %34 = vector.multi_reduction <add>, %33, %cst_10 [2] : vector<8x16x16xf32> to vector<8x16xf32>
    %35 = vector.shape_cast %34 : vector<8x16xf32> to vector<8x16x1xf32>
    %36 = arith.truncf %33 : vector<8x16x16xf32> to vector<8x16x16xbf16>
    "tpu.trace_start"() <{level = 10 : i32, message = "hqk,hkd->hqd"}> : () -> ()
    %cst_11 = arith.constant dense<0.000000e+00> : vector<8x16x32xf32>
    %37 = tpu.matmul %36, %18, %cst_11 {dimension_numbers = #tpu.dot_dimension_numbers<[2], [1], [1], [2], [0, 0, 0, 1, 1, 2], [0], [0]>} : vector<8x16x16xbf16>, vector<8x16x32xbf16>, vector<8x16x32xf32> -> vector<8x16x32xf32>
    "tpu.trace_stop"() : () -> ()
    %38 = tpu.reciprocal %35 {approx = true} : vector<8x16x1xf32> -> vector<8x16x1xf32>
    %39 = vector.broadcast %38 : vector<8x16x1xf32> to vector<8x16x32xf32>
    %40 = arith.mulf %37, %39 : vector<8x16x32xf32>
    %41 = tpu.transpose %40, [1, 0, 2] : vector<8x16x32xf32> -> vector<16x8x32xf32>
    %42 = vector.shape_cast %41 : vector<16x8x32xf32> to vector<16x256xf32>
    %43 = arith.truncf %42 : vector<16x256xf32> to vector<16x256xbf16>
    %c0_12 = arith.constant 0 : index
    %c0_13 = arith.constant 0 : index
    %44 = vector.load %arg4[%c0_12, %c0_13] : memref<256x256xbf16, #tpu.memory_space<vmem>>, vector<256x256xbf16>
    %cst_14 = arith.constant dense<0.000000e+00> : vector<16x256xf32>
    %45 = tpu.matmul %43, %44, %cst_14 {dimension_numbers = #tpu.dot_dimension_numbers<[1], [0], [0], [1], [0, 0, 1, 1], [], []>} : vector<16x256xbf16>, vector<256x256xbf16>, vector<16x256xf32> -> vector<16x256xf32>
    %c0_15 = arith.constant 0 : index
    %c0_16 = arith.constant 0 : index
    %46 = vector.load %arg5[%c0_15, %c0_16] : memref<1x256xf32, #tpu.memory_space<vmem>>, vector<1x256xf32>
    %47 = vector.broadcast %46 : vector<1x256xf32> to vector<16x256xf32>
    %48 = arith.addf %45, %47 : vector<16x256xf32>
    %c0_17 = arith.constant 0 : index
    %c0_18 = arith.constant 0 : index
    %c0_19 = arith.constant 0 : index
    %49 = vector.load %arg6[%c0_17, %c0_18, %c0_19] : memref<1x16x256xf32, #tpu.memory_space<vmem>>, vector<1x16x256xf32>
    %50 = vector.shape_cast %49 : vector<1x16x256xf32> to vector<16x256xf32>
    %51 = vector.shape_cast %48 : vector<16x256xf32> to vector<1x16x256xf32>
    tpu.vector_store %arg6[%c0_17, %c0_18, %c0_19], %51 {strides = array<i32>} : memref<1x16x256xf32, #tpu.memory_space<vmem>>, vector<1x16x256xf32>,
    return
  }
  func.func @transform_0(%arg0: i32) -> (i32, i32, i32) {
    %c0_i32 = arith.constant 0 : i32
    %c0_i32_0 = arith.constant 0 : i32
    %c0_i32_1 = arith.constant 0 : i32
    return %arg0, %c0_i32, %c0_i32_0 : i32, i32, i32
  }
  func.func @transform_1(%arg0: i32) -> (i32, i32) {
    %c0_i32 = arith.constant 0 : i32
    %c0_i32_0 = arith.constant 0 : i32
    %c0_i32_1 = arith.constant 0 : i32
    return %c0_i32, %c0_i32_0 : i32, i32
  }
  func.func @transform_2(%arg0: i32) -> (i32, i32) {
    %c0_i32 = arith.constant 0 : i32
    %c0_i32_0 = arith.constant 0 : i32
    %c0_i32_1 = arith.constant 0 : i32
    return %c0_i32, %c0_i32_0 : i32, i32
  }
  func.func @transform_3(%arg0: i32) -> (i32, i32) {
    %c0_i32 = arith.constant 0 : i32
    %c0_i32_0 = arith.constant 0 : i32
    %c0_i32_1 = arith.constant 0 : i32
    return %c0_i32, %c0_i32_0 : i32, i32
  }
  func.func @transform_4(%arg0: i32) -> (i32, i32) {
    %c0_i32 = arith.constant 0 : i32
    %c0_i32_0 = arith.constant 0 : i32
    %c0_i32_1 = arith.constant 0 : i32
    return %c0_i32, %c0_i32_0 : i32, i32
  }
  func.func @transform_5(%arg0: i32) -> (i32, i32, i32) {
    %c0_i32 = arith.constant 0 : i32
    %c0_i32_0 = arith.constant 0 : i32
    %c0_i32_1 = arith.constant 0 : i32
    return %arg0, %c0_i32, %c0_i32_0 : i32, i32, i32
  }
}

</mosaic_0001>

<llo_original>
// kernel: tpu_custom_call.1
$region0: #{tpu_custom_call.1}
  #allocation0 [shape = 'u32[]', space=smem, size = 0x4, offset = 0x4, fixed_abs, tag = 'smem constant byte address 0x4 - core index']
  #allocation1 [shape = 'u32[144,128]{1,0:T(1,128)}', space=vmem, size = 0x12000, scoped, tag = 'internal scratch']
  %s0 = inlined_call_operand.hbm [shape: bf16[2,16,256], index: 0, kind: input, shape index: {}]
  %s1 = inlined_call_operand.hbm [shape: bf16[256,768], index: 1, kind: input, shape index: {}]
  %s2 = inlined_call_operand.hbm [shape: f32[1,768], index: 2, kind: input, shape index: {}]
  %s3 = inlined_call_operand.hbm [shape: bf16[256,256], index: 3, kind: input, shape index: {}]
  %s4 = inlined_call_operand.vmem [shape: f32[1,256], index: 4, kind: input, shape index: {}]
  %s5 = inlined_call_operand.hbm [shape: f32[2,16,256], index: 5, kind: output, shape index: {}]
  %s6 = sld [smem:[#allocation0]]
  $region69: #{tpu_custom_call.1} parent=0
    _
  %s8 = ssub.s32 1, %s6
  %s9 = scalar_select 0, %s8, %s6
  $region1: #{tpu_custom_call.1} parent=0
    #allocation2 [shape = 'u8[16384]{0}', space=vmem, size = 0x4000, scoped, tag = 'input window, operand 0']
    #allocation3 [shape = 's32[2]{0}', space=sflag, size = 0x8, scoped, tag = 'scoped memory for tpu_custom_call.1']
    #allocation4 [shape = 's32[2]{0}', space=sflag, size = 0x8, scoped, tag = 'scoped memory for tpu_custom_call.1']
    #allocation5 [shape = 'u8[393216]{0}', space=vmem, size = 0x60000, scoped, tag = 'input window, operand 1, single buffered']
    #allocation6 [shape = 's32[1]{0}', space=sflag, size = 0x4, scoped, tag = 'scoped memory for tpu_custom_call.1']
    #allocation7 [shape = 'u8[3072]{0}', space=vmem, size = 0xc00, scoped, tag = 'input window, operand 2, single buffered']
    #allocation8 [shape = 'u8[131072]{0}', space=vmem, size = 0x20000, scoped, tag = 'input window, operand 3, single buffered']
    #allocation9 [shape = 's32[1]{0}', space=sflag, size = 0x4, scoped, tag = 'scoped memory for tpu_custom_call.1']
    #allocation10 [shape = 'u8[32768]{0}', space=vmem, size = 0x8000, scoped, tag = 'output window, operand 0']
    %10 = vsyncpa [#allocation3], 0
    %s11 = scalar_lea.sflag [#allocation3], 1
    %12 = vsyncpa %s11, 0
    %13 = vsyncpa [#allocation6], 0
    %14 = vsyncpa [#allocation9], 0
    %15 = vsyncpa [#allocation4], 0
    %s16 = scalar_lea.sflag [#allocation4], 1
    %17 = vsyncpa %s16, 0
    loop: start=0, step=1, limit=4
    $region2: #{tpu_custom_call.1} parent=1 // loop_pre_header
      _
    $region3: #{tpu_custom_call.1} parent=1 // loop_header
      %s19 = sphi 0, %s23
      %p20 = scmp.ge.s32.totalorder %s19, 4
      %s29 = sphi 0, %s31
      %s32 = sphi 0, %s29
      %s33 = sphi 0, %s32
      %s49 = sphi 0, %s33
      %s53 = sphi 0, %s53
      %s55 = sphi 0, %s53
      %s56 = sphi 0, %s55
      %s70 = sphi 0, %s56
      %s74 = sphi 0, %s74
      %s76 = sphi 0, %s74
      %s77 = sphi 0, %s76
      %s91 = sphi 0, %s77
      %s95 = sphi 0, %s95
      %s97 = sphi 0, %s95
      %s98 = sphi 0, %s97
      %s112 = sphi 0, %s98
      %s116 = sphi 0, %s116
      %s118 = sphi 0, %s116
      %s119 = sphi 0, %s118
      %s133 = sphi 0, %s119
      %s139 = sphi 0, %s141
      %s142 = sphi 0, %s139
      %s143 = sphi 0, %s142
      %s159 = sphi 0, %s143
    $region4: #{tpu_custom_call.1} parent=1 // loop_header_branch
      %22 = sbr.rel (%p20) target = $region8
    $region5: #{tpu_custom_call.1} parent=1 // loop_body
      %s24 = ssub.s32 %s19, 1
      %s25 = ssub.s32 %s19, 2
      %s26 = sadd.s32 %s19, 1
      %s27 = ssub.s32 %s19, %s26
      %p28 = scmp.eq.s32.totalorder %s27, 0
      %s30 = sadd.s32 %s29, 1
      %s31 = scalar_select %p28, %s29, %s30
      %p34 = pneg %p28
      %p35 = scmp.eq.s32.totalorder %s19, 1
      %p36 = por %p34, %p35
      %p37 = scmp.ne.s32.totalorder %s29, %s32
      %p38 = scmp.eq.s32.totalorder %s19, 0
      %p39 = por %p37, %p38
      %p40 = scmp.ne.s32.totalorder %s29, %s32
      %p41 = scmp.eq.s32.totalorder %s24, 1
      %p42 = por %p40, %p41
      %p43 = scmp.ne.s32.totalorder %s32, %s33
      %p44 = scmp.eq.s32.totalorder %s24, 0
      %p45 = por %p43, %p44
      %p46 = scmp.ne.s32.totalorder %s32, %s33
      %p47 = scmp.eq.s32.totalorder %s25, 1
      %p48 = por %p46, %p47
      %p50 = scmp.ne.s32.totalorder %s33, %s49
      %p51 = scmp.eq.s32.totalorder %s25, 0
      %p52 = por %p50, %p51
      %s54 = sadd.s32 %s53, 1
      %p57 = scmp.eq.s32.totalorder %s19, 1
      %p58 = scmp.ne.s32.totalorder %s53, %s55
      %p59 = scmp.eq.s32.totalorder %s19, 0
      %p60 = por %p58, %p59
      %p61 = scmp.ne.s32.totalorder %s53, %s55
      %p62 = scmp.eq.s32.totalorder %s24, 1
      %p63 = por %p61, %p62
      %p64 = scmp.ne.s32.totalorder %s55, %s56
      %p65 = scmp.eq.s32.totalorder %s24, 0
      %p66 = por %p64, %p65
      %p67 = scmp.ne.s32.totalorder %s55, %s56
      %p68 = scmp.eq.s32.totalorder %s25, 1
      %p69 = por %p67, %p68
      %p71 = scmp.ne.s32.totalorder %s56, %s70
      %p72 = scmp.eq.s32.totalorder %s25, 0
      %p73 = por %p71, %p72
      %s75 = sadd.s32 %s74, 1
      %p78 = scmp.eq.s32.totalorder %s19, 1
      %p79 = scmp.ne.s32.totalorder %s74, %s76
      %p80 = scmp.eq.s32.totalorder %s19, 0
      %p81 = por %p79, %p80
      %p82 = scmp.ne.s32.totalorder %s74, %s76
      %p83 = scmp.eq.s32.totalorder %s24, 1
      %p84 = por %p82, %p83
      %p85 = scmp.ne.s32.totalorder %s76, %s77
      %p86 = scmp.eq.s32.totalorder %s24, 0
      %p87 = por %p85, %p86
      %p88 = scmp.ne.s32.totalorder %s76, %s77
      %p89 = scmp.eq.s32.totalorder %s25, 1
      %p90 = por %p88, %p89
      %p92 = scmp.ne.s32.totalorder %s77, %s91
      %p93 = scmp.eq.s32.totalorder %s25, 0
      %p94 = por %p92, %p93
      %s96 = sadd.s32 %s95, 1
      %p99 = scmp.eq.s32.totalorder %s19, 1
      %p100 = scmp.ne.s32.totalorder %s95, %s97
      %p101 = scmp.eq.s32.totalorder %s19, 0
      %p102 = por %p100, %p101
      %p103 = scmp.ne.s32.totalorder %s95, %s97
      %p104 = scmp.eq.s32.totalorder %s24, 1
      %p105 = por %p103, %p104
      %p106 = scmp.ne.s32.totalorder %s97, %s98
      %p107 = scmp.eq.s32.totalorder %s24, 0
      %p108 = por %p106, %p107
      %p109 = scmp.ne.s32.totalorder %s97, %s98
      %p110 = scmp.eq.s32.totalorder %s25, 1
      %p111 = por %p109, %p110
      %p113 = scmp.ne.s32.totalorder %s98, %s112
      %p114 = scmp.eq.s32.totalorder %s25, 0
      %p115 = por %p113, %p114
      %s117 = sadd.s32 %s116, 1
      %p120 = scmp.eq.s32.totalorder %s19, 1
      %p121 = scmp.ne.s32.totalorder %s116, %s118
      %p122 = scmp.eq.s32.totalorder %s19, 0
      %p123 = por %p121, %p122
      %p124 = scmp.ne.s32.totalorder %s116, %s118
      %p125 = scmp.eq.s32.totalorder %s24, 1
      %p126 = por %p124, %p125
      %p127 = scmp.ne.s32.totalorder %s118, %s119
      %p128 = scmp.eq.s32.totalorder %s24, 0
      %p129 = por %p127, %p128
      %p130 = scmp.ne.s32.totalorder %s118, %s119
      %p131 = scmp.eq.s32.totalorder %s25, 1
      %p132 = por %p130, %p131
      %p134 = scmp.ne.s32.totalorder %s119, %s133
      %p135 = scmp.eq.s32.totalorder %s25, 0
      %p136 = por %p134, %p135
      %s137 = ssub.s32 %s19, %s26
      %p138 = scmp.eq.s32.totalorder %s137, 0
      %s140 = sadd.s32 %s139, 1
      %s141 = scalar_select %p138, %s139, %s140
      %p144 = pneg %p138
      %p145 = scmp.eq.s32.totalorder %s19, 1
      %p146 = por %p144, %p145
      %p147 = scmp.ne.s32.totalorder %s139, %s142
      %p148 = scmp.eq.s32.totalorder %s19, 0
      %p149 = por %p147, %p148
      %p150 = scmp.ne.s32.totalorder %s139, %s142
      %p151 = scmp.eq.s32.totalorder %s24, 1
      %p152 = por %p150, %p151
      %p153 = scmp.ne.s32.totalorder %s142, %s143
      %p154 = scmp.eq.s32.totalorder %s24, 0
      %p155 = por %p153, %p154
      %p156 = scmp.ne.s32.totalorder %s142, %s143
      %p157 = scmp.eq.s32.totalorder %s25, 1
      %p158 = por %p156, %p157
      %p160 = scmp.ne.s32.totalorder %s143, %s159
      %p161 = scmp.eq.s32.totalorder %s25, 0
      %p162 = por %p160, %p161
      %p163 = scmp.le.s32.totalorder 1, %s19
      %p164 = scmp.lt.s32.totalorder %s19, 3
      %p165 = pnand %p163, %p164
      %p166 = pneg %p165
      // Predicated region
      $region9: #{tpu_custom_call.1} parent=5 // pred_check
        _
      $region10: #{tpu_custom_call.1} parent=5 // pred_check_branch
        %168 = sbr.rel (%p165) target = $region12
      $region11: #{tpu_custom_call.1} parent=5 // pred_region
        %s169 = ssub.s32 %s19, 1
        // Predicated region
        $region13: #{tpu_custom_call.1} parent=11 // pred_check
          %p170 = pneg %p66
        $region14: #{tpu_custom_call.1} parent=11 // pred_check_branch
          %172 = sbr.rel (%p170) target = $region16
        $region15: #{tpu_custom_call.1} parent=11 // pred_region
          %s174 = ssub.s32 12288, 12288
          %175 = vsyncadd [#allocation6], %s174
          %s176 = sshll.u32 [#allocation5], 4
          %s177 = int_to_ptr.vmem [resolvable:$true] %s176
          %182 = dma.hbm_to_vmem [thread:$0]  %s1, 12288, %s177, [#allocation6], 384, 384, 24
        $region16: #{tpu_custom_call.1} parent=11 // pred_fallthru
          _
        // Predicated region
        $region17: #{tpu_custom_call.1} parent=11 // pred_check
          %p183 = pneg %p87
        $region18: #{tpu_custom_call.1} parent=11 // pred_check_branch
          %185 = sbr.rel (%p183) target = $region20
        $region19: #{tpu_custom_call.1} parent=11 // pred_region
          %s187 = ssub.s32 96, 96
          %188 = vsyncadd [#allocation6], %s187
          %s190 = sshll.u32 [#allocation7], 4
          %s191 = int_to_ptr.vmem [resolvable:$true] %s190
          %193 = dma.hbm_to_vmem [thread:$0]  %s2, 96, %s191, [#allocation6]
        $region20: #{tpu_custom_call.1} parent=11 // pred_fallthru
          _
        // Predicated region
        $region21: #{tpu_custom_call.1} parent=11 // pred_check
          %p194 = pneg %p108
        $region22: #{tpu_custom_call.1} parent=11 // pred_check_branch
          %196 = sbr.rel (%p194) target = $region24
        $region23: #{tpu_custom_call.1} parent=11 // pred_region
          %s198 = ssub.s32 4096, 4096
          %199 = vsyncadd [#allocation9], %s198
          %s200 = sshll.u32 [#allocation8], 4
          %s201 = int_to_ptr.vmem [resolvable:$true] %s200
          %206 = dma.hbm_to_vmem [thread:$0]  %s3, 4096, %s201, [#allocation9], 128, 128, 8
        $region24: #{tpu_custom_call.1} parent=11 // pred_fallthru
          _
        // Predicated region
        $region25: #{tpu_custom_call.1} parent=11 // pred_check
          %p207 = pneg %p129
        $region26: #{tpu_custom_call.1} parent=11 // pred_check_branch
          %209 = sbr.rel (%p207) target = $region28
        $region27: #{tpu_custom_call.1} parent=11 // pred_region
          _
        $region28: #{tpu_custom_call.1} parent=11 // pred_fallthru
          _
      $region12: #{tpu_custom_call.1} parent=5 // pred_fallthru
        _
      %p210 = scmp.lt.s32.totalorder %s19, 2
      // Predicated region
      $region29: #{tpu_custom_call.1} parent=5 // pred_check
        %p211 = pneg %p210
      $region30: #{tpu_custom_call.1} parent=5 // pred_check_branch
        %213 = sbr.rel (%p211) target = $region32
      $region31: #{tpu_custom_call.1} parent=5 // pred_region
        // Predicated region
        $region33: #{tpu_custom_call.1} parent=31 // pred_check
          %p214 = pneg %p39
        $region34: #{tpu_custom_call.1} parent=31 // pred_check_branch
          %216 = sbr.rel (%p214) target = $region36
        $region35: #{tpu_custom_call.1} parent=31 // pred_region
          %s217 = sand.u32 %s29, 1
          %s218 = scalar_lea.sflag [#allocation3], %s217
          %s219 = sand.u32 %s29, 1
          %s220 = smul.addr %s219, 16
          %s221 = scalar_lea.vmem [#allocation2], %s220
          %s223 = ssub.s32 256, 256
          %224 = vsyncadd %s218, %s223
          %s225 = smul.addr %s19, 4
          %s226 = smul.addr %s225, 64
          %s227 = scalar_lea.hbm %s0, %s226
          %s228 = sshll.u32 %s221, 4
          %s229 = int_to_ptr.vmem [resolvable:$true] %s228
          %234 = dma.hbm_to_vmem [thread:$0]  %s227, 256, %s229, %s218, 128, 128, 8
        $region36: #{tpu_custom_call.1} parent=31 // pred_fallthru
          _
      $region32: #{tpu_custom_call.1} parent=5 // pred_fallthru
        _
      %p235 = scmp.le.s32.totalorder 1, %s19
      %p236 = scmp.lt.s32.totalorder %s19, 3
      %p237 = pnand %p235, %p236
      %p238 = pneg %p237
      // Predicated region
      $region37: #{tpu_custom_call.1} parent=5 // pred_check
        _
      $region38: #{tpu_custom_call.1} parent=5 // pred_check_branch
        %240 = sbr.rel (%p237) target = $region40
      $region39: #{tpu_custom_call.1} parent=5 // pred_region
        %s241 = ssub.s32 %s19, 1
        %s242 = sand.u32 %s32, 1
        %s243 = scalar_lea.sflag [#allocation3], %s242
        %s244 = sand.u32 %s32, 1
        %s245 = smul.addr %s244, 16
        %s246 = scalar_lea.vmem [#allocation2], %s245
        // Predicated region
        $region41: #{tpu_custom_call.1} parent=39 // pred_check
          %p247 = pneg %p45
        $region42: #{tpu_custom_call.1} parent=39 // pred_check_branch
          %249 = sbr.rel (%p247) target = $region44
        $region43: #{tpu_custom_call.1} parent=39 // pred_region
          %250 = dma.done %s243, 256
        $region44: #{tpu_custom_call.1} parent=39 // pred_fallthru
          _
        // Predicated region
        $region45: #{tpu_custom_call.1} parent=39 // pred_check
          %p251 = pneg %p66
        $region46: #{tpu_custom_call.1} parent=39 // pred_check_branch
          %253 = sbr.rel (%p251) target = $region48
        $region47: #{tpu_custom_call.1} parent=39 // pred_region
          %254 = dma.done [#allocation6], 12288
        $region48: #{tpu_custom_call.1} parent=39 // pred_fallthru
          _
        // Predicated region
        $region49: #{tpu_custom_call.1} parent=39 // pred_check
          %p255 = pneg %p87
        $region50: #{tpu_custom_call.1} parent=39 // pred_check_branch
          %257 = sbr.rel (%p255) target = $region52
        $region51: #{tpu_custom_call.1} parent=39 // pred_region
          %258 = dma.done [#allocation6], 96
        $region52: #{tpu_custom_call.1} parent=39 // pred_fallthru
          _
        // Predicated region
        $region53: #{tpu_custom_call.1} parent=39 // pred_check
          %p259 = pneg %p108
        $region54: #{tpu_custom_call.1} parent=39 // pred_check_branch
          %261 = sbr.rel (%p259) target = $region56
        $region55: #{tpu_custom_call.1} parent=39 // pred_region
          %262 = dma.done [#allocation9], 4096
        $region56: #{tpu_custom_call.1} parent=39 // pred_fallthru
          _
        %s263 = sand.u32 %s32, 1
        %s264 = scalar_lea.sflag [#allocation3], %s263
        %s265 = sand.u32 %s32, 1
        %s266 = smul.addr %s265, 16
        %s267 = scalar_lea.vmem [#allocation2], %s266
        %p268 = pneg %p45
        %p269 = pneg %p42
        %p270 = pneg %p66
        %p271 = pneg %p63
        %p272 = pneg %p87
        %p273 = pneg %p84
        %p274 = pneg %p108
        %p275 = pneg %p105
        %p276 = pneg %p129
        %p277 = pneg %p126
        %p278 = pneg %p155
        %p279 = pneg %p152
        %s280 = sand.u32 %s142, 1
        %s281 = scalar_lea.sflag [#allocation4], %s280
        %s282 = sand.u32 %s142, 1
        %s283 = smul.addr %s282, 32
        %s284 = scalar_lea.vmem [#allocation10], %s283
        %v286 = vld [vmem:[%s246] sm:$0xff]
        %v287 = vld [vmem:[%s246 + $0x8] sm:$0xff]
        %v288 = vld [vmem:[#allocation5] sm:$0xff]
        %v289 = vld [vmem:[#allocation5 + $0x8] sm:$0xff]
        %v290 = vld [vmem:[#allocation5 + $0x10] sm:$0xff]
        %v291 = vld [vmem:[#allocation5 + $0x18] sm:$0xff]
        %v292 = vld [vmem:[#allocation5 + $0x20] sm:$0xff]
        %v293 = vld [vmem:[#allocation5 + $0x28] sm:$0xff]
        %v294 = vld [vmem:[#allocation5 + $0x30] sm:$0xff]
        %v295 = vld [vmem:[#allocation5 + $0x38] sm:$0xff]
        %v296 = vld [vmem:[#allocation5 + $0x40] sm:$0xff]
        %v297 = vld [vmem:[#allocation5 + $0x48] sm:$0xff]
        %v298 = vld [vmem:[#allocation5 + $0x50] sm:$0xff]
        %v299 = vld [vmem:[#allocation5 + $0x58] sm:$0xff]
        %v300 = vld [vmem:[#allocation5 + $0x60] sm:$0xff]
        %v301 = vld [vmem:[#allocation5 + $0x68] sm:$0xff]
        %v302 = vld [vmem:[#allocation5 + $0x70] sm:$0xff]
        %v303 = vld [vmem:[#allocation5 + $0x78] sm:$0xff]
        %v304 = vld [vmem:[#allocation5 + $0x80] sm:$0xff]
        %v305 = vld [vmem:[#allocation5 + $0x88] sm:$0xff]
        %v306 = vld [vmem:[#allocation5 + $0x90] sm:$0xff]
        %v307 = vld [vmem:[#allocation5 + $0x98] sm:$0xff]
        %v308 = vld [vmem:[#allocation5 + $0xa0] sm:$0xff]
        %v309 = vld [vmem:[#allocation5 + $0xa8] sm:$0xff]
        %v310 = vld [vmem:[#allocation5 + $0xb0] sm:$0xff]
        %v311 = vld [vmem:[#allocation5 + $0xb8] sm:$0xff]
        %v312 = vld [vmem:[#allocation5 + $0xc0] sm:$0xff]
        %v313 = vld [vmem:[#allocation5 + $0xc8] sm:$0xff]
        %v314 = vld [vmem:[#allocation5 + $0xd0] sm:$0xff]
        %v315 = vld [vmem:[#allocation5 + $0xd8] sm:$0xff]
        %v316 = vld [vmem:[#allocation5 + $0xe0] sm:$0xff]
        %v317 = vld [vmem:[#allocation5 + $0xe8] sm:$0xff]
        %v318 = vld [vmem:[#allocation5 + $0xf0] sm:$0xff]
        %v319 = vld [vmem:[#allocation5 + $0xf8] sm:$0xff]
        %v320 = vld [vmem:[#allocation5 + $0x100] sm:$0xff]
        %v321 = vld [vmem:[#allocation5 + $0x108] sm:$0xff]
        %v322 = vld [vmem:[#allocation5 + $0x110] sm:$0xff]
        %v323 = vld [vmem:[#allocation5 + $0x118] sm:$0xff]
        %v324 = vld [vmem:[#allocation5 + $0x120] sm:$0xff]
        %v325 = vld [vmem:[#allocation5 + $0x128] sm:$0xff]
        %v326 = vld [vmem:[#allocation5 + $0x130] sm:$0xff]
        %v327 = vld [vmem:[#allocation5 + $0x138] sm:$0xff]
        %v328 = vld [vmem:[#allocation5 + $0x140] sm:$0xff]
        %v329 = vld [vmem:[#allocation5 + $0x148] sm:$0xff]
        %v330 = vld [vmem:[#allocation5 + $0x150] sm:$0xff]
        %v331 = vld [vmem:[#allocation5 + $0x158] sm:$0xff]
        %v332 = vld [vmem:[#allocation5 + $0x160] sm:$0xff]
        %v333 = vld [vmem:[#allocation5 + $0x168] sm:$0xff]
        %v334 = vld [vmem:[#allocation5 + $0x170] sm:$0xff]
        %v335 = vld [vmem:[#allocation5 + $0x178] sm:$0xff]
        %v336 = vld [vmem:[#allocation5 + $0x180] sm:$0xff]
        %v337 = vld [vmem:[#allocation5 + $0x188] sm:$0xff]
        %v338 = vld [vmem:[#allocation5 + $0x190] sm:$0xff]
        %v339 = vld [vmem:[#allocation5 + $0x198] sm:$0xff]
        %v340 = vld [vmem:[#allocation5 + $0x1a0] sm:$0xff]
        %v341 = vld [vmem:[#allocation5 + $0x1a8] sm:$0xff]
        %v342 = vld [vmem:[#allocation5 + $0x1b0] sm:$0xff]
        %v343 = vld [vmem:[#allocation5 + $0x1b8] sm:$0xff]
        %v344 = vld [vmem:[#allocation5 + $0x1c0] sm:$0xff]
        %v345 = vld [vmem:[#allocation5 + $0x1c8] sm:$0xff]
        %v346 = vld [vmem:[#allocation5 + $0x1d0] sm:$0xff]
        %v347 = vld [vmem:[#allocation5 + $0x1d8] sm:$0xff]
        %v348 = vld [vmem:[#allocation5 + $0x1e0] sm:$0xff]
        %v349 = vld [vmem:[#allocation5 + $0x1e8] sm:$0xff]
        %v350 = vld [vmem:[#allocation5 + $0x1f0] sm:$0xff]
        %v351 = vld [vmem:[#allocation5 + $0x1f8] sm:$0xff]
        %v352 = vld [vmem:[#allocation5 + $0x200] sm:$0xff]
        %v353 = vld [vmem:[#allocation5 + $0x208] sm:$0xff]
        %v354 = vld [vmem:[#allocation5 + $0x210] sm:$0xff]
        %v355 = vld [vmem:[#allocation5 + $0x218] sm:$0xff]
        %v356 = vld [vmem:[#allocation5 + $0x220] sm:$0xff]
        %v357 = vld [vmem:[#allocation5 + $0x228] sm:$0xff]
        %v358 = vld [vmem:[#allocation5 + $0x230] sm:$0xff]
        %v359 = vld [vmem:[#allocation5 + $0x238] sm:$0xff]
        %v360 = vld [vmem:[#allocation5 + $0x240] sm:$0xff]
        %v361 = vld [vmem:[#allocation5 + $0x248] sm:$0xff]
        %v362 = vld [vmem:[#allocation5 + $0x250] sm:$0xff]
        %v363 = vld [vmem:[#allocation5 + $0x258] sm:$0xff]
        %v364 = vld [vmem:[#allocation5 + $0x260] sm:$0xff]
        %v365 = vld [vmem:[#allocation5 + $0x268] sm:$0xff]
        %v366 = vld [vmem:[#allocation5 + $0x270] sm:$0xff]
        %v367 = vld [vmem:[#allocation5 + $0x278] sm:$0xff]
        %v368 = vld [vmem:[#allocation5 + $0x280] sm:$0xff]
        %v369 = vld [vmem:[#allocation5 + $0x288] sm:$0xff]
        %v370 = vld [vmem:[#allocation5 + $0x290] sm:$0xff]
        %v371 = vld [vmem:[#allocation5 + $0x298] sm:$0xff]
        %v372 = vld [vmem:[#allocation5 + $0x2a0] sm:$0xff]
        %v373 = vld [vmem:[#allocation5 + $0x2a8] sm:$0xff]
        %v374 = vld [vmem:[#allocation5 + $0x2b0] sm:$0xff]
        %v375 = vld [vmem:[#allocation5 + $0x2b8] sm:$0xff]
        %v376 = vld [vmem:[#allocation5 + $0x2c0] sm:$0xff]
        %v377 = vld [vmem:[#allocation5 + $0x2c8] sm:$0xff]
        %v378 = vld [vmem:[#allocation5 + $0x2d0] sm:$0xff]
        %v379 = vld [vmem:[#allocation5 + $0x2d8] sm:$0xff]
        %v380 = vld [vmem:[#allocation5 + $0x2e0] sm:$0xff]
        %v381 = vld [vmem:[#allocation5 + $0x2e8] sm:$0xff]
        %v382 = vld [vmem:[#allocation5 + $0x2f0] sm:$0xff]
        %v383 = vld [vmem:[#allocation5 + $0x2f8] sm:$0xff]
        %v384 = vld [vmem:[#allocation7] sm:$0x3f]
        %v386 = vlaneseq
        %v387 = vshrl.u32 %v386, 7
        %v388 = vsub.s32 0, %v387
        %v389 = vrot.slane %v384, %v388
        %v390 = vlaneseq
        %v391 = vshrl.u32 %v390, 7
        %v392 = vsub.s32 1, %v391
        %v393 = vrot.slane %v384, %v392
        %v394 = vlaneseq
        %v395 = vshrl.u32 %v394, 7
        %v396 = vsub.s32 2, %v395
        %v397 = vrot.slane %v384, %v396
        %v398 = vlaneseq
        %v399 = vshrl.u32 %v398, 7
        %v400 = vsub.s32 3, %v399
        %v401 = vrot.slane %v384, %v400
        %v402 = vlaneseq
        %v403 = vshrl.u32 %v402, 7
        %v404 = vsub.s32 4, %v403
        %v405 = vrot.slane %v384, %v404
        %v406 = vlaneseq
        %v407 = vshrl.u32 %v406, 7
        %v408 = vsub.s32 5, %v407
        %v409 = vrot.slane %v384, %v408
        %v418 = vunpack.c.l.b16 %v286
        %v419 = vunpack.c.h.b16 %v286
        %v420 = vunpack.c.l.b16 %v287
        %v421 = vunpack.c.h.b16 %v287
        %v422 = vpack.c.b16 %v420, %v418
        %v423 = vpack.c.b16 %v421, %v419
        %v522 = vunpack.c.l.b16 %v288
        %v523 = vunpack.c.h.b16 %v288
        %v524 = vunpack.c.l.b16 %v289
        %v525 = vunpack.c.h.b16 %v289
        %v526 = vunpack.c.l.b16 %v290
        %v527 = vunpack.c.h.b16 %v290
        %v528 = vunpack.c.l.b16 %v291
        %v529 = vunpack.c.h.b16 %v291
        %v530 = vunpack.c.l.b16 %v292
        %v531 = vunpack.c.h.b16 %v292
        %v532 = vunpack.c.l.b16 %v293
        %v533 = vunpack.c.h.b16 %v293
        %v534 = vunpack.c.l.b16 %v294
        %v535 = vunpack.c.h.b16 %v294
        %v536 = vunpack.c.l.b16 %v295
        %v537 = vunpack.c.h.b16 %v295
        %v538 = vunpack.c.l.b16 %v296
        %v539 = vunpack.c.h.b16 %v296
        %v540 = vunpack.c.l.b16 %v297
        %v541 = vunpack.c.h.b16 %v297
        %v542 = vunpack.c.l.b16 %v298
        %v543 = vunpack.c.h.b16 %v298
        %v544 = vunpack.c.l.b16 %v299
        %v545 = vunpack.c.h.b16 %v299
        %v546 = vunpack.c.l.b16 %v300
        %v547 = vunpack.c.h.b16 %v300
        %v548 = vunpack.c.l.b16 %v301
        %v549 = vunpack.c.h.b16 %v301
        %v550 = vunpack.c.l.b16 %v302
        %v551 = vunpack.c.h.b16 %v302
        %v552 = vunpack.c.l.b16 %v303
        %v553 = vunpack.c.h.b16 %v303
        %v554 = vunpack.c.l.b16 %v304
        %v555 = vunpack.c.h.b16 %v304
        %v556 = vunpack.c.l.b16 %v305
        %v557 = vunpack.c.h.b16 %v305
        %v558 = vunpack.c.l.b16 %v306
        %v559 = vunpack.c.h.b16 %v306
        %v560 = vunpack.c.l.b16 %v307
        %v561 = vunpack.c.h.b16 %v307
        %v562 = vunpack.c.l.b16 %v308
        %v563 = vunpack.c.h.b16 %v308
        %v564 = vunpack.c.l.b16 %v309
        %v565 = vunpack.c.h.b16 %v309
        %v566 = vunpack.c.l.b16 %v310
        %v567 = vunpack.c.h.b16 %v310
        %v568 = vunpack.c.l.b16 %v311
        %v569 = vunpack.c.h.b16 %v311
        %v570 = vunpack.c.l.b16 %v312
        %v571 = vunpack.c.h.b16 %v312
        %v572 = vunpack.c.l.b16 %v313
        %v573 = vunpack.c.h.b16 %v313
        %v574 = vunpack.c.l.b16 %v314
        %v575 = vunpack.c.h.b16 %v314
        %v576 = vunpack.c.l.b16 %v315
        %v577 = vunpack.c.h.b16 %v315
        %v578 = vunpack.c.l.b16 %v316
        %v579 = vunpack.c.h.b16 %v316
        %v580 = vunpack.c.l.b16 %v317
        %v581 = vunpack.c.h.b16 %v317
        %v582 = vunpack.c.l.b16 %v318
        %v583 = vunpack.c.h.b16 %v318
        %v584 = vunpack.c.l.b16 %v319
        %v585 = vunpack.c.h.b16 %v319
        %v586 = vunpack.c.l.b16 %v320
        %v587 = vunpack.c.h.b16 %v320
        %v588 = vunpack.c.l.b16 %v321
        %v589 = vunpack.c.h.b16 %v321
        %v590 = vunpack.c.l.b16 %v322
        %v591 = vunpack.c.h.b16 %v322
        %v592 = vunpack.c.l.b16 %v323
        %v593 = vunpack.c.h.b16 %v323
        %v594 = vunpack.c.l.b16 %v324
        %v595 = vunpack.c.h.b16 %v324
        %v596 = vunpack.c.l.b16 %v325
        %v597 = vunpack.c.h.b16 %v325
        %v598 = vunpack.c.l.b16 %v326
        %v599 = vunpack.c.h.b16 %v326
        %v600 = vunpack.c.l.b16 %v327
        %v601 = vunpack.c.h.b16 %v327
        %v602 = vunpack.c.l.b16 %v328
        %v603 = vunpack.c.h.b16 %v328
        %v604 = vunpack.c.l.b16 %v329
        %v605 = vunpack.c.h.b16 %v329
        %v606 = vunpack.c.l.b16 %v330
        %v607 = vunpack.c.h.b16 %v330
        %v608 = vunpack.c.l.b16 %v331
        %v609 = vunpack.c.h.b16 %v331
        %v610 = vunpack.c.l.b16 %v332
        %v611 = vunpack.c.h.b16 %v332
        %v612 = vunpack.c.l.b16 %v333
        %v613 = vunpack.c.h.b16 %v333
        %v614 = vunpack.c.l.b16 %v334
        %v615 = vunpack.c.h.b16 %v334
        %v616 = vunpack.c.l.b16 %v335
        %v617 = vunpack.c.h.b16 %v335
        %v618 = vunpack.c.l.b16 %v336
        %v619 = vunpack.c.h.b16 %v336
        %v620 = vunpack.c.l.b16 %v337
        %v621 = vunpack.c.h.b16 %v337
        %v622 = vunpack.c.l.b16 %v338
        %v623 = vunpack.c.h.b16 %v338
        %v624 = vunpack.c.l.b16 %v339
        %v625 = vunpack.c.h.b16 %v339
        %v626 = vunpack.c.l.b16 %v340
        %v627 = vunpack.c.h.b16 %v340
        %v628 = vunpack.c.l.b16 %v341
        %v629 = vunpack.c.h.b16 %v341
        %v630 = vunpack.c.l.b16 %v342
        %v631 = vunpack.c.h.b16 %v342
        %v632 = vunpack.c.l.b16 %v343
        %v633 = vunpack.c.h.b16 %v343
        %v634 = vunpack.c.l.b16 %v344
        %v635 = vunpack.c.h.b16 %v344
        %v636 = vunpack.c.l.b16 %v345
        %v637 = vunpack.c.h.b16 %v345
        %v638 = vunpack.c.l.b16 %v346
        %v639 = vunpack.c.h.b16 %v346
        %v640 = vunpack.c.l.b16 %v347
        %v641 = vunpack.c.h.b16 %v347
        %v642 = vunpack.c.l.b16 %v348
        %v643 = vunpack.c.h.b16 %v348
        %v644 = vunpack.c.l.b16 %v349
        %v645 = vunpack.c.h.b16 %v349
        %v646 = vunpack.c.l.b16 %v350
        %v647 = vunpack.c.h.b16 %v350
        %v648 = vunpack.c.l.b16 %v351
        %v649 = vunpack.c.h.b16 %v351
        %v650 = vunpack.c.l.b16 %v352
        %v651 = vunpack.c.h.b16 %v352
        %v652 = vunpack.c.l.b16 %v353
        %v653 = vunpack.c.h.b16 %v353
        %v654 = vunpack.c.l.b16 %v354
        %v655 = vunpack.c.h.b16 %v354
        %v656 = vunpack.c.l.b16 %v355
        %v657 = vunpack.c.h.b16 %v355
        %v658 = vunpack.c.l.b16 %v356
        %v659 = vunpack.c.h.b16 %v356
        %v660 = vunpack.c.l.b16 %v357
        %v661 = vunpack.c.h.b16 %v357
        %v662 = vunpack.c.l.b16 %v358
        %v663 = vunpack.c.h.b16 %v358
        %v664 = vunpack.c.l.b16 %v359
        %v665 = vunpack.c.h.b16 %v359
        %v666 = vunpack.c.l.b16 %v360
        %v667 = vunpack.c.h.b16 %v360
        %v668 = vunpack.c.l.b16 %v361
        %v669 = vunpack.c.h.b16 %v361
        %v670 = vunpack.c.l.b16 %v362
        %v671 = vunpack.c.h.b16 %v362
        %v672 = vunpack.c.l.b16 %v363
        %v673 = vunpack.c.h.b16 %v363
        %v674 = vunpack.c.l.b16 %v364
        %v675 = vunpack.c.h.b16 %v364
        %v676 = vunpack.c.l.b16 %v365
        %v677 = vunpack.c.h.b16 %v365
        %v678 = vunpack.c.l.b16 %v366
        %v679 = vunpack.c.h.b16 %v366
        %v680 = vunpack.c.l.b16 %v367
        %v681 = vunpack.c.h.b16 %v367
        %v682 = vunpack.c.l.b16 %v368
        %v683 = vunpack.c.h.b16 %v368
        %v684 = vunpack.c.l.b16 %v369
        %v685 = vunpack.c.h.b16 %v369
        %v686 = vunpack.c.l.b16 %v370
        %v687 = vunpack.c.h.b16 %v370
        %v688 = vunpack.c.l.b16 %v371
        %v689 = vunpack.c.h.b16 %v371
        %v690 = vunpack.c.l.b16 %v372
        %v691 = vunpack.c.h.b16 %v372
        %v692 = vunpack.c.l.b16 %v373
        %v693 = vunpack.c.h.b16 %v373
        %v694 = vunpack.c.l.b16 %v374
        %v695 = vunpack.c.h.b16 %v374
        %v696 = vunpack.c.l.b16 %v375
        %v697 = vunpack.c.h.b16 %v375
        %v698 = vunpack.c.l.b16 %v376
        %v699 = vunpack.c.h.b16 %v376
        %v700 = vunpack.c.l.b16 %v377
        %v701 = vunpack.c.h.b16 %v377
        %v702 = vunpack.c.l.b16 %v378
        %v703 = vunpack.c.h.b16 %v378
        %v704 = vunpack.c.l.b16 %v379
        %v705 = vunpack.c.h.b16 %v379
        %v706 = vunpack.c.l.b16 %v380
        %v707 = vunpack.c.h.b16 %v380
        %v708 = vunpack.c.l.b16 %v381
        %v709 = vunpack.c.h.b16 %v381
        %v710 = vunpack.c.l.b16 %v382
        %v711 = vunpack.c.h.b16 %v382
        %v712 = vunpack.c.l.b16 %v383
        %v713 = vunpack.c.h.b16 %v383
        %v714 = vpack.c.b16 %v528, %v522
        %v715 = vpack.c.b16 %v529, %v523
        %v716 = vpack.c.b16 %v530, %v524
        %v717 = vpack.c.b16 %v531, %v525
        %v718 = vpack.c.b16 %v532, %v526
        %v719 = vpack.c.b16 %v533, %v527
        %v720 = vpack.c.b16 %v540, %v534
        %v721 = vpack.c.b16 %v541, %v535
        %v722 = vpack.c.b16 %v542, %v536
        %v723 = vpack.c.b16 %v543, %v537
        %v724 = vpack.c.b16 %v544, %v538
        %v725 = vpack.c.b16 %v545, %v539
        %v726 = vpack.c.b16 %v552, %v546
        %v727 = vpack.c.b16 %v553, %v547
        %v728 = vpack.c.b16 %v554, %v548
        %v729 = vpack.c.b16 %v555, %v549
        %v730 = vpack.c.b16 %v556, %v550
        %v731 = vpack.c.b16 %v557, %v551
        %v732 = vpack.c.b16 %v564, %v558
        %v733 = vpack.c.b16 %v565, %v559
        %v734 = vpack.c.b16 %v566, %v560
        %v735 = vpack.c.b16 %v567, %v561
        %v736 = vpack.c.b16 %v568, %v562
        %v737 = vpack.c.b16 %v569, %v563
        %v738 = vpack.c.b16 %v576, %v570
        %v739 = vpack.c.b16 %v577, %v571
        %v740 = vpack.c.b16 %v578, %v572
        %v741 = vpack.c.b16 %v579, %v573
        %v742 = vpack.c.b16 %v580, %v574
        %v743 = vpack.c.b16 %v581, %v575
        %v744 = vpack.c.b16 %v588, %v582
        %v745 = vpack.c.b16 %v589, %v583
        %v746 = vpack.c.b16 %v590, %v584
        %v747 = vpack.c.b16 %v591, %v585
        %v748 = vpack.c.b16 %v592, %v586
        %v749 = vpack.c.b16 %v593, %v587
        %v750 = vpack.c.b16 %v600, %v594
        %v751 = vpack.c.b16 %v601, %v595
        %v752 = vpack.c.b16 %v602, %v596
        %v753 = vpack.c.b16 %v603, %v597
        %v754 = vpack.c.b16 %v604, %v598
        %v755 = vpack.c.b16 %v605, %v599
        %v756 = vpack.c.b16 %v612, %v606
        %v757 = vpack.c.b16 %v613, %v607
        %v758 = vpack.c.b16 %v614, %v608
        %v759 = vpack.c.b16 %v615, %v609
        %v760 = vpack.c.b16 %v616, %v610
        %v761 = vpack.c.b16 %v617, %v611
        %v762 = vpack.c.b16 %v624, %v618
        %v763 = vpack.c.b16 %v625, %v619
        %v764 = vpack.c.b16 %v626, %v620
        %v765 = vpack.c.b16 %v627, %v621
        %v766 = vpack.c.b16 %v628, %v622
        %v767 = vpack.c.b16 %v629, %v623
        %v768 = vpack.c.b16 %v636, %v630
        %v769 = vpack.c.b16 %v637, %v631
        %v770 = vpack.c.b16 %v638, %v632
        %v771 = vpack.c.b16 %v639, %v633
        %v772 = vpack.c.b16 %v640, %v634
        %v773 = vpack.c.b16 %v641, %v635
        %v774 = vpack.c.b16 %v648, %v642
        %v775 = vpack.c.b16 %v649, %v643
        %v776 = vpack.c.b16 %v650, %v644
        %v777 = vpack.c.b16 %v651, %v645
        %v778 = vpack.c.b16 %v652, %v646
        %v779 = vpack.c.b16 %v653, %v647
        %v780 = vpack.c.b16 %v660, %v654
        %v781 = vpack.c.b16 %v661, %v655
        %v782 = vpack.c.b16 %v662, %v656
        %v783 = vpack.c.b16 %v663, %v657
        %v784 = vpack.c.b16 %v664, %v658
        %v785 = vpack.c.b16 %v665, %v659
        %v786 = vpack.c.b16 %v672, %v666
        %v787 = vpack.c.b16 %v673, %v667
        %v788 = vpack.c.b16 %v674, %v668
        %v789 = vpack.c.b16 %v675, %v669
        %v790 = vpack.c.b16 %v676, %v670
        %v791 = vpack.c.b16 %v677, %v671
        %v792 = vpack.c.b16 %v684, %v678
        %v793 = vpack.c.b16 %v685, %v679
        %v794 = vpack.c.b16 %v686, %v680
        %v795 = vpack.c.b16 %v687, %v681
        %v796 = vpack.c.b16 %v688, %v682
        %v797 = vpack.c.b16 %v689, %v683
        %v798 = vpack.c.b16 %v696, %v690
        %v799 = vpack.c.b16 %v697, %v691
        %v800 = vpack.c.b16 %v698, %v692
        %v801 = vpack.c.b16 %v699, %v693
        %v802 = vpack.c.b16 %v700, %v694
        %v803 = vpack.c.b16 %v701, %v695
        %v804 = vpack.c.b16 %v708, %v702
        %v805 = vpack.c.b16 %v709, %v703
        %v806 = vpack.c.b16 %v710, %v704
        %v807 = vpack.c.b16 %v711, %v705
        %v808 = vpack.c.b16 %v712, %v706
        %v809 = vpack.c.b16 %v713, %v707
        %906 = vmatprep.subr.bf16.mxu0 %v757
        %907 = vmatpush1.bf16.msra.mxu0 %v756
        %908 = vmatprep.subr.bf16.mxu0 %v751
        %909 = vmatpush1.bf16.msra.mxu0 %v750
        %910 = vmatprep.subr.bf16.mxu0 %v745
        %911 = vmatpush1.bf16.msra.mxu0 %v744
        %912 = vmatprep.subr.bf16.mxu0 %v739
        %913 = vmatpush1.bf16.msra.mxu0 %v738
        %914 = vmatprep.subr.bf16.mxu0 %v733
        %915 = vmatpush1.bf16.msra.mxu0 %v732
        %916 = vmatprep.subr.bf16.mxu0 %v727
        %917 = vmatpush1.bf16.msra.mxu0 %v726
        %918 = vmatprep.subr.bf16.mxu0 %v721
        %919 = vmatpush1.bf16.msra.mxu0 %v720
        %920 = vmatprep.subr.bf16.mxu0 %v715
        %921 = vmatpush1.bf16.msra.mxu0 %v714
        %922 = vmatprep.subr.bf16.mxu0 %v805
        %923 = vmatpush2.bf16.msra.mxu0 %v804
        %924 = vmatprep.subr.bf16.mxu0 %v799
        %925 = vmatpush2.bf16.msra.mxu0 %v798
        %926 = vmatprep.subr.bf16.mxu0 %v793
        %927 = vmatpush2.bf16.msra.mxu0 %v792
        %928 = vmatprep.subr.bf16.mxu0 %v787
        %929 = vmatpush2.bf16.msra.mxu0 %v786
        %930 = vmatprep.subr.bf16.mxu0 %v781
        %931 = vmatpush2.bf16.msra.mxu0 %v780
        %932 = vmatprep.subr.bf16.mxu0 %v775
        %933 = vmatpush2.bf16.msra.mxu0 %v774
        %934 = vmatprep.subr.bf16.mxu0 %v769
        %935 = vmatpush2.bf16.msra.mxu0 %v768
        %936 = vmatprep.subr.bf16.mxu0 %v763
        %937 = vmatpush2.bf16.msra.mxu0 %v762
        %938 = vmatprep.mubr.bf16.mxu0 %v423
        %939 = vmatmul.mubr.bf16.gmra.mxu0 %v422
        %v940 = vpop.f32.mrf.mxu0
        %v941 = vadd.f32 %v389, %v940
        %v942 = vpop.f32.mrf.mxu0
        %v943 = vadd.f32 %v393, %v942
        %v944 = vpop.f32.mrf.mxu0
        %v945 = vadd.f32 %v389, %v944
        %v946 = vpop.f32.mrf.mxu0
        %v947 = vadd.f32 %v393, %v946
        %948 = vdwg.mxu0
        %949 = vmatprep.subr.bf16.mxu0 %v759
        %950 = vmatpush1.bf16.msra.mxu0 %v758
        %951 = vmatprep.subr.bf16.mxu0 %v753
        %952 = vmatpush1.bf16.msra.mxu0 %v752
        %953 = vmatprep.subr.bf16.mxu0 %v747
        %954 = vmatpush1.bf16.msra.mxu0 %v746
        %955 = vmatprep.subr.bf16.mxu0 %v741
        %956 = vmatpush1.bf16.msra.mxu0 %v740
        %957 = vmatprep.subr.bf16.mxu0 %v735
        %958 = vmatpush1.bf16.msra.mxu0 %v734
        %959 = vmatprep.subr.bf16.mxu0 %v729
        %960 = vmatpush1.bf16.msra.mxu0 %v728
        %961 = vmatprep.subr.bf16.mxu0 %v723
        %962 = vmatpush1.bf16.msra.mxu0 %v722
        %963 = vmatprep.subr.bf16.mxu0 %v717
        %964 = vmatpush1.bf16.msra.mxu0 %v716
        %965 = vmatprep.subr.bf16.mxu0 %v807
        %966 = vmatpush2.bf16.msra.mxu0 %v806
        %967 = vmatprep.subr.bf16.mxu0 %v801
        %968 = vmatpush2.bf16.msra.mxu0 %v800
        %969 = vmatprep.subr.bf16.mxu0 %v795
        %970 = vmatpush2.bf16.msra.mxu0 %v794
        %971 = vmatprep.subr.bf16.mxu0 %v789
        %972 = vmatpush2.bf16.msra.mxu0 %v788
        %973 = vmatprep.subr.bf16.mxu0 %v783
        %974 = vmatpush2.bf16.msra.mxu0 %v782
        %975 = vmatprep.subr.bf16.mxu0 %v777
        %976 = vmatpush2.bf16.msra.mxu0 %v776
        %977 = vmatprep.subr.bf16.mxu0 %v771
        %978 = vmatpush2.bf16.msra.mxu0 %v770
        %979 = vmatprep.subr.bf16.mxu0 %v765
        %980 = vmatpush2.bf16.msra.mxu0 %v764
        %981 = vmatprep.mubr.bf16.mxu0 %v423
        %982 = vmatmul.mubr.bf16.gmra.mxu0 %v422
        %v983 = vpop.f32.mrf.mxu0
        %v984 = vadd.f32 %v397, %v983
        %v985 = vpop.f32.mrf.mxu0
        %v986 = vadd.f32 %v401, %v985
        %v987 = vpop.f32.mrf.mxu0
        %v988 = vadd.f32 %v397, %v987
        %v989 = vpop.f32.mrf.mxu0
        %v990 = vadd.f32 %v401, %v989
        %991 = vdwg.mxu0
        %992 = vmatprep.subr.bf16.mxu0 %v761
        %993 = vmatpush1.bf16.msra.mxu0 %v760
        %994 = vmatprep.subr.bf16.mxu0 %v755
        %995 = vmatpush1.bf16.msra.mxu0 %v754
        %996 = vmatprep.subr.bf16.mxu0 %v749
        %997 = vmatpush1.bf16.msra.mxu0 %v748
        %998 = vmatprep.subr.bf16.mxu0 %v743
        %999 = vmatpush1.bf16.msra.mxu0 %v742
        %1000 = vmatprep.subr.bf16.mxu0 %v737
        %1001 = vmatpush1.bf16.msra.mxu0 %v736
        %1002 = vmatprep.subr.bf16.mxu0 %v731
        %1003 = vmatpush1.bf16.msra.mxu0 %v730
        %1004 = vmatprep.subr.bf16.mxu0 %v725
        %1005 = vmatpush1.bf16.msra.mxu0 %v724
        %1006 = vmatprep.subr.bf16.mxu0 %v719
        %1007 = vmatpush1.bf16.msra.mxu0 %v718
        %1008 = vmatprep.subr.bf16.mxu0 %v809
        %1009 = vmatpush2.bf16.msra.mxu0 %v808
        %1010 = vmatprep.subr.bf16.mxu0 %v803
        %1011 = vmatpush2.bf16.msra.mxu0 %v802
        %1012 = vmatprep.subr.bf16.mxu0 %v797
        %1013 = vmatpush2.bf16.msra.mxu0 %v796
        %1014 = vmatprep.subr.bf16.mxu0 %v791
        %1015 = vmatpush2.bf16.msra.mxu0 %v790
        %1016 = vmatprep.subr.bf16.mxu0 %v785
        %1017 = vmatpush2.bf16.msra.mxu0 %v784
        %1018 = vmatprep.subr.bf16.mxu0 %v779
        %1019 = vmatpush2.bf16.msra.mxu0 %v778
        %1020 = vmatprep.subr.bf16.mxu0 %v773
        %1021 = vmatpush2.bf16.msra.mxu0 %v772
        %1022 = vmatprep.subr.bf16.mxu0 %v767
        %1023 = vmatpush2.bf16.msra.mxu0 %v766
        %1024 = vmatprep.mubr.bf16.mxu0 %v423
        %1025 = vmatmul.mubr.bf16.gmra.mxu0 %v422
        %v1026 = vpop.f32.mrf.mxu0
        %v1027 = vadd.f32 %v405, %v1026
        %v1028 = vpop.f32.mrf.mxu0
        %v1029 = vadd.f32 %v409, %v1028
        %v1030 = vpop.f32.mrf.mxu0
        %v1031 = vadd.f32 %v405, %v1030
        %v1032 = vpop.f32.mrf.mxu0
        %v1033 = vadd.f32 %v409, %v1032
        %1034 = vdwg.mxu0
        %1037 = vrot.lane.b32.xlu0 %v941, 96
        %v1038 = vpop.permute.xlu0 %1037
        %1039 = vrot.lane.b32.xlu0 %v945, 96
        %v1040 = vpop.permute.xlu0 %1039
        %1043 = vrot.lane.b32.xlu0 %v941, 64
        %v1044 = vpop.permute.xlu0 %1043
        %1045 = vrot.lane.b32.xlu0 %v945, 64
        %v1046 = vpop.permute.xlu0 %1045
        %1049 = vrot.lane.b32.xlu0 %v941, 32
        %v1050 = vpop.permute.xlu0 %1049
        %1051 = vrot.lane.b32.xlu0 %v945, 32
        %v1052 = vpop.permute.xlu0 %1051
        %1057 = vrot.lane.b32.xlu0 %v943, 96
        %v1058 = vpop.permute.xlu0 %1057
        %1059 = vrot.lane.b32.xlu0 %v947, 96
        %v1060 = vpop.permute.xlu0 %1059
        %1063 = vrot.lane.b32.xlu0 %v943, 64
        %v1064 = vpop.permute.xlu0 %1063
        %1065 = vrot.lane.b32.xlu0 %v947, 64
        %v1066 = vpop.permute.xlu0 %1065
        %1069 = vrot.lane.b32.xlu0 %v943, 32
        %v1070 = vpop.permute.xlu0 %1069
        %1071 = vrot.lane.b32.xlu0 %v947, 32
        %v1072 = vpop.permute.xlu0 %1071
        %v1075 = vcombine.low %v941, %v1044
        %v1076 = vcombine.high %v941, %v1044
        %v1078 = vunpack.c.l.s4 1983009808
        %v1079 = vunpack.c.0.s8 %v1078
        %v1080 = vlaneseq
        %v1081 = vshrl.u32 %v1080, 7
        %v1082 = vsub.s32 %v1079, %v1081
        %v1083 = vrot.slane %v1075, %v1082
        %v1085 = vunpack.c.l.s4 1983009808
        %v1086 = vunpack.c.0.s8 %v1085
        %v1087 = vlaneseq
        %v1088 = vshrl.u32 %v1087, 7
        %v1089 = vsub.s32 %v1086, %v1088
        %v1090 = vrot.slane %v1076, %v1089
        %v1091 = vcombine.low %v1038, %v1050
        %v1092 = vcombine.high %v1038, %v1050
        %v1094 = vunpack.c.l.s4 1983009808
        %v1095 = vunpack.c.0.s8 %v1094
        %v1096 = vlaneseq
        %v1097 = vshrl.u32 %v1096, 7
        %v1098 = vsub.s32 %v1095, %v1097
        %v1099 = vrot.slane %v1091, %v1098
        %v1101 = vunpack.c.l.s4 1983009808
        %v1102 = vunpack.c.0.s8 %v1101
        %v1103 = vlaneseq
        %v1104 = vshrl.u32 %v1103, 7
        %v1105 = vsub.s32 %v1102, %v1104
        %v1106 = vrot.slane %v1092, %v1105
        %v1107 = vcombine.low %v943, %v1064
        %v1108 = vcombine.high %v943, %v1064
        %v1110 = vunpack.c.l.s4 1983009808
        %v1111 = vunpack.c.0.s8 %v1110
        %v1112 = vlaneseq
        %v1113 = vshrl.u32 %v1112, 7
        %v1114 = vsub.s32 %v1111, %v1113
        %v1115 = vrot.slane %v1107, %v1114
        %v1117 = vunpack.c.l.s4 1983009808
        %v1118 = vunpack.c.0.s8 %v1117
        %v1119 = vlaneseq
        %v1120 = vshrl.u32 %v1119, 7
        %v1121 = vsub.s32 %v1118, %v1120
        %v1122 = vrot.slane %v1108, %v1121
        %v1123 = vcombine.low %v1058, %v1070
        %v1124 = vcombine.high %v1058, %v1070
        %v1126 = vunpack.c.l.s4 1983009808
        %v1127 = vunpack.c.0.s8 %v1126
        %v1128 = vlaneseq
        %v1129 = vshrl.u32 %v1128, 7
        %v1130 = vsub.s32 %v1127, %v1129
        %v1131 = vrot.slane %v1123, %v1130
        %v1133 = vunpack.c.l.s4 1983009808
        %v1134 = vunpack.c.0.s8 %v1133
        %v1135 = vlaneseq
        %v1136 = vshrl.u32 %v1135, 7
        %v1137 = vsub.s32 %v1134, %v1136
        %v1138 = vrot.slane %v1124, %v1137
        %v1139 = vcombine.low %v1083, %v1099
        %v1140 = vcombine.high %v1083, %v1099
        %v1142 = vunpack.c.l.s4 1934713408
        %v1143 = vunpack.c.0.s8 %v1142
        %v1144 = vlaneseq
        %v1145 = vshrl.u32 %v1144, 7
        %v1146 = vsub.s32 %v1143, %v1145
        %v1147 = vrot.slane %v1139, %v1146
        %v1149 = vunpack.c.l.s4 1934713408
        %v1150 = vunpack.c.0.s8 %v1149
        %v1151 = vlaneseq
        %v1152 = vshrl.u32 %v1151, 7
        %v1153 = vsub.s32 %v1150, %v1152
        %v1154 = vrot.slane %v1140, %v1153
        %v1155 = vcombine.low %v1090, %v1106
        %v1156 = vcombine.high %v1090, %v1106
        %v1158 = vunpack.c.l.s4 1934713408
        %v1159 = vunpack.c.0.s8 %v1158
        %v1160 = vlaneseq
        %v1161 = vshrl.u32 %v1160, 7
        %v1162 = vsub.s32 %v1159, %v1161
        %v1163 = vrot.slane %v1155, %v1162
        %v1165 = vunpack.c.l.s4 1934713408
        %v1166 = vunpack.c.0.s8 %v1165
        %v1167 = vlaneseq
        %v1168 = vshrl.u32 %v1167, 7
        %v1169 = vsub.s32 %v1166, %v1168
        %v1170 = vrot.slane %v1156, %v1169
        %v1171 = vcombine.low %v1115, %v1131
        %v1172 = vcombine.high %v1115, %v1131
        %v1174 = vunpack.c.l.s4 1934713408
        %v1175 = vunpack.c.0.s8 %v1174
        %v1176 = vlaneseq
        %v1177 = vshrl.u32 %v1176, 7
        %v1178 = vsub.s32 %v1175, %v1177
        %v1179 = vrot.slane %v1171, %v1178
        %v1181 = vunpack.c.l.s4 1934713408
        %v1182 = vunpack.c.0.s8 %v1181
        %v1183 = vlaneseq
        %v1184 = vshrl.u32 %v1183, 7
        %v1185 = vsub.s32 %v1182, %v1184
        %v1186 = vrot.slane %v1172, %v1185
        %v1187 = vcombine.low %v1122, %v1138
        %v1188 = vcombine.high %v1122, %v1138
        %v1190 = vunpack.c.l.s4 1934713408
        %v1191 = vunpack.c.0.s8 %v1190
        %v1192 = vlaneseq
        %v1193 = vshrl.u32 %v1192, 7
        %v1194 = vsub.s32 %v1191, %v1193
        %v1195 = vrot.slane %v1187, %v1194
        %v1197 = vunpack.c.l.s4 1934713408
        %v1198 = vunpack.c.0.s8 %v1197
        %v1199 = vlaneseq
        %v1200 = vshrl.u32 %v1199, 7
        %v1201 = vsub.s32 %v1198, %v1200
        %v1202 = vrot.slane %v1188, %v1201
        %v1203 = vcombine.low %v1147, %v1179
        %v1204 = vcombine.high %v1147, %v1179
        %v1205 = vcombine.low %v1154, %v1186
        %v1206 = vcombine.high %v1154, %v1186
        %v1207 = vcombine.low %v1163, %v1195
        %v1208 = vcombine.high %v1163, %v1195
        %v1209 = vcombine.low %v1170, %v1202
        %v1210 = vcombine.high %v1170, %v1202
        %v1211 = vcombine.low %v945, %v1046
        %v1212 = vcombine.high %v945, %v1046
        %v1214 = vunpack.c.l.s4 1983009808
        %v1215 = vunpack.c.0.s8 %v1214
        %v1216 = vlaneseq
        %v1217 = vshrl.u32 %v1216, 7
        %v1218 = vsub.s32 %v1215, %v1217
        %v1219 = vrot.slane %v1211, %v1218
        %v1221 = vunpack.c.l.s4 1983009808
        %v1222 = vunpack.c.0.s8 %v1221
        %v1223 = vlaneseq
        %v1224 = vshrl.u32 %v1223, 7
        %v1225 = vsub.s32 %v1222, %v1224
        %v1226 = vrot.slane %v1212, %v1225
        %v1227 = vcombine.low %v1040, %v1052
        %v1228 = vcombine.high %v1040, %v1052
        %v1230 = vunpack.c.l.s4 1983009808
        %v1231 = vunpack.c.0.s8 %v1230
        %v1232 = vlaneseq
        %v1233 = vshrl.u32 %v1232, 7
        %v1234 = vsub.s32 %v1231, %v1233
        %v1235 = vrot.slane %v1227, %v1234
        %v1237 = vunpack.c.l.s4 1983009808
        %v1238 = vunpack.c.0.s8 %v1237
        %v1239 = vlaneseq
        %v1240 = vshrl.u32 %v1239, 7
        %v1241 = vsub.s32 %v1238, %v1240
        %v1242 = vrot.slane %v1228, %v1241
        %v1243 = vcombine.low %v947, %v1066
        %v1244 = vcombine.high %v947, %v1066
        %v1246 = vunpack.c.l.s4 1983009808
        %v1247 = vunpack.c.0.s8 %v1246
        %v1248 = vlaneseq
        %v1249 = vshrl.u32 %v1248, 7
        %v1250 = vsub.s32 %v1247, %v1249
        %v1251 = vrot.slane %v1243, %v1250
        %v1253 = vunpack.c.l.s4 1983009808
        %v1254 = vunpack.c.0.s8 %v1253
        %v1255 = vlaneseq
        %v1256 = vshrl.u32 %v1255, 7
        %v1257 = vsub.s32 %v1254, %v1256
        %v1258 = vrot.slane %v1244, %v1257
        %v1259 = vcombine.low %v1060, %v1072
        %v1260 = vcombine.high %v1060, %v1072
        %v1262 = vunpack.c.l.s4 1983009808
        %v1263 = vunpack.c.0.s8 %v1262
        %v1264 = vlaneseq
        %v1265 = vshrl.u32 %v1264, 7
        %v1266 = vsub.s32 %v1263, %v1265
        %v1267 = vrot.slane %v1259, %v1266
        %v1269 = vunpack.c.l.s4 1983009808
        %v1270 = vunpack.c.0.s8 %v1269
        %v1271 = vlaneseq
        %v1272 = vshrl.u32 %v1271, 7
        %v1273 = vsub.s32 %v1270, %v1272
        %v1274 = vrot.slane %v1260, %v1273
        %v1275 = vcombine.low %v1219, %v1235
        %v1276 = vcombine.high %v1219, %v1235
        %v1278 = vunpack.c.l.s4 1934713408
        %v1279 = vunpack.c.0.s8 %v1278
        %v1280 = vlaneseq
        %v1281 = vshrl.u32 %v1280, 7
        %v1282 = vsub.s32 %v1279, %v1281
        %v1283 = vrot.slane %v1275, %v1282
        %v1285 = vunpack.c.l.s4 1934713408
        %v1286 = vunpack.c.0.s8 %v1285
        %v1287 = vlaneseq
        %v1288 = vshrl.u32 %v1287, 7
        %v1289 = vsub.s32 %v1286, %v1288
        %v1290 = vrot.slane %v1276, %v1289
        %v1291 = vcombine.low %v1226, %v1242
        %v1292 = vcombine.high %v1226, %v1242
        %v1294 = vunpack.c.l.s4 1934713408
        %v1295 = vunpack.c.0.s8 %v1294
        %v1296 = vlaneseq
        %v1297 = vshrl.u32 %v1296, 7
        %v1298 = vsub.s32 %v1295, %v1297
        %v1299 = vrot.slane %v1291, %v1298
        %v1301 = vunpack.c.l.s4 1934713408
        %v1302 = vunpack.c.0.s8 %v1301
        %v1303 = vlaneseq
        %v1304 = vshrl.u32 %v1303, 7
        %v1305 = vsub.s32 %v1302, %v1304
        %v1306 = vrot.slane %v1292, %v1305
        %v1307 = vcombine.low %v1251, %v1267
        %v1308 = vcombine.high %v1251, %v1267
        %v1310 = vunpack.c.l.s4 1934713408
        %v1311 = vunpack.c.0.s8 %v1310
        %v1312 = vlaneseq
        %v1313 = vshrl.u32 %v1312, 7
        %v1314 = vsub.s32 %v1311, %v1313
        %v1315 = vrot.slane %v1307, %v1314
        %v1317 = vunpack.c.l.s4 1934713408
        %v1318 = vunpack.c.0.s8 %v1317
        %v1319 = vlaneseq
        %v1320 = vshrl.u32 %v1319, 7
        %v1321 = vsub.s32 %v1318, %v1320
        %v1322 = vrot.slane %v1308, %v1321
        %v1323 = vcombine.low %v1258, %v1274
        %v1324 = vcombine.high %v1258, %v1274
        %v1326 = vunpack.c.l.s4 1934713408
        %v1327 = vunpack.c.0.s8 %v1326
        %v1328 = vlaneseq
        %v1329 = vshrl.u32 %v1328, 7
        %v1330 = vsub.s32 %v1327, %v1329
        %v1331 = vrot.slane %v1323, %v1330
        %v1333 = vunpack.c.l.s4 1934713408
        %v1334 = vunpack.c.0.s8 %v1333
        %v1335 = vlaneseq
        %v1336 = vshrl.u32 %v1335, 7
        %v1337 = vsub.s32 %v1334, %v1336
        %v1338 = vrot.slane %v1324, %v1337
        %v1339 = vcombine.low %v1283, %v1315
        %v1340 = vcombine.high %v1283, %v1315
        %v1341 = vcombine.low %v1290, %v1322
        %v1342 = vcombine.high %v1290, %v1322
        %v1343 = vcombine.low %v1299, %v1331
        %v1344 = vcombine.high %v1299, %v1331
        %v1345 = vcombine.low %v1306, %v1338
        %v1346 = vcombine.high %v1306, %v1338
        %v1347 = vcombine.low %v1203, %v1205
        %v1348 = vcombine.high %v1203, %v1205
        %v1350 = vunpack.c.l.s4 1983009808
        %v1351 = vunpack.c.0.s8 %v1350
        %v1352 = vlaneseq
        %v1353 = vshrl.u32 %v1352, 7
        %v1354 = vsub.s32 %v1351, %v1353
        %v1355 = vrot.slane %v1347, %v1354
        %v1357 = vunpack.c.l.s4 1983009808
        %v1358 = vunpack.c.0.s8 %v1357
        %v1359 = vlaneseq
        %v1360 = vshrl.u32 %v1359, 7
        %v1361 = vsub.s32 %v1358, %v1360
        %v1362 = vrot.slane %v1348, %v1361
        %v1363 = vcombine.low %v1204, %v1206
        %v1364 = vcombine.high %v1204, %v1206
        %v1366 = vunpack.c.l.s4 1983009808
        %v1367 = vunpack.c.0.s8 %v1366
        %v1368 = vlaneseq
        %v1369 = vshrl.u32 %v1368, 7
        %v1370 = vsub.s32 %v1367, %v1369
        %v1371 = vrot.slane %v1363, %v1370
        %v1373 = vunpack.c.l.s4 1983009808
        %v1374 = vunpack.c.0.s8 %v1373
        %v1375 = vlaneseq
        %v1376 = vshrl.u32 %v1375, 7
        %v1377 = vsub.s32 %v1374, %v1376
        %v1378 = vrot.slane %v1364, %v1377
        %v1379 = vcombine.low %v1207, %v1209
        %v1380 = vcombine.high %v1207, %v1209
        %v1382 = vunpack.c.l.s4 1983009808
        %v1383 = vunpack.c.0.s8 %v1382
        %v1384 = vlaneseq
        %v1385 = vshrl.u32 %v1384, 7
        %v1386 = vsub.s32 %v1383, %v1385
        %v1387 = vrot.slane %v1379, %v1386
        %v1389 = vunpack.c.l.s4 1983009808
        %v1390 = vunpack.c.0.s8 %v1389
        %v1391 = vlaneseq
        %v1392 = vshrl.u32 %v1391, 7
        %v1393 = vsub.s32 %v1390, %v1392
        %v1394 = vrot.slane %v1380, %v1393
        %v1395 = vcombine.low %v1208, %v1210
        %v1396 = vcombine.high %v1208, %v1210
        %v1398 = vunpack.c.l.s4 1983009808
        %v1399 = vunpack.c.0.s8 %v1398
        %v1400 = vlaneseq
        %v1401 = vshrl.u32 %v1400, 7
        %v1402 = vsub.s32 %v1399, %v1401
        %v1403 = vrot.slane %v1395, %v1402
        %v1405 = vunpack.c.l.s4 1983009808
        %v1406 = vunpack.c.0.s8 %v1405
        %v1407 = vlaneseq
        %v1408 = vshrl.u32 %v1407, 7
        %v1409 = vsub.s32 %v1406, %v1408
        %v1410 = vrot.slane %v1396, %v1409
        %v1411 = vcombine.low %v1355, %v1371
        %v1412 = vcombine.high %v1355, %v1371
        %v1414 = vunpack.c.l.s4 1934713408
        %v1415 = vunpack.c.0.s8 %v1414
        %v1416 = vlaneseq
        %v1417 = vshrl.u32 %v1416, 7
        %v1418 = vsub.s32 %v1415, %v1417
        %v1419 = vrot.slane %v1411, %v1418
        %v1421 = vunpack.c.l.s4 1934713408
        %v1422 = vunpack.c.0.s8 %v1421
        %v1423 = vlaneseq
        %v1424 = vshrl.u32 %v1423, 7
        %v1425 = vsub.s32 %v1422, %v1424
        %v1426 = vrot.slane %v1412, %v1425
        %v1427 = vcombine.low %v1362, %v1378
        %v1428 = vcombine.high %v1362, %v1378
        %v1430 = vunpack.c.l.s4 1934713408
        %v1431 = vunpack.c.0.s8 %v1430
        %v1432 = vlaneseq
        %v1433 = vshrl.u32 %v1432, 7
        %v1434 = vsub.s32 %v1431, %v1433
        %v1435 = vrot.slane %v1427, %v1434
        %v1437 = vunpack.c.l.s4 1934713408
        %v1438 = vunpack.c.0.s8 %v1437
        %v1439 = vlaneseq
        %v1440 = vshrl.u32 %v1439, 7
        %v1441 = vsub.s32 %v1438, %v1440
        %v1442 = vrot.slane %v1428, %v1441
        %v1443 = vcombine.low %v1387, %v1403
        %v1444 = vcombine.high %v1387, %v1403
        %v1446 = vunpack.c.l.s4 1934713408
        %v1447 = vunpack.c.0.s8 %v1446
        %v1448 = vlaneseq
        %v1449 = vshrl.u32 %v1448, 7
        %v1450 = vsub.s32 %v1447, %v1449
        %v1451 = vrot.slane %v1443, %v1450
        %v1453 = vunpack.c.l.s4 1934713408
        %v1454 = vunpack.c.0.s8 %v1453
        %v1455 = vlaneseq
        %v1456 = vshrl.u32 %v1455, 7
        %v1457 = vsub.s32 %v1454, %v1456
        %v1458 = vrot.slane %v1444, %v1457
        %v1459 = vcombine.low %v1394, %v1410
        %v1460 = vcombine.high %v1394, %v1410
        %v1462 = vunpack.c.l.s4 1934713408
        %v1463 = vunpack.c.0.s8 %v1462
        %v1464 = vlaneseq
        %v1465 = vshrl.u32 %v1464, 7
        %v1466 = vsub.s32 %v1463, %v1465
        %v1467 = vrot.slane %v1459, %v1466
        %v1469 = vunpack.c.l.s4 1934713408
        %v1470 = vunpack.c.0.s8 %v1469
        %v1471 = vlaneseq
        %v1472 = vshrl.u32 %v1471, 7
        %v1473 = vsub.s32 %v1470, %v1472
        %v1474 = vrot.slane %v1460, %v1473
        %v1475 = vcombine.low %v1419, %v1451
        %v1476 = vcombine.high %v1419, %v1451
        %v1477 = vcombine.low %v1426, %v1458
        %v1478 = vcombine.high %v1426, %v1458
        %v1479 = vcombine.low %v1435, %v1467
        %v1480 = vcombine.high %v1435, %v1467
        %v1481 = vcombine.low %v1442, %v1474
        %v1482 = vcombine.high %v1442, %v1474
        %v1483 = vcombine.low %v1339, %v1341
        %v1484 = vcombine.high %v1339, %v1341
        %v1486 = vunpack.c.l.s4 1983009808
        %v1487 = vunpack.c.0.s8 %v1486
        %v1488 = vlaneseq
        %v1489 = vshrl.u32 %v1488, 7
        %v1490 = vsub.s32 %v1487, %v1489
        %v1491 = vrot.slane %v1483, %v1490
        %v1493 = vunpack.c.l.s4 1983009808
        %v1494 = vunpack.c.0.s8 %v1493
        %v1495 = vlaneseq
        %v1496 = vshrl.u32 %v1495, 7
        %v1497 = vsub.s32 %v1494, %v1496
        %v1498 = vrot.slane %v1484, %v1497
        %v1499 = vcombine.low %v1340, %v1342
        %v1500 = vcombine.high %v1340, %v1342
        %v1502 = vunpack.c.l.s4 1983009808
        %v1503 = vunpack.c.0.s8 %v1502
        %v1504 = vlaneseq
        %v1505 = vshrl.u32 %v1504, 7
        %v1506 = vsub.s32 %v1503, %v1505
        %v1507 = vrot.slane %v1499, %v1506
        %v1509 = vunpack.c.l.s4 1983009808
        %v1510 = vunpack.c.0.s8 %v1509
        %v1511 = vlaneseq
        %v1512 = vshrl.u32 %v1511, 7
        %v1513 = vsub.s32 %v1510, %v1512
        %v1514 = vrot.slane %v1500, %v1513
        %v1515 = vcombine.low %v1343, %v1345
        %v1516 = vcombine.high %v1343, %v1345
        %v1518 = vunpack.c.l.s4 1983009808
        %v1519 = vunpack.c.0.s8 %v1518
        %v1520 = vlaneseq
        %v1521 = vshrl.u32 %v1520, 7
        %v1522 = vsub.s32 %v1519, %v1521
        %v1523 = vrot.slane %v1515, %v1522
        %v1525 = vunpack.c.l.s4 1983009808
        %v1526 = vunpack.c.0.s8 %v1525
        %v1527 = vlaneseq
        %v1528 = vshrl.u32 %v1527, 7
        %v1529 = vsub.s32 %v1526, %v1528
        %v1530 = vrot.slane %v1516, %v1529
        %v1531 = vcombine.low %v1344, %v1346
        %v1532 = vcombine.high %v1344, %v1346
        %v1534 = vunpack.c.l.s4 1983009808
        %v1535 = vunpack.c.0.s8 %v1534
        %v1536 = vlaneseq
        %v1537 = vshrl.u32 %v1536, 7
        %v1538 = vsub.s32 %v1535, %v1537
        %v1539 = vrot.slane %v1531, %v1538
        %v1541 = vunpack.c.l.s4 1983009808
        %v1542 = vunpack.c.0.s8 %v1541
        %v1543 = vlaneseq
        %v1544 = vshrl.u32 %v1543, 7
        %v1545 = vsub.s32 %v1542, %v1544
        %v1546 = vrot.slane %v1532, %v1545
        %v1547 = vcombine.low %v1491, %v1507
        %v1548 = vcombine.high %v1491, %v1507
        %v1550 = vunpack.c.l.s4 1934713408
        %v1551 = vunpack.c.0.s8 %v1550
        %v1552 = vlaneseq
        %v1553 = vshrl.u32 %v1552, 7
        %v1554 = vsub.s32 %v1551, %v1553
        %v1555 = vrot.slane %v1547, %v1554
        %v1557 = vunpack.c.l.s4 1934713408
        %v1558 = vunpack.c.0.s8 %v1557
        %v1559 = vlaneseq
        %v1560 = vshrl.u32 %v1559, 7
        %v1561 = vsub.s32 %v1558, %v1560
        %v1562 = vrot.slane %v1548, %v1561
        %v1563 = vcombine.low %v1498, %v1514
        %v1564 = vcombine.high %v1498, %v1514
        %v1566 = vunpack.c.l.s4 1934713408
        %v1567 = vunpack.c.0.s8 %v1566
        %v1568 = vlaneseq
        %v1569 = vshrl.u32 %v1568, 7
        %v1570 = vsub.s32 %v1567, %v1569
        %v1571 = vrot.slane %v1563, %v1570
        %v1573 = vunpack.c.l.s4 1934713408
        %v1574 = vunpack.c.0.s8 %v1573
        %v1575 = vlaneseq
        %v1576 = vshrl.u32 %v1575, 7
        %v1577 = vsub.s32 %v1574, %v1576
        %v1578 = vrot.slane %v1564, %v1577
        %v1579 = vcombine.low %v1523, %v1539
        %v1580 = vcombine.high %v1523, %v1539
        %v1582 = vunpack.c.l.s4 1934713408
        %v1583 = vunpack.c.0.s8 %v1582
        %v1584 = vlaneseq
        %v1585 = vshrl.u32 %v1584, 7
        %v1586 = vsub.s32 %v1583, %v1585
        %v1587 = vrot.slane %v1579, %v1586
        %v1589 = vunpack.c.l.s4 1934713408
        %v1590 = vunpack.c.0.s8 %v1589
        %v1591 = vlaneseq
        %v1592 = vshrl.u32 %v1591, 7
        %v1593 = vsub.s32 %v1590, %v1592
        %v1594 = vrot.slane %v1580, %v1593
        %v1595 = vcombine.low %v1530, %v1546
        %v1596 = vcombine.high %v1530, %v1546
        %v1598 = vunpack.c.l.s4 1934713408
        %v1599 = vunpack.c.0.s8 %v1598
        %v1600 = vlaneseq
        %v1601 = vshrl.u32 %v1600, 7
        %v1602 = vsub.s32 %v1599, %v1601
        %v1603 = vrot.slane %v1595, %v1602
        %v1605 = vunpack.c.l.s4 1934713408
        %v1606 = vunpack.c.0.s8 %v1605
        %v1607 = vlaneseq
        %v1608 = vshrl.u32 %v1607, 7
        %v1609 = vsub.s32 %v1606, %v1608
        %v1610 = vrot.slane %v1596, %v1609
        %v1611 = vcombine.low %v1555, %v1587
        %v1612 = vcombine.high %v1555, %v1587
        %v1613 = vcombine.low %v1562, %v1594
        %v1614 = vcombine.high %v1562, %v1594
        %v1615 = vcombine.low %v1571, %v1603
        %v1616 = vcombine.high %v1571, %v1603
        %v1617 = vcombine.low %v1578, %v1610
        %v1618 = vcombine.high %v1578, %v1610
        %v1619 = vpack.c.bf16 %v1611, %v1475
        %v1620 = vpack.c.bf16 %v1612, %v1476
        %v1621 = vpack.c.bf16 %v1613, %v1477
        %v1622 = vpack.c.bf16 %v1614, %v1478
        %v1623 = vpack.c.bf16 %v1615, %v1479
        %v1624 = vpack.c.bf16 %v1616, %v1480
        %v1625 = vpack.c.bf16 %v1617, %v1481
        %v1626 = vpack.c.bf16 %v1618, %v1482
        %1629 = vrot.lane.b32.xlu0 %v984, 96
        %v1630 = vpop.permute.xlu0 %1629
        %1631 = vrot.lane.b32.xlu0 %v988, 96
        %v1632 = vpop.permute.xlu0 %1631
        %1635 = vrot.lane.b32.xlu0 %v984, 64
        %v1636 = vpop.permute.xlu0 %1635
        %1637 = vrot.lane.b32.xlu0 %v988, 64
        %v1638 = vpop.permute.xlu0 %1637
        %1641 = vrot.lane.b32.xlu0 %v984, 32
        %v1642 = vpop.permute.xlu0 %1641
        %1643 = vrot.lane.b32.xlu0 %v988, 32
        %v1644 = vpop.permute.xlu0 %1643
        %1649 = vrot.lane.b32.xlu0 %v986, 96
        %v1650 = vpop.permute.xlu0 %1649
        %1651 = vrot.lane.b32.xlu0 %v990, 96
        %v1652 = vpop.permute.xlu0 %1651
        %1655 = vrot.lane.b32.xlu0 %v986, 64
        %v1656 = vpop.permute.xlu0 %1655
        %1657 = vrot.lane.b32.xlu0 %v990, 64
        %v1658 = vpop.permute.xlu0 %1657
        %1661 = vrot.lane.b32.xlu0 %v986, 32
        %v1662 = vpop.permute.xlu0 %1661
        %1663 = vrot.lane.b32.xlu0 %v990, 32
        %v1664 = vpop.permute.xlu0 %1663
        %v1667 = vcombine.low %v984, %v1636
        %v1668 = vcombine.high %v984, %v1636
        %v1670 = vunpack.c.l.s4 1983009808
        %v1671 = vunpack.c.0.s8 %v1670
        %v1672 = vlaneseq
        %v1673 = vshrl.u32 %v1672, 7
        %v1674 = vsub.s32 %v1671, %v1673
        %v1675 = vrot.slane %v1667, %v1674
        %v1677 = vunpack.c.l.s4 1983009808
        %v1678 = vunpack.c.0.s8 %v1677
        %v1679 = vlaneseq
        %v1680 = vshrl.u32 %v1679, 7
        %v1681 = vsub.s32 %v1678, %v1680
        %v1682 = vrot.slane %v1668, %v1681
        %v1683 = vcombine.low %v1630, %v1642
        %v1684 = vcombine.high %v1630, %v1642
        %v1686 = vunpack.c.l.s4 1983009808
        %v1687 = vunpack.c.0.s8 %v1686
        %v1688 = vlaneseq
        %v1689 = vshrl.u32 %v1688, 7
        %v1690 = vsub.s32 %v1687, %v1689
        %v1691 = vrot.slane %v1683, %v1690
        %v1693 = vunpack.c.l.s4 1983009808
        %v1694 = vunpack.c.0.s8 %v1693
        %v1695 = vlaneseq
        %v1696 = vshrl.u32 %v1695, 7
        %v1697 = vsub.s32 %v1694, %v1696
        %v1698 = vrot.slane %v1684, %v1697
        %v1699 = vcombine.low %v986, %v1656
        %v1700 = vcombine.high %v986, %v1656
        %v1702 = vunpack.c.l.s4 1983009808
        %v1703 = vunpack.c.0.s8 %v1702
        %v1704 = vlaneseq
        %v1705 = vshrl.u32 %v1704, 7
        %v1706 = vsub.s32 %v1703, %v1705
        %v1707 = vrot.slane %v1699, %v1706
        %v1709 = vunpack.c.l.s4 1983009808
        %v1710 = vunpack.c.0.s8 %v1709
        %v1711 = vlaneseq
        %v1712 = vshrl.u32 %v1711, 7
        %v1713 = vsub.s32 %v1710, %v1712
        %v1714 = vrot.slane %v1700, %v1713
        %v1715 = vcombine.low %v1650, %v1662
        %v1716 = vcombine.high %v1650, %v1662
        %v1718 = vunpack.c.l.s4 1983009808
        %v1719 = vunpack.c.0.s8 %v1718
        %v1720 = vlaneseq
        %v1721 = vshrl.u32 %v1720, 7
        %v1722 = vsub.s32 %v1719, %v1721
        %v1723 = vrot.slane %v1715, %v1722
        %v1725 = vunpack.c.l.s4 1983009808
        %v1726 = vunpack.c.0.s8 %v1725
        %v1727 = vlaneseq
        %v1728 = vshrl.u32 %v1727, 7
        %v1729 = vsub.s32 %v1726, %v1728
        %v1730 = vrot.slane %v1716, %v1729
        %v1731 = vcombine.low %v1675, %v1691
        %v1732 = vcombine.high %v1675, %v1691
        %v1734 = vunpack.c.l.s4 1934713408
        %v1735 = vunpack.c.0.s8 %v1734
        %v1736 = vlaneseq
        %v1737 = vshrl.u32 %v1736, 7
        %v1738 = vsub.s32 %v1735, %v1737
        %v1739 = vrot.slane %v1731, %v1738
        %v1741 = vunpack.c.l.s4 1934713408
        %v1742 = vunpack.c.0.s8 %v1741
        %v1743 = vlaneseq
        %v1744 = vshrl.u32 %v1743, 7
        %v1745 = vsub.s32 %v1742, %v1744
        %v1746 = vrot.slane %v1732, %v1745
        %v1747 = vcombine.low %v1682, %v1698
        %v1748 = vcombine.high %v1682, %v1698
        %v1750 = vunpack.c.l.s4 1934713408
        %v1751 = vunpack.c.0.s8 %v1750
        %v1752 = vlaneseq
        %v1753 = vshrl.u32 %v1752, 7
        %v1754 = vsub.s32 %v1751, %v1753
        %v1755 = vrot.slane %v1747, %v1754
        %v1757 = vunpack.c.l.s4 1934713408
        %v1758 = vunpack.c.0.s8 %v1757
        %v1759 = vlaneseq
        %v1760 = vshrl.u32 %v1759, 7
        %v1761 = vsub.s32 %v1758, %v1760
        %v1762 = vrot.slane %v1748, %v1761
        %v1763 = vcombine.low %v1707, %v1723
        %v1764 = vcombine.high %v1707, %v1723
        %v1766 = vunpack.c.l.s4 1934713408
        %v1767 = vunpack.c.0.s8 %v1766
        %v1768 = vlaneseq
        %v1769 = vshrl.u32 %v1768, 7
        %v1770 = vsub.s32 %v1767, %v1769
        %v1771 = vrot.slane %v1763, %v1770
        %v1773 = vunpack.c.l.s4 1934713408
        %v1774 = vunpack.c.0.s8 %v1773
        %v1775 = vlaneseq
        %v1776 = vshrl.u32 %v1775, 7
        %v1777 = vsub.s32 %v1774, %v1776
        %v1778 = vrot.slane %v1764, %v1777
        %v1779 = vcombine.low %v1714, %v1730
        %v1780 = vcombine.high %v1714, %v1730
        %v1782 = vunpack.c.l.s4 1934713408
        %v1783 = vunpack.c.0.s8 %v1782
        %v1784 = vlaneseq
        %v1785 = vshrl.u32 %v1784, 7
        %v1786 = vsub.s32 %v1783, %v1785
        %v1787 = vrot.slane %v1779, %v1786
        %v1789 = vunpack.c.l.s4 1934713408
        %v1790 = vunpack.c.0.s8 %v1789
        %v1791 = vlaneseq
        %v1792 = vshrl.u32 %v1791, 7
        %v1793 = vsub.s32 %v1790, %v1792
        %v1794 = vrot.slane %v1780, %v1793
        %v1795 = vcombine.low %v1739, %v1771
        %v1796 = vcombine.high %v1739, %v1771
        %v1797 = vcombine.low %v1746, %v1778
        %v1798 = vcombine.high %v1746, %v1778
        %v1799 = vcombine.low %v1755, %v1787
        %v1800 = vcombine.high %v1755, %v1787
        %v1801 = vcombine.low %v1762, %v1794
        %v1802 = vcombine.high %v1762, %v1794
        %v1803 = vcombine.low %v988, %v1638
        %v1804 = vcombine.high %v988, %v1638
        %v1806 = vunpack.c.l.s4 1983009808
        %v1807 = vunpack.c.0.s8 %v1806
        %v1808 = vlaneseq
        %v1809 = vshrl.u32 %v1808, 7
        %v1810 = vsub.s32 %v1807, %v1809
        %v1811 = vrot.slane %v1803, %v1810
        %v1813 = vunpack.c.l.s4 1983009808
        %v1814 = vunpack.c.0.s8 %v1813
        %v1815 = vlaneseq
        %v1816 = vshrl.u32 %v1815, 7
        %v1817 = vsub.s32 %v1814, %v1816
        %v1818 = vrot.slane %v1804, %v1817
        %v1819 = vcombine.low %v1632, %v1644
        %v1820 = vcombine.high %v1632, %v1644
        %v1822 = vunpack.c.l.s4 1983009808
        %v1823 = vunpack.c.0.s8 %v1822
        %v1824 = vlaneseq
        %v1825 = vshrl.u32 %v1824, 7
        %v1826 = vsub.s32 %v1823, %v1825
        %v1827 = vrot.slane %v1819, %v1826
        %v1829 = vunpack.c.l.s4 1983009808
        %v1830 = vunpack.c.0.s8 %v1829
        %v1831 = vlaneseq
        %v1832 = vshrl.u32 %v1831, 7
        %v1833 = vsub.s32 %v1830, %v1832
        %v1834 = vrot.slane %v1820, %v1833
        %v1835 = vcombine.low %v990, %v1658
        %v1836 = vcombine.high %v990, %v1658
        %v1838 = vunpack.c.l.s4 1983009808
        %v1839 = vunpack.c.0.s8 %v1838
        %v1840 = vlaneseq
        %v1841 = vshrl.u32 %v1840, 7
        %v1842 = vsub.s32 %v1839, %v1841
        %v1843 = vrot.slane %v1835, %v1842
        %v1845 = vunpack.c.l.s4 1983009808
        %v1846 = vunpack.c.0.s8 %v1845
        %v1847 = vlaneseq
        %v1848 = vshrl.u32 %v1847, 7
        %v1849 = vsub.s32 %v1846, %v1848
        %v1850 = vrot.slane %v1836, %v1849
        %v1851 = vcombine.low %v1652, %v1664
        %v1852 = vcombine.high %v1652, %v1664
        %v1854 = vunpack.c.l.s4 1983009808
        %v1855 = vunpack.c.0.s8 %v1854
        %v1856 = vlaneseq
        %v1857 = vshrl.u32 %v1856, 7
        %v1858 = vsub.s32 %v1855, %v1857
        %v1859 = vrot.slane %v1851, %v1858
        %v1861 = vunpack.c.l.s4 1983009808
        %v1862 = vunpack.c.0.s8 %v1861
        %v1863 = vlaneseq
        %v1864 = vshrl.u32 %v1863, 7
        %v1865 = vsub.s32 %v1862, %v1864
        %v1866 = vrot.slane %v1852, %v1865
        %v1867 = vcombine.low %v1811, %v1827
        %v1868 = vcombine.high %v1811, %v1827
        %v1870 = vunpack.c.l.s4 1934713408
        %v1871 = vunpack.c.0.s8 %v1870
        %v1872 = vlaneseq
        %v1873 = vshrl.u32 %v1872, 7
        %v1874 = vsub.s32 %v1871, %v1873
        %v1875 = vrot.slane %v1867, %v1874
        %v1877 = vunpack.c.l.s4 1934713408
        %v1878 = vunpack.c.0.s8 %v1877
        %v1879 = vlaneseq
        %v1880 = vshrl.u32 %v1879, 7
        %v1881 = vsub.s32 %v1878, %v1880
        %v1882 = vrot.slane %v1868, %v1881
        %v1883 = vcombine.low %v1818, %v1834
        %v1884 = vcombine.high %v1818, %v1834
        %v1886 = vunpack.c.l.s4 1934713408
        %v1887 = vunpack.c.0.s8 %v1886
        %v1888 = vlaneseq
        %v1889 = vshrl.u32 %v1888, 7
        %v1890 = vsub.s32 %v1887, %v1889
        %v1891 = vrot.slane %v1883, %v1890
        %v1893 = vunpack.c.l.s4 1934713408
        %v1894 = vunpack.c.0.s8 %v1893
        %v1895 = vlaneseq
        %v1896 = vshrl.u32 %v1895, 7
        %v1897 = vsub.s32 %v1894, %v1896
        %v1898 = vrot.slane %v1884, %v1897
        %v1899 = vcombine.low %v1843, %v1859
        %v1900 = vcombine.high %v1843, %v1859
        %v1902 = vunpack.c.l.s4 1934713408
        %v1903 = vunpack.c.0.s8 %v1902
        %v1904 = vlaneseq
        %v1905 = vshrl.u32 %v1904, 7
        %v1906 = vsub.s32 %v1903, %v1905
        %v1907 = vrot.slane %v1899, %v1906
        %v1909 = vunpack.c.l.s4 1934713408
        %v1910 = vunpack.c.0.s8 %v1909
        %v1911 = vlaneseq
        %v1912 = vshrl.u32 %v1911, 7
        %v1913 = vsub.s32 %v1910, %v1912
        %v1914 = vrot.slane %v1900, %v1913
        %v1915 = vcombine.low %v1850, %v1866
        %v1916 = vcombine.high %v1850, %v1866
        %v1918 = vunpack.c.l.s4 1934713408
        %v1919 = vunpack.c.0.s8 %v1918
        %v1920 = vlaneseq
        %v1921 = vshrl.u32 %v1920, 7
        %v1922 = vsub.s32 %v1919, %v1921
        %v1923 = vrot.slane %v1915, %v1922
        %v1925 = vunpack.c.l.s4 1934713408
        %v1926 = vunpack.c.0.s8 %v1925
        %v1927 = vlaneseq
        %v1928 = vshrl.u32 %v1927, 7
        %v1929 = vsub.s32 %v1926, %v1928
        %v1930 = vrot.slane %v1916, %v1929
        %v1931 = vcombine.low %v1875, %v1907
        %v1932 = vcombine.high %v1875, %v1907
        %v1933 = vcombine.low %v1882, %v1914
        %v1934 = vcombine.high %v1882, %v1914
        %v1935 = vcombine.low %v1891, %v1923
        %v1936 = vcombine.high %v1891, %v1923
        %v1937 = vcombine.low %v1898, %v1930
        %v1938 = vcombine.high %v1898, %v1930
        %v1939 = vcombine.low %v1795, %v1797
        %v1940 = vcombine.high %v1795, %v1797
        %v1942 = vunpack.c.l.s4 1983009808
        %v1943 = vunpack.c.0.s8 %v1942
        %v1944 = vlaneseq
        %v1945 = vshrl.u32 %v1944, 7
        %v1946 = vsub.s32 %v1943, %v1945
        %v1947 = vrot.slane %v1939, %v1946
        %v1949 = vunpack.c.l.s4 1983009808
        %v1950 = vunpack.c.0.s8 %v1949
        %v1951 = vlaneseq
        %v1952 = vshrl.u32 %v1951, 7
        %v1953 = vsub.s32 %v1950, %v1952
        %v1954 = vrot.slane %v1940, %v1953
        %v1955 = vcombine.low %v1796, %v1798
        %v1956 = vcombine.high %v1796, %v1798
        %v1958 = vunpack.c.l.s4 1983009808
        %v1959 = vunpack.c.0.s8 %v1958
        %v1960 = vlaneseq
        %v1961 = vshrl.u32 %v1960, 7
        %v1962 = vsub.s32 %v1959, %v1961
        %v1963 = vrot.slane %v1955, %v1962
        %v1965 = vunpack.c.l.s4 1983009808
        %v1966 = vunpack.c.0.s8 %v1965
        %v1967 = vlaneseq
        %v1968 = vshrl.u32 %v1967, 7
        %v1969 = vsub.s32 %v1966, %v1968
        %v1970 = vrot.slane %v1956, %v1969
        %v1971 = vcombine.low %v1799, %v1801
        %v1972 = vcombine.high %v1799, %v1801
        %v1974 = vunpack.c.l.s4 1983009808
        %v1975 = vunpack.c.0.s8 %v1974
        %v1976 = vlaneseq
        %v1977 = vshrl.u32 %v1976, 7
        %v1978 = vsub.s32 %v1975, %v1977
        %v1979 = vrot.slane %v1971, %v1978
        %v1981 = vunpack.c.l.s4 1983009808
        %v1982 = vunpack.c.0.s8 %v1981
        %v1983 = vlaneseq
        %v1984 = vshrl.u32 %v1983, 7
        %v1985 = vsub.s32 %v1982, %v1984
        %v1986 = vrot.slane %v1972, %v1985
        %v1987 = vcombine.low %v1800, %v1802
        %v1988 = vcombine.high %v1800, %v1802
        %v1990 = vunpack.c.l.s4 1983009808
        %v1991 = vunpack.c.0.s8 %v1990
        %v1992 = vlaneseq
        %v1993 = vshrl.u32 %v1992, 7
        %v1994 = vsub.s32 %v1991, %v1993
        %v1995 = vrot.slane %v1987, %v1994
        %v1997 = vunpack.c.l.s4 1983009808
        %v1998 = vunpack.c.0.s8 %v1997
        %v1999 = vlaneseq
        %v2000 = vshrl.u32 %v1999, 7
        %v2001 = vsub.s32 %v1998, %v2000
        %v2002 = vrot.slane %v1988, %v2001
        %v2003 = vcombine.low %v1947, %v1963
        %v2004 = vcombine.high %v1947, %v1963
        %v2006 = vunpack.c.l.s4 1934713408
        %v2007 = vunpack.c.0.s8 %v2006
        %v2008 = vlaneseq
        %v2009 = vshrl.u32 %v2008, 7
        %v2010 = vsub.s32 %v2007, %v2009
        %v2011 = vrot.slane %v2003, %v2010
        %v2013 = vunpack.c.l.s4 1934713408
        %v2014 = vunpack.c.0.s8 %v2013
        %v2015 = vlaneseq
        %v2016 = vshrl.u32 %v2015, 7
        %v2017 = vsub.s32 %v2014, %v2016
        %v2018 = vrot.slane %v2004, %v2017
        %v2019 = vcombine.low %v1954, %v1970
        %v2020 = vcombine.high %v1954, %v1970
        %v2022 = vunpack.c.l.s4 1934713408
        %v2023 = vunpack.c.0.s8 %v2022
        %v2024 = vlaneseq
        %v2025 = vshrl.u32 %v2024, 7
        %v2026 = vsub.s32 %v2023, %v2025
        %v2027 = vrot.slane %v2019, %v2026
        %v2029 = vunpack.c.l.s4 1934713408
        %v2030 = vunpack.c.0.s8 %v2029
        %v2031 = vlaneseq
        %v2032 = vshrl.u32 %v2031, 7
        %v2033 = vsub.s32 %v2030, %v2032
        %v2034 = vrot.slane %v2020, %v2033
        %v2035 = vcombine.low %v1979, %v1995
        %v2036 = vcombine.high %v1979, %v1995
        %v2038 = vunpack.c.l.s4 1934713408
        %v2039 = vunpack.c.0.s8 %v2038
        %v2040 = vlaneseq
        %v2041 = vshrl.u32 %v2040, 7
        %v2042 = vsub.s32 %v2039, %v2041
        %v2043 = vrot.slane %v2035, %v2042
        %v2045 = vunpack.c.l.s4 1934713408
        %v2046 = vunpack.c.0.s8 %v2045
        %v2047 = vlaneseq
        %v2048 = vshrl.u32 %v2047, 7
        %v2049 = vsub.s32 %v2046, %v2048
        %v2050 = vrot.slane %v2036, %v2049
        %v2051 = vcombine.low %v1986, %v2002
        %v2052 = vcombine.high %v1986, %v2002
        %v2054 = vunpack.c.l.s4 1934713408
        %v2055 = vunpack.c.0.s8 %v2054
        %v2056 = vlaneseq
        %v2057 = vshrl.u32 %v2056, 7
        %v2058 = vsub.s32 %v2055, %v2057
        %v2059 = vrot.slane %v2051, %v2058
        %v2061 = vunpack.c.l.s4 1934713408
        %v2062 = vunpack.c.0.s8 %v2061
        %v2063 = vlaneseq
        %v2064 = vshrl.u32 %v2063, 7
        %v2065 = vsub.s32 %v2062, %v2064
        %v2066 = vrot.slane %v2052, %v2065
        %v2067 = vcombine.low %v2011, %v2043
        %v2068 = vcombine.high %v2011, %v2043
        %v2069 = vcombine.low %v2018, %v2050
        %v2070 = vcombine.high %v2018, %v2050
        %v2071 = vcombine.low %v2027, %v2059
        %v2072 = vcombine.high %v2027, %v2059
        %v2073 = vcombine.low %v2034, %v2066
        %v2074 = vcombine.high %v2034, %v2066
        %v2075 = vcombine.low %v1931, %v1933
        %v2076 = vcombine.high %v1931, %v1933
        %v2078 = vunpack.c.l.s4 1983009808
        %v2079 = vunpack.c.0.s8 %v2078
        %v2080 = vlaneseq
        %v2081 = vshrl.u32 %v2080, 7
        %v2082 = vsub.s32 %v2079, %v2081
        %v2083 = vrot.slane %v2075, %v2082
        %v2085 = vunpack.c.l.s4 1983009808
        %v2086 = vunpack.c.0.s8 %v2085
        %v2087 = vlaneseq
        %v2088 = vshrl.u32 %v2087, 7
        %v2089 = vsub.s32 %v2086, %v2088
        %v2090 = vrot.slane %v2076, %v2089
        %v2091 = vcombine.low %v1932, %v1934
        %v2092 = vcombine.high %v1932, %v1934
        %v2094 = vunpack.c.l.s4 1983009808
        %v2095 = vunpack.c.0.s8 %v2094
        %v2096 = vlaneseq
        %v2097 = vshrl.u32 %v2096, 7
        %v2098 = vsub.s32 %v2095, %v2097
        %v2099 = vrot.slane %v2091, %v2098
        %v2101 = vunpack.c.l.s4 1983009808
        %v2102 = vunpack.c.0.s8 %v2101
        %v2103 = vlaneseq
        %v2104 = vshrl.u32 %v2103, 7
        %v2105 = vsub.s32 %v2102, %v2104
        %v2106 = vrot.slane %v2092, %v2105
        %v2107 = vcombine.low %v1935, %v1937
        %v2108 = vcombine.high %v1935, %v1937
        %v2110 = vunpack.c.l.s4 1983009808
        %v2111 = vunpack.c.0.s8 %v2110
        %v2112 = vlaneseq
        %v2113 = vshrl.u32 %v2112, 7
        %v2114 = vsub.s32 %v2111, %v2113
        %v2115 = vrot.slane %v2107, %v2114
        %v2117 = vunpack.c.l.s4 1983009808
        %v2118 = vunpack.c.0.s8 %v2117
        %v2119 = vlaneseq
        %v2120 = vshrl.u32 %v2119, 7
        %v2121 = vsub.s32 %v2118, %v2120
        %v2122 = vrot.slane %v2108, %v2121
        %v2123 = vcombine.low %v1936, %v1938
        %v2124 = vcombine.high %v1936, %v1938
        %v2126 = vunpack.c.l.s4 1983009808
        %v2127 = vunpack.c.0.s8 %v2126
        %v2128 = vlaneseq
        %v2129 = vshrl.u32 %v2128, 7
        %v2130 = vsub.s32 %v2127, %v2129
        %v2131 = vrot.slane %v2123, %v2130
        %v2133 = vunpack.c.l.s4 1983009808
        %v2134 = vunpack.c.0.s8 %v2133
        %v2135 = vlaneseq
        %v2136 = vshrl.u32 %v2135, 7
        %v2137 = vsub.s32 %v2134, %v2136
        %v2138 = vrot.slane %v2124, %v2137
        %v2139 = vcombine.low %v2083, %v2099
        %v2140 = vcombine.high %v2083, %v2099
        %v2142 = vunpack.c.l.s4 1934713408
        %v2143 = vunpack.c.0.s8 %v2142
        %v2144 = vlaneseq
        %v2145 = vshrl.u32 %v2144, 7
        %v2146 = vsub.s32 %v2143, %v2145
        %v2147 = vrot.slane %v2139, %v2146
        %v2149 = vunpack.c.l.s4 1934713408
        %v2150 = vunpack.c.0.s8 %v2149
        %v2151 = vlaneseq
        %v2152 = vshrl.u32 %v2151, 7
        %v2153 = vsub.s32 %v2150, %v2152
        %v2154 = vrot.slane %v2140, %v2153
        %v2155 = vcombine.low %v2090, %v2106
        %v2156 = vcombine.high %v2090, %v2106
        %v2158 = vunpack.c.l.s4 1934713408
        %v2159 = vunpack.c.0.s8 %v2158
        %v2160 = vlaneseq
        %v2161 = vshrl.u32 %v2160, 7
        %v2162 = vsub.s32 %v2159, %v2161
        %v2163 = vrot.slane %v2155, %v2162
        %v2165 = vunpack.c.l.s4 1934713408
        %v2166 = vunpack.c.0.s8 %v2165
        %v2167 = vlaneseq
        %v2168 = vshrl.u32 %v2167, 7
        %v2169 = vsub.s32 %v2166, %v2168
        %v2170 = vrot.slane %v2156, %v2169
        %v2171 = vcombine.low %v2115, %v2131
        %v2172 = vcombine.high %v2115, %v2131
        %v2174 = vunpack.c.l.s4 1934713408
        %v2175 = vunpack.c.0.s8 %v2174
        %v2176 = vlaneseq
        %v2177 = vshrl.u32 %v2176, 7
        %v2178 = vsub.s32 %v2175, %v2177
        %v2179 = vrot.slane %v2171, %v2178
        %v2181 = vunpack.c.l.s4 1934713408
        %v2182 = vunpack.c.0.s8 %v2181
        %v2183 = vlaneseq
        %v2184 = vshrl.u32 %v2183, 7
        %v2185 = vsub.s32 %v2182, %v2184
        %v2186 = vrot.slane %v2172, %v2185
        %v2187 = vcombine.low %v2122, %v2138
        %v2188 = vcombine.high %v2122, %v2138
        %v2190 = vunpack.c.l.s4 1934713408
        %v2191 = vunpack.c.0.s8 %v2190
        %v2192 = vlaneseq
        %v2193 = vshrl.u32 %v2192, 7
        %v2194 = vsub.s32 %v2191, %v2193
        %v2195 = vrot.slane %v2187, %v2194
        %v2197 = vunpack.c.l.s4 1934713408
        %v2198 = vunpack.c.0.s8 %v2197
        %v2199 = vlaneseq
        %v2200 = vshrl.u32 %v2199, 7
        %v2201 = vsub.s32 %v2198, %v2200
        %v2202 = vrot.slane %v2188, %v2201
        %v2203 = vcombine.low %v2147, %v2179
        %v2204 = vcombine.high %v2147, %v2179
        %v2205 = vcombine.low %v2154, %v2186
        %v2206 = vcombine.high %v2154, %v2186
        %v2207 = vcombine.low %v2163, %v2195
        %v2208 = vcombine.high %v2163, %v2195
        %v2209 = vcombine.low %v2170, %v2202
        %v2210 = vcombine.high %v2170, %v2202
        %v2211 = vpack.c.bf16 %v2203, %v2067
        %v2212 = vpack.c.bf16 %v2204, %v2068
        %v2213 = vpack.c.bf16 %v2205, %v2069
        %v2214 = vpack.c.bf16 %v2206, %v2070
        %v2215 = vpack.c.bf16 %v2207, %v2071
        %v2216 = vpack.c.bf16 %v2208, %v2072
        %v2217 = vpack.c.bf16 %v2209, %v2073
        %v2218 = vpack.c.bf16 %v2210, %v2074
        %2221 = vrot.lane.b32.xlu0 %v1027, 96
        %v2222 = vpop.permute.xlu0 %2221
        %2223 = vrot.lane.b32.xlu0 %v1031, 96
        %v2224 = vpop.permute.xlu0 %2223
        %2227 = vrot.lane.b32.xlu0 %v1027, 64
        %v2228 = vpop.permute.xlu0 %2227
        %2229 = vrot.lane.b32.xlu0 %v1031, 64
        %v2230 = vpop.permute.xlu0 %2229
        %2233 = vrot.lane.b32.xlu0 %v1027, 32
        %v2234 = vpop.permute.xlu0 %2233
        %2235 = vrot.lane.b32.xlu0 %v1031, 32
        %v2236 = vpop.permute.xlu0 %2235
        %2241 = vrot.lane.b32.xlu0 %v1029, 96
        %v2242 = vpop.permute.xlu0 %2241
        %2243 = vrot.lane.b32.xlu0 %v1033, 96
        %v2244 = vpop.permute.xlu0 %2243
        %2247 = vrot.lane.b32.xlu0 %v1029, 64
        %v2248 = vpop.permute.xlu0 %2247
        %2249 = vrot.lane.b32.xlu0 %v1033, 64
        %v2250 = vpop.permute.xlu0 %2249
        %2253 = vrot.lane.b32.xlu0 %v1029, 32
        %v2254 = vpop.permute.xlu0 %2253
        %2255 = vrot.lane.b32.xlu0 %v1033, 32
        %v2256 = vpop.permute.xlu0 %2255
        %v2259 = vcombine.low %v1027, %v2228
        %v2260 = vcombine.high %v1027, %v2228
        %v2262 = vunpack.c.l.s4 1983009808
        %v2263 = vunpack.c.0.s8 %v2262
        %v2264 = vlaneseq
        %v2265 = vshrl.u32 %v2264, 7
        %v2266 = vsub.s32 %v2263, %v2265
        %v2267 = vrot.slane %v2259, %v2266
        %v2269 = vunpack.c.l.s4 1983009808
        %v2270 = vunpack.c.0.s8 %v2269
        %v2271 = vlaneseq
        %v2272 = vshrl.u32 %v2271, 7
        %v2273 = vsub.s32 %v2270, %v2272
        %v2274 = vrot.slane %v2260, %v2273
        %v2275 = vcombine.low %v2222, %v2234
        %v2276 = vcombine.high %v2222, %v2234
        %v2278 = vunpack.c.l.s4 1983009808
        %v2279 = vunpack.c.0.s8 %v2278
        %v2280 = vlaneseq
        %v2281 = vshrl.u32 %v2280, 7
        %v2282 = vsub.s32 %v2279, %v2281
        %v2283 = vrot.slane %v2275, %v2282
        %v2285 = vunpack.c.l.s4 1983009808
        %v2286 = vunpack.c.0.s8 %v2285
        %v2287 = vlaneseq
        %v2288 = vshrl.u32 %v2287, 7
        %v2289 = vsub.s32 %v2286, %v2288
        %v2290 = vrot.slane %v2276, %v2289
        %v2291 = vcombine.low %v1029, %v2248
        %v2292 = vcombine.high %v1029, %v2248
        %v2294 = vunpack.c.l.s4 1983009808
        %v2295 = vunpack.c.0.s8 %v2294
        %v2296 = vlaneseq
        %v2297 = vshrl.u32 %v2296, 7
        %v2298 = vsub.s32 %v2295, %v2297
        %v2299 = vrot.slane %v2291, %v2298
        %v2301 = vunpack.c.l.s4 1983009808
        %v2302 = vunpack.c.0.s8 %v2301
        %v2303 = vlaneseq
        %v2304 = vshrl.u32 %v2303, 7
        %v2305 = vsub.s32 %v2302, %v2304
        %v2306 = vrot.slane %v2292, %v2305
        %v2307 = vcombine.low %v2242, %v2254
        %v2308 = vcombine.high %v2242, %v2254
        %v2310 = vunpack.c.l.s4 1983009808
        %v2311 = vunpack.c.0.s8 %v2310
        %v2312 = vlaneseq
        %v2313 = vshrl.u32 %v2312, 7
        %v2314 = vsub.s32 %v2311, %v2313
        %v2315 = vrot.slane %v2307, %v2314
        %v2317 = vunpack.c.l.s4 1983009808
        %v2318 = vunpack.c.0.s8 %v2317
        %v2319 = vlaneseq
        %v2320 = vshrl.u32 %v2319, 7
        %v2321 = vsub.s32 %v2318, %v2320
        %v2322 = vrot.slane %v2308, %v2321
        %v2323 = vcombine.low %v2267, %v2283
        %v2324 = vcombine.high %v2267, %v2283
        %v2326 = vunpack.c.l.s4 1934713408
        %v2327 = vunpack.c.0.s8 %v2326
        %v2328 = vlaneseq
        %v2329 = vshrl.u32 %v2328, 7
        %v2330 = vsub.s32 %v2327, %v2329
        %v2331 = vrot.slane %v2323, %v2330
        %v2333 = vunpack.c.l.s4 1934713408
        %v2334 = vunpack.c.0.s8 %v2333
        %v2335 = vlaneseq
        %v2336 = vshrl.u32 %v2335, 7
        %v2337 = vsub.s32 %v2334, %v2336
        %v2338 = vrot.slane %v2324, %v2337
        %v2339 = vcombine.low %v2274, %v2290
        %v2340 = vcombine.high %v2274, %v2290
        %v2342 = vunpack.c.l.s4 1934713408
        %v2343 = vunpack.c.0.s8 %v2342
        %v2344 = vlaneseq
        %v2345 = vshrl.u32 %v2344, 7
        %v2346 = vsub.s32 %v2343, %v2345
        %v2347 = vrot.slane %v2339, %v2346
        %v2349 = vunpack.c.l.s4 1934713408
        %v2350 = vunpack.c.0.s8 %v2349
        %v2351 = vlaneseq
        %v2352 = vshrl.u32 %v2351, 7
        %v2353 = vsub.s32 %v2350, %v2352
        %v2354 = vrot.slane %v2340, %v2353
        %v2355 = vcombine.low %v2299, %v2315
        %v2356 = vcombine.high %v2299, %v2315
        %v2358 = vunpack.c.l.s4 1934713408
        %v2359 = vunpack.c.0.s8 %v2358
        %v2360 = vlaneseq
        %v2361 = vshrl.u32 %v2360, 7
        %v2362 = vsub.s32 %v2359, %v2361
        %v2363 = vrot.slane %v2355, %v2362
        %v2365 = vunpack.c.l.s4 1934713408
        %v2366 = vunpack.c.0.s8 %v2365
        %v2367 = vlaneseq
        %v2368 = vshrl.u32 %v2367, 7
        %v2369 = vsub.s32 %v2366, %v2368
        %v2370 = vrot.slane %v2356, %v2369
        %v2371 = vcombine.low %v2306, %v2322
        %v2372 = vcombine.high %v2306, %v2322
        %v2374 = vunpack.c.l.s4 1934713408
        %v2375 = vunpack.c.0.s8 %v2374
        %v2376 = vlaneseq
        %v2377 = vshrl.u32 %v2376, 7
        %v2378 = vsub.s32 %v2375, %v2377
        %v2379 = vrot.slane %v2371, %v2378
        %v2381 = vunpack.c.l.s4 1934713408
        %v2382 = vunpack.c.0.s8 %v2381
        %v2383 = vlaneseq
        %v2384 = vshrl.u32 %v2383, 7
        %v2385 = vsub.s32 %v2382, %v2384
        %v2386 = vrot.slane %v2372, %v2385
        %v2387 = vcombine.low %v2331, %v2363
        %v2388 = vcombine.high %v2331, %v2363
        %v2389 = vcombine.low %v2338, %v2370
        %v2390 = vcombine.high %v2338, %v2370
        %v2391 = vcombine.low %v2347, %v2379
        %v2392 = vcombine.high %v2347, %v2379
        %v2393 = vcombine.low %v2354, %v2386
        %v2394 = vcombine.high %v2354, %v2386
        %v2395 = vcombine.low %v1031, %v2230
        %v2396 = vcombine.high %v1031, %v2230
        %v2398 = vunpack.c.l.s4 1983009808
        %v2399 = vunpack.c.0.s8 %v2398
        %v2400 = vlaneseq
        %v2401 = vshrl.u32 %v2400, 7
        %v2402 = vsub.s32 %v2399, %v2401
        %v2403 = vrot.slane %v2395, %v2402
        %v2405 = vunpack.c.l.s4 1983009808
        %v2406 = vunpack.c.0.s8 %v2405
        %v2407 = vlaneseq
        %v2408 = vshrl.u32 %v2407, 7
        %v2409 = vsub.s32 %v2406, %v2408
        %v2410 = vrot.slane %v2396, %v2409
        %v2411 = vcombine.low %v2224, %v2236
        %v2412 = vcombine.high %v2224, %v2236
        %v2414 = vunpack.c.l.s4 1983009808
        %v2415 = vunpack.c.0.s8 %v2414
        %v2416 = vlaneseq
        %v2417 = vshrl.u32 %v2416, 7
        %v2418 = vsub.s32 %v2415, %v2417
        %v2419 = vrot.slane %v2411, %v2418
        %v2421 = vunpack.c.l.s4 1983009808
        %v2422 = vunpack.c.0.s8 %v2421
        %v2423 = vlaneseq
        %v2424 = vshrl.u32 %v2423, 7
        %v2425 = vsub.s32 %v2422, %v2424
        %v2426 = vrot.slane %v2412, %v2425
        %v2427 = vcombine.low %v1033, %v2250
        %v2428 = vcombine.high %v1033, %v2250
        %v2430 = vunpack.c.l.s4 1983009808
        %v2431 = vunpack.c.0.s8 %v2430
        %v2432 = vlaneseq
        %v2433 = vshrl.u32 %v2432, 7
        %v2434 = vsub.s32 %v2431, %v2433
        %v2435 = vrot.slane %v2427, %v2434
        %v2437 = vunpack.c.l.s4 1983009808
        %v2438 = vunpack.c.0.s8 %v2437
        %v2439 = vlaneseq
        %v2440 = vshrl.u32 %v2439, 7
        %v2441 = vsub.s32 %v2438, %v2440
        %v2442 = vrot.slane %v2428, %v2441
        %v2443 = vcombine.low %v2244, %v2256
        %v2444 = vcombine.high %v2244, %v2256
        %v2446 = vunpack.c.l.s4 1983009808
        %v2447 = vunpack.c.0.s8 %v2446
        %v2448 = vlaneseq
        %v2449 = vshrl.u32 %v2448, 7
        %v2450 = vsub.s32 %v2447, %v2449
        %v2451 = vrot.slane %v2443, %v2450
        %v2453 = vunpack.c.l.s4 1983009808
        %v2454 = vunpack.c.0.s8 %v2453
        %v2455 = vlaneseq
        %v2456 = vshrl.u32 %v2455, 7
        %v2457 = vsub.s32 %v2454, %v2456
        %v2458 = vrot.slane %v2444, %v2457
        %v2459 = vcombine.low %v2403, %v2419
        %v2460 = vcombine.high %v2403, %v2419
        %v2462 = vunpack.c.l.s4 1934713408
        %v2463 = vunpack.c.0.s8 %v2462
        %v2464 = vlaneseq
        %v2465 = vshrl.u32 %v2464, 7
        %v2466 = vsub.s32 %v2463, %v2465
        %v2467 = vrot.slane %v2459, %v2466
        %v2469 = vunpack.c.l.s4 1934713408
        %v2470 = vunpack.c.0.s8 %v2469
        %v2471 = vlaneseq
        %v2472 = vshrl.u32 %v2471, 7
        %v2473 = vsub.s32 %v2470, %v2472
        %v2474 = vrot.slane %v2460, %v2473
        %v2475 = vcombine.low %v2410, %v2426
        %v2476 = vcombine.high %v2410, %v2426
        %v2478 = vunpack.c.l.s4 1934713408
        %v2479 = vunpack.c.0.s8 %v2478
        %v2480 = vlaneseq
        %v2481 = vshrl.u32 %v2480, 7
        %v2482 = vsub.s32 %v2479, %v2481
        %v2483 = vrot.slane %v2475, %v2482
        %v2485 = vunpack.c.l.s4 1934713408
        %v2486 = vunpack.c.0.s8 %v2485
        %v2487 = vlaneseq
        %v2488 = vshrl.u32 %v2487, 7
        %v2489 = vsub.s32 %v2486, %v2488
        %v2490 = vrot.slane %v2476, %v2489
        %v2491 = vcombine.low %v2435, %v2451
        %v2492 = vcombine.high %v2435, %v2451
        %v2494 = vunpack.c.l.s4 1934713408
        %v2495 = vunpack.c.0.s8 %v2494
        %v2496 = vlaneseq
        %v2497 = vshrl.u32 %v2496, 7
        %v2498 = vsub.s32 %v2495, %v2497
        %v2499 = vrot.slane %v2491, %v2498
        %v2501 = vunpack.c.l.s4 1934713408
        %v2502 = vunpack.c.0.s8 %v2501
        %v2503 = vlaneseq
        %v2504 = vshrl.u32 %v2503, 7
        %v2505 = vsub.s32 %v2502, %v2504
        %v2506 = vrot.slane %v2492, %v2505
        %v2507 = vcombine.low %v2442, %v2458
        %v2508 = vcombine.high %v2442, %v2458
        %v2510 = vunpack.c.l.s4 1934713408
        %v2511 = vunpack.c.0.s8 %v2510
        %v2512 = vlaneseq
        %v2513 = vshrl.u32 %v2512, 7
        %v2514 = vsub.s32 %v2511, %v2513
        %v2515 = vrot.slane %v2507, %v2514
        %v2517 = vunpack.c.l.s4 1934713408
        %v2518 = vunpack.c.0.s8 %v2517
        %v2519 = vlaneseq
        %v2520 = vshrl.u32 %v2519, 7
        %v2521 = vsub.s32 %v2518, %v2520
        %v2522 = vrot.slane %v2508, %v2521
        %v2523 = vcombine.low %v2467, %v2499
        %v2524 = vcombine.high %v2467, %v2499
        %v2525 = vcombine.low %v2474, %v2506
        %v2526 = vcombine.high %v2474, %v2506
        %v2527 = vcombine.low %v2483, %v2515
        %v2528 = vcombine.high %v2483, %v2515
        %v2529 = vcombine.low %v2490, %v2522
        %v2530 = vcombine.high %v2490, %v2522
        %v2531 = vcombine.low %v2387, %v2389
        %v2532 = vcombine.high %v2387, %v2389
        %v2534 = vunpack.c.l.s4 1983009808
        %v2535 = vunpack.c.0.s8 %v2534
        %v2536 = vlaneseq
        %v2537 = vshrl.u32 %v2536, 7
        %v2538 = vsub.s32 %v2535, %v2537
        %v2539 = vrot.slane %v2531, %v2538
        %v2541 = vunpack.c.l.s4 1983009808
        %v2542 = vunpack.c.0.s8 %v2541
        %v2543 = vlaneseq
        %v2544 = vshrl.u32 %v2543, 7
        %v2545 = vsub.s32 %v2542, %v2544
        %v2546 = vrot.slane %v2532, %v2545
        %v2547 = vcombine.low %v2388, %v2390
        %v2548 = vcombine.high %v2388, %v2390
        %v2550 = vunpack.c.l.s4 1983009808
        %v2551 = vunpack.c.0.s8 %v2550
        %v2552 = vlaneseq
        %v2553 = vshrl.u32 %v2552, 7
        %v2554 = vsub.s32 %v2551, %v2553
        %v2555 = vrot.slane %v2547, %v2554
        %v2557 = vunpack.c.l.s4 1983009808
        %v2558 = vunpack.c.0.s8 %v2557
        %v2559 = vlaneseq
        %v2560 = vshrl.u32 %v2559, 7
        %v2561 = vsub.s32 %v2558, %v2560
        %v2562 = vrot.slane %v2548, %v2561
        %v2563 = vcombine.low %v2391, %v2393
        %v2564 = vcombine.high %v2391, %v2393
        %v2566 = vunpack.c.l.s4 1983009808
        %v2567 = vunpack.c.0.s8 %v2566
        %v2568 = vlaneseq
        %v2569 = vshrl.u32 %v2568, 7
        %v2570 = vsub.s32 %v2567, %v2569
        %v2571 = vrot.slane %v2563, %v2570
        %v2573 = vunpack.c.l.s4 1983009808
        %v2574 = vunpack.c.0.s8 %v2573
        %v2575 = vlaneseq
        %v2576 = vshrl.u32 %v2575, 7
        %v2577 = vsub.s32 %v2574, %v2576
        %v2578 = vrot.slane %v2564, %v2577
        %v2579 = vcombine.low %v2392, %v2394
        %v2580 = vcombine.high %v2392, %v2394
        %v2582 = vunpack.c.l.s4 1983009808
        %v2583 = vunpack.c.0.s8 %v2582
        %v2584 = vlaneseq
        %v2585 = vshrl.u32 %v2584, 7
        %v2586 = vsub.s32 %v2583, %v2585
        %v2587 = vrot.slane %v2579, %v2586
        %v2589 = vunpack.c.l.s4 1983009808
        %v2590 = vunpack.c.0.s8 %v2589
        %v2591 = vlaneseq
        %v2592 = vshrl.u32 %v2591, 7
        %v2593 = vsub.s32 %v2590, %v2592
        %v2594 = vrot.slane %v2580, %v2593
        %v2595 = vcombine.low %v2539, %v2555
        %v2596 = vcombine.high %v2539, %v2555
        %v2598 = vunpack.c.l.s4 1934713408
        %v2599 = vunpack.c.0.s8 %v2598
        %v2600 = vlaneseq
        %v2601 = vshrl.u32 %v2600, 7
        %v2602 = vsub.s32 %v2599, %v2601
        %v2603 = vrot.slane %v2595, %v2602
        %v2605 = vunpack.c.l.s4 1934713408
        %v2606 = vunpack.c.0.s8 %v2605
        %v2607 = vlaneseq
        %v2608 = vshrl.u32 %v2607, 7
        %v2609 = vsub.s32 %v2606, %v2608
        %v2610 = vrot.slane %v2596, %v2609
        %v2611 = vcombine.low %v2546, %v2562
        %v2612 = vcombine.high %v2546, %v2562
        %v2614 = vunpack.c.l.s4 1934713408
        %v2615 = vunpack.c.0.s8 %v2614
        %v2616 = vlaneseq
        %v2617 = vshrl.u32 %v2616, 7
        %v2618 = vsub.s32 %v2615, %v2617
        %v2619 = vrot.slane %v2611, %v2618
        %v2621 = vunpack.c.l.s4 1934713408
        %v2622 = vunpack.c.0.s8 %v2621
        %v2623 = vlaneseq
        %v2624 = vshrl.u32 %v2623, 7
        %v2625 = vsub.s32 %v2622, %v2624
        %v2626 = vrot.slane %v2612, %v2625
        %v2627 = vcombine.low %v2571, %v2587
        %v2628 = vcombine.high %v2571, %v2587
        %v2630 = vunpack.c.l.s4 1934713408
        %v2631 = vunpack.c.0.s8 %v2630
        %v2632 = vlaneseq
        %v2633 = vshrl.u32 %v2632, 7
        %v2634 = vsub.s32 %v2631, %v2633
        %v2635 = vrot.slane %v2627, %v2634
        %v2637 = vunpack.c.l.s4 1934713408
        %v2638 = vunpack.c.0.s8 %v2637
        %v2639 = vlaneseq
        %v2640 = vshrl.u32 %v2639, 7
        %v2641 = vsub.s32 %v2638, %v2640
        %v2642 = vrot.slane %v2628, %v2641
        %v2643 = vcombine.low %v2578, %v2594
        %v2644 = vcombine.high %v2578, %v2594
        %v2646 = vunpack.c.l.s4 1934713408
        %v2647 = vunpack.c.0.s8 %v2646
        %v2648 = vlaneseq
        %v2649 = vshrl.u32 %v2648, 7
        %v2650 = vsub.s32 %v2647, %v2649
        %v2651 = vrot.slane %v2643, %v2650
        %v2653 = vunpack.c.l.s4 1934713408
        %v2654 = vunpack.c.0.s8 %v2653
        %v2655 = vlaneseq
        %v2656 = vshrl.u32 %v2655, 7
        %v2657 = vsub.s32 %v2654, %v2656
        %v2658 = vrot.slane %v2644, %v2657
        %v2659 = vcombine.low %v2603, %v2635
        %v2660 = vcombine.high %v2603, %v2635
        %v2661 = vcombine.low %v2610, %v2642
        %v2662 = vcombine.high %v2610, %v2642
        %v2663 = vcombine.low %v2619, %v2651
        %v2664 = vcombine.high %v2619, %v2651
        %v2665 = vcombine.low %v2626, %v2658
        %v2666 = vcombine.high %v2626, %v2658
        %v2667 = vcombine.low %v2523, %v2525
        %v2668 = vcombine.high %v2523, %v2525
        %v2670 = vunpack.c.l.s4 1983009808
        %v2671 = vunpack.c.0.s8 %v2670
        %v2672 = vlaneseq
        %v2673 = vshrl.u32 %v2672, 7
        %v2674 = vsub.s32 %v2671, %v2673
        %v2675 = vrot.slane %v2667, %v2674
        %v2677 = vunpack.c.l.s4 1983009808
        %v2678 = vunpack.c.0.s8 %v2677
        %v2679 = vlaneseq
        %v2680 = vshrl.u32 %v2679, 7
        %v2681 = vsub.s32 %v2678, %v2680
        %v2682 = vrot.slane %v2668, %v2681
        %v2683 = vcombine.low %v2524, %v2526
        %v2684 = vcombine.high %v2524, %v2526
        %v2686 = vunpack.c.l.s4 1983009808
        %v2687 = vunpack.c.0.s8 %v2686
        %v2688 = vlaneseq
        %v2689 = vshrl.u32 %v2688, 7
        %v2690 = vsub.s32 %v2687, %v2689
        %v2691 = vrot.slane %v2683, %v2690
        %v2693 = vunpack.c.l.s4 1983009808
        %v2694 = vunpack.c.0.s8 %v2693
        %v2695 = vlaneseq
        %v2696 = vshrl.u32 %v2695, 7
        %v2697 = vsub.s32 %v2694, %v2696
        %v2698 = vrot.slane %v2684, %v2697
        %v2699 = vcombine.low %v2527, %v2529
        %v2700 = vcombine.high %v2527, %v2529
        %v2702 = vunpack.c.l.s4 1983009808
        %v2703 = vunpack.c.0.s8 %v2702
        %v2704 = vlaneseq
        %v2705 = vshrl.u32 %v2704, 7
        %v2706 = vsub.s32 %v2703, %v2705
        %v2707 = vrot.slane %v2699, %v2706
        %v2709 = vunpack.c.l.s4 1983009808
        %v2710 = vunpack.c.0.s8 %v2709
        %v2711 = vlaneseq
        %v2712 = vshrl.u32 %v2711, 7
        %v2713 = vsub.s32 %v2710, %v2712
        %v2714 = vrot.slane %v2700, %v2713
        %v2715 = vcombine.low %v2528, %v2530
        %v2716 = vcombine.high %v2528, %v2530
        %v2718 = vunpack.c.l.s4 1983009808
        %v2719 = vunpack.c.0.s8 %v2718
        %v2720 = vlaneseq
        %v2721 = vshrl.u32 %v2720, 7
        %v2722 = vsub.s32 %v2719, %v2721
        %v2723 = vrot.slane %v2715, %v2722
        %v2725 = vunpack.c.l.s4 1983009808
        %v2726 = vunpack.c.0.s8 %v2725
        %v2727 = vlaneseq
        %v2728 = vshrl.u32 %v2727, 7
        %v2729 = vsub.s32 %v2726, %v2728
        %v2730 = vrot.slane %v2716, %v2729
        %v2731 = vcombine.low %v2675, %v2691
        %v2732 = vcombine.high %v2675, %v2691
        %v2734 = vunpack.c.l.s4 1934713408
        %v2735 = vunpack.c.0.s8 %v2734
        %v2736 = vlaneseq
        %v2737 = vshrl.u32 %v2736, 7
        %v2738 = vsub.s32 %v2735, %v2737
        %v2739 = vrot.slane %v2731, %v2738
        %v2741 = vunpack.c.l.s4 1934713408
        %v2742 = vunpack.c.0.s8 %v2741
        %v2743 = vlaneseq
        %v2744 = vshrl.u32 %v2743, 7
        %v2745 = vsub.s32 %v2742, %v2744
        %v2746 = vrot.slane %v2732, %v2745
        %v2747 = vcombine.low %v2682, %v2698
        %v2748 = vcombine.high %v2682, %v2698
        %v2750 = vunpack.c.l.s4 1934713408
        %v2751 = vunpack.c.0.s8 %v2750
        %v2752 = vlaneseq
        %v2753 = vshrl.u32 %v2752, 7
        %v2754 = vsub.s32 %v2751, %v2753
        %v2755 = vrot.slane %v2747, %v2754
        %v2757 = vunpack.c.l.s4 1934713408
        %v2758 = vunpack.c.0.s8 %v2757
        %v2759 = vlaneseq
        %v2760 = vshrl.u32 %v2759, 7
        %v2761 = vsub.s32 %v2758, %v2760
        %v2762 = vrot.slane %v2748, %v2761
        %v2763 = vcombine.low %v2707, %v2723
        %v2764 = vcombine.high %v2707, %v2723
        %v2766 = vunpack.c.l.s4 1934713408
        %v2767 = vunpack.c.0.s8 %v2766
        %v2768 = vlaneseq
        %v2769 = vshrl.u32 %v2768, 7
        %v2770 = vsub.s32 %v2767, %v2769
        %v2771 = vrot.slane %v2763, %v2770
        %v2773 = vunpack.c.l.s4 1934713408
        %v2774 = vunpack.c.0.s8 %v2773
        %v2775 = vlaneseq
        %v2776 = vshrl.u32 %v2775, 7
        %v2777 = vsub.s32 %v2774, %v2776
        %v2778 = vrot.slane %v2764, %v2777
        %v2779 = vcombine.low %v2714, %v2730
        %v2780 = vcombine.high %v2714, %v2730
        %v2782 = vunpack.c.l.s4 1934713408
        %v2783 = vunpack.c.0.s8 %v2782
        %v2784 = vlaneseq
        %v2785 = vshrl.u32 %v2784, 7
        %v2786 = vsub.s32 %v2783, %v2785
        %v2787 = vrot.slane %v2779, %v2786
        %v2789 = vunpack.c.l.s4 1934713408
        %v2790 = vunpack.c.0.s8 %v2789
        %v2791 = vlaneseq
        %v2792 = vshrl.u32 %v2791, 7
        %v2793 = vsub.s32 %v2790, %v2792
        %v2794 = vrot.slane %v2780, %v2793
        %v2795 = vcombine.low %v2739, %v2771
        %v2796 = vcombine.high %v2739, %v2771
        %v2797 = vcombine.low %v2746, %v2778
        %v2798 = vcombine.high %v2746, %v2778
        %v2799 = vcombine.low %v2755, %v2787
        %v2800 = vcombine.high %v2755, %v2787
        %v2801 = vcombine.low %v2762, %v2794
        %v2802 = vcombine.high %v2762, %v2794
        %v2803 = vpack.c.bf16 %v2795, %v2659
        %v2804 = vpack.c.bf16 %v2796, %v2660
        %v2805 = vpack.c.bf16 %v2797, %v2661
        %v2806 = vpack.c.bf16 %v2798, %v2662
        %v2807 = vpack.c.bf16 %v2799, %v2663
        %v2808 = vpack.c.bf16 %v2800, %v2664
        %v2809 = vpack.c.bf16 %v2801, %v2665
        %v2810 = vpack.c.bf16 %v2802, %v2666
        %v2811 = vlaneseq
        %v2812 = vshrl.u32 %v2811, 7
        %v2813 = vadd.s32 %v2812, 8
        %v2814 = vlaneseq
        %v2815 = vand.u32 %v2814, 127
        %vm2816 = vcmp.le.s32.totalorder %v2815, %v2812
        %vm2817 = vcmp.le.s32.totalorder %v2815, %v2813
        %v2818 = vsel %vm2816, 0.0, -1e+30
        %v2819 = vsel %vm2817, 0.0, -1e+30
        %vm2820 = vcmask 261120
        %v2822 = vsel %vm2820, %v1619, 0
        %v2825 = vsel %vm2820, %v2211, 0
        %2827 = vmatprep.subr.bf16.mxu0 0
        %2828 = vmatpush1.bf16.xpose.msra.mxu0 0
        %2829 = vmatprep.subr.bf16.mxu0 0
        %2830 = vmatpush1.bf16.xpose.msra.mxu0 0
        %2831 = vmatprep.subr.bf16.mxu0 0
        %2832 = vmatpush1.bf16.xpose.msra.mxu0 0
        %2833 = vmatprep.subr.bf16.mxu0 0
        %2834 = vmatpush1.bf16.xpose.msra.mxu0 0
        %2835 = vmatprep.subr.bf16.mxu0 0
        %2836 = vmatpush1.bf16.xpose.msra.mxu0 0
        %2837 = vmatprep.subr.bf16.mxu0 0
        %2838 = vmatpush1.bf16.xpose.msra.mxu0 0
        %2839 = vmatprep.subr.bf16.mxu0 0
        %2840 = vmatpush1.bf16.xpose.msra.mxu0 0
        %2841 = vmatprep.subr.bf16.mxu0 0
        %2842 = vmatpush1.bf16.xpose.msra.mxu0 %v2825
        %2843 = vmatprep.subr.bf16.mxu0 0
        %2844 = vmatpush2.bf16.xpose.msra.mxu0 0
        %2845 = vmatprep.subr.bf16.mxu0 0
        %2846 = vmatpush2.bf16.xpose.msra.mxu0 0
        %2847 = vmatprep.subr.bf16.mxu0 0
        %2848 = vmatpush2.bf16.xpose.msra.mxu0 0
        %2849 = vmatprep.subr.bf16.mxu0 0
        %2850 = vmatpush2.bf16.xpose.msra.mxu0 0
        %2851 = vmatprep.subr.bf16.mxu0 0
        %2852 = vmatpush2.bf16.xpose.msra.mxu0 0
        %2853 = vmatprep.subr.bf16.mxu0 0
        %2854 = vmatpush2.bf16.xpose.msra.mxu0 0
        %2855 = vmatprep.subr.bf16.mxu0 0
        %2856 = vmatpush2.bf16.xpose.msra.mxu0 0
        %2857 = vmatprep.subr.bf16.mxu0 0
        %2858 = vmatpush2.bf16.xpose.msra.mxu0 0
        %2859 = vmatprep.mubr.bf16.mxu0 0
        %2860 = vmatmul.mubr.bf16.gmra.mxu0 %v2822
        %v2861 = vpop.f32.mrf.mxu0
        %v2862 = vadd.f32 %v2818, %v2861
        %v2863 = vpop.f32.mrf.mxu0
        %v2864 = vpop.f32.mrf.mxu0
        %v2865 = vadd.f32 %v2819, %v2864
        %v2866 = vpop.f32.mrf.mxu0
        %2867 = vdwg.mxu0
        %v2869 = vsel %vm2820, %v1620, 0
        %v2872 = vsel %vm2820, %v2212, 0
        %2874 = vmatprep.subr.bf16.mxu0 0
        %2875 = vmatpush1.bf16.xpose.msra.mxu0 0
        %2876 = vmatprep.subr.bf16.mxu0 0
        %2877 = vmatpush1.bf16.xpose.msra.mxu0 0
        %2878 = vmatprep.subr.bf16.mxu0 0
        %2879 = vmatpush1.bf16.xpose.msra.mxu0 0
        %2880 = vmatprep.subr.bf16.mxu0 0
        %2881 = vmatpush1.bf16.xpose.msra.mxu0 0
        %2882 = vmatprep.subr.bf16.mxu0 0
        %2883 = vmatpush1.bf16.xpose.msra.mxu0 0
        %2884 = vmatprep.subr.bf16.mxu0 0
        %2885 = vmatpush1.bf16.xpose.msra.mxu0 0
        %2886 = vmatprep.subr.bf16.mxu0 0
        %2887 = vmatpush1.bf16.xpose.msra.mxu0 0
        %2888 = vmatprep.subr.bf16.mxu0 0
        %2889 = vmatpush1.bf16.xpose.msra.mxu0 %v2872
        %2890 = vmatprep.subr.bf16.mxu0 0
        %2891 = vmatpush2.bf16.xpose.msra.mxu0 0
        %2892 = vmatprep.subr.bf16.mxu0 0
        %2893 = vmatpush2.bf16.xpose.msra.mxu0 0
        %2894 = vmatprep.subr.bf16.mxu0 0
        %2895 = vmatpush2.bf16.xpose.msra.mxu0 0
        %2896 = vmatprep.subr.bf16.mxu0 0
        %2897 = vmatpush2.bf16.xpose.msra.mxu0 0
        %2898 = vmatprep.subr.bf16.mxu0 0
        %2899 = vmatpush2.bf16.xpose.msra.mxu0 0
        %2900 = vmatprep.subr.bf16.mxu0 0
        %2901 = vmatpush2.bf16.xpose.msra.mxu0 0
        %2902 = vmatprep.subr.bf16.mxu0 0
        %2903 = vmatpush2.bf16.xpose.msra.mxu0 0
        %2904 = vmatprep.subr.bf16.mxu0 0
        %2905 = vmatpush2.bf16.xpose.msra.mxu0 0
        %2906 = vmatprep.mubr.bf16.mxu0 0
        %2907 = vmatmul.mubr.bf16.gmra.mxu0 %v2869
        %v2908 = vpop.f32.mrf.mxu0
        %v2909 = vadd.f32 %v2818, %v2908
        %v2910 = vpop.f32.mrf.mxu0
        %v2911 = vpop.f32.mrf.mxu0
        %v2912 = vadd.f32 %v2819, %v2911
        %v2913 = vpop.f32.mrf.mxu0
        %2914 = vdwg.mxu0
        %v2916 = vsel %vm2820, %v1621, 0
        %v2919 = vsel %vm2820, %v2213, 0
        %2921 = vmatprep.subr.bf16.mxu0 0
        %2922 = vmatpush1.bf16.xpose.msra.mxu0 0
        %2923 = vmatprep.subr.bf16.mxu0 0
        %2924 = vmatpush1.bf16.xpose.msra.mxu0 0
        %2925 = vmatprep.subr.bf16.mxu0 0
        %2926 = vmatpush1.bf16.xpose.msra.mxu0 0
        %2927 = vmatprep.subr.bf16.mxu0 0
        %2928 = vmatpush1.bf16.xpose.msra.mxu0 0
        %2929 = vmatprep.subr.bf16.mxu0 0
        %2930 = vmatpush1.bf16.xpose.msra.mxu0 0
        %2931 = vmatprep.subr.bf16.mxu0 0
        %2932 = vmatpush1.bf16.xpose.msra.mxu0 0
        %2933 = vmatprep.subr.bf16.mxu0 0
        %2934 = vmatpush1.bf16.xpose.msra.mxu0 0
        %2935 = vmatprep.subr.bf16.mxu0 0
        %2936 = vmatpush1.bf16.xpose.msra.mxu0 %v2919
        %2937 = vmatprep.subr.bf16.mxu0 0
        %2938 = vmatpush2.bf16.xpose.msra.mxu0 0
        %2939 = vmatprep.subr.bf16.mxu0 0
        %2940 = vmatpush2.bf16.xpose.msra.mxu0 0
        %2941 = vmatprep.subr.bf16.mxu0 0
        %2942 = vmatpush2.bf16.xpose.msra.mxu0 0
        %2943 = vmatprep.subr.bf16.mxu0 0
        %2944 = vmatpush2.bf16.xpose.msra.mxu0 0
        %2945 = vmatprep.subr.bf16.mxu0 0
        %2946 = vmatpush2.bf16.xpose.msra.mxu0 0
        %2947 = vmatprep.subr.bf16.mxu0 0
        %2948 = vmatpush2.bf16.xpose.msra.mxu0 0
        %2949 = vmatprep.subr.bf16.mxu0 0
        %2950 = vmatpush2.bf16.xpose.msra.mxu0 0
        %2951 = vmatprep.subr.bf16.mxu0 0
        %2952 = vmatpush2.bf16.xpose.msra.mxu0 0
        %2953 = vmatprep.mubr.bf16.mxu0 0
        %2954 = vmatmul.mubr.bf16.gmra.mxu0 %v2916
        %v2955 = vpop.f32.mrf.mxu0
        %v2956 = vadd.f32 %v2818, %v2955
        %v2957 = vpop.f32.mrf.mxu0
        %v2958 = vpop.f32.mrf.mxu0
        %v2959 = vadd.f32 %v2819, %v2958
        %v2960 = vpop.f32.mrf.mxu0
        %2961 = vdwg.mxu0
        %v2963 = vsel %vm2820, %v1622, 0
        %v2966 = vsel %vm2820, %v2214, 0
        %2968 = vmatprep.subr.bf16.mxu0 0
        %2969 = vmatpush1.bf16.xpose.msra.mxu0 0
        %2970 = vmatprep.subr.bf16.mxu0 0
        %2971 = vmatpush1.bf16.xpose.msra.mxu0 0
        %2972 = vmatprep.subr.bf16.mxu0 0
        %2973 = vmatpush1.bf16.xpose.msra.mxu0 0
        %2974 = vmatprep.subr.bf16.mxu0 0
        %2975 = vmatpush1.bf16.xpose.msra.mxu0 0
        %2976 = vmatprep.subr.bf16.mxu0 0
        %2977 = vmatpush1.bf16.xpose.msra.mxu0 0
        %2978 = vmatprep.subr.bf16.mxu0 0
        %2979 = vmatpush1.bf16.xpose.msra.mxu0 0
        %2980 = vmatprep.subr.bf16.mxu0 0
        %2981 = vmatpush1.bf16.xpose.msra.mxu0 0
        %2982 = vmatprep.subr.bf16.mxu0 0
        %2983 = vmatpush1.bf16.xpose.msra.mxu0 %v2966
        %2984 = vmatprep.subr.bf16.mxu0 0
        %2985 = vmatpush2.bf16.xpose.msra.mxu0 0
        %2986 = vmatprep.subr.bf16.mxu0 0
        %2987 = vmatpush2.bf16.xpose.msra.mxu0 0
        %2988 = vmatprep.subr.bf16.mxu0 0
        %2989 = vmatpush2.bf16.xpose.msra.mxu0 0
        %2990 = vmatprep.subr.bf16.mxu0 0
        %2991 = vmatpush2.bf16.xpose.msra.mxu0 0
        %2992 = vmatprep.subr.bf16.mxu0 0
        %2993 = vmatpush2.bf16.xpose.msra.mxu0 0
        %2994 = vmatprep.subr.bf16.mxu0 0
        %2995 = vmatpush2.bf16.xpose.msra.mxu0 0
        %2996 = vmatprep.subr.bf16.mxu0 0
        %2997 = vmatpush2.bf16.xpose.msra.mxu0 0
        %2998 = vmatprep.subr.bf16.mxu0 0
        %2999 = vmatpush2.bf16.xpose.msra.mxu0 0
        %3000 = vmatprep.mubr.bf16.mxu0 0
        %3001 = vmatmul.mubr.bf16.gmra.mxu0 %v2963
        %v3002 = vpop.f32.mrf.mxu0
        %v3003 = vadd.f32 %v2818, %v3002
        %v3004 = vpop.f32.mrf.mxu0
        %v3005 = vpop.f32.mrf.mxu0
        %v3006 = vadd.f32 %v2819, %v3005
        %v3007 = vpop.f32.mrf.mxu0
        %3008 = vdwg.mxu0
        %v3010 = vsel %vm2820, %v1623, 0
        %v3013 = vsel %vm2820, %v2215, 0
        %3015 = vmatprep.subr.bf16.mxu0 0
        %3016 = vmatpush1.bf16.xpose.msra.mxu0 0
        %3017 = vmatprep.subr.bf16.mxu0 0
        %3018 = vmatpush1.bf16.xpose.msra.mxu0 0
        %3019 = vmatprep.subr.bf16.mxu0 0
        %3020 = vmatpush1.bf16.xpose.msra.mxu0 0
        %3021 = vmatprep.subr.bf16.mxu0 0
        %3022 = vmatpush1.bf16.xpose.msra.mxu0 0
        %3023 = vmatprep.subr.bf16.mxu0 0
        %3024 = vmatpush1.bf16.xpose.msra.mxu0 0
        %3025 = vmatprep.subr.bf16.mxu0 0
        %3026 = vmatpush1.bf16.xpose.msra.mxu0 0
        %3027 = vmatprep.subr.bf16.mxu0 0
        %3028 = vmatpush1.bf16.xpose.msra.mxu0 0
        %3029 = vmatprep.subr.bf16.mxu0 0
        %3030 = vmatpush1.bf16.xpose.msra.mxu0 %v3013
        %3031 = vmatprep.subr.bf16.mxu0 0
        %3032 = vmatpush2.bf16.xpose.msra.mxu0 0
        %3033 = vmatprep.subr.bf16.mxu0 0
        %3034 = vmatpush2.bf16.xpose.msra.mxu0 0
        %3035 = vmatprep.subr.bf16.mxu0 0
        %3036 = vmatpush2.bf16.xpose.msra.mxu0 0
        %3037 = vmatprep.subr.bf16.mxu0 0
        %3038 = vmatpush2.bf16.xpose.msra.mxu0 0
        %3039 = vmatprep.subr.bf16.mxu0 0
        %3040 = vmatpush2.bf16.xpose.msra.mxu0 0
        %3041 = vmatprep.subr.bf16.mxu0 0
        %3042 = vmatpush2.bf16.xpose.msra.mxu0 0
        %3043 = vmatprep.subr.bf16.mxu0 0
        %3044 = vmatpush2.bf16.xpose.msra.mxu0 0
        %3045 = vmatprep.subr.bf16.mxu0 0
        %3046 = vmatpush2.bf16.xpose.msra.mxu0 0
        %3047 = vmatprep.mubr.bf16.mxu0 0
        %3048 = vmatmul.mubr.bf16.gmra.mxu0 %v3010
        %v3049 = vpop.f32.mrf.mxu0
        %v3050 = vadd.f32 %v2818, %v3049
        %v3051 = vpop.f32.mrf.mxu0
        %v3052 = vpop.f32.mrf.mxu0
        %v3053 = vadd.f32 %v2819, %v3052
        %v3054 = vpop.f32.mrf.mxu0
        %3055 = vdwg.mxu0
        %v3057 = vsel %vm2820, %v1624, 0
        %v3060 = vsel %vm2820, %v2216, 0
        %3062 = vmatprep.subr.bf16.mxu0 0
        %3063 = vmatpush1.bf16.xpose.msra.mxu0 0
        %3064 = vmatprep.subr.bf16.mxu0 0
        %3065 = vmatpush1.bf16.xpose.msra.mxu0 0
        %3066 = vmatprep.subr.bf16.mxu0 0
        %3067 = vmatpush1.bf16.xpose.msra.mxu0 0
        %3068 = vmatprep.subr.bf16.mxu0 0
        %3069 = vmatpush1.bf16.xpose.msra.mxu0 0
        %3070 = vmatprep.subr.bf16.mxu0 0
        %3071 = vmatpush1.bf16.xpose.msra.mxu0 0
        %3072 = vmatprep.subr.bf16.mxu0 0
        %3073 = vmatpush1.bf16.xpose.msra.mxu0 0
        %3074 = vmatprep.subr.bf16.mxu0 0
        %3075 = vmatpush1.bf16.xpose.msra.mxu0 0
        %3076 = vmatprep.subr.bf16.mxu0 0
        %3077 = vmatpush1.bf16.xpose.msra.mxu0 %v3060
        %3078 = vmatprep.subr.bf16.mxu0 0
        %3079 = vmatpush2.bf16.xpose.msra.mxu0 0
        %3080 = vmatprep.subr.bf16.mxu0 0
        %3081 = vmatpush2.bf16.xpose.msra.mxu0 0
        %3082 = vmatprep.subr.bf16.mxu0 0
        %3083 = vmatpush2.bf16.xpose.msra.mxu0 0
        %3084 = vmatprep.subr.bf16.mxu0 0
        %3085 = vmatpush2.bf16.xpose.msra.mxu0 0
        %3086 = vmatprep.subr.bf16.mxu0 0
        %3087 = vmatpush2.bf16.xpose.msra.mxu0 0
        %3088 = vmatprep.subr.bf16.mxu0 0
        %3089 = vmatpush2.bf16.xpose.msra.mxu0 0
        %3090 = vmatprep.subr.bf16.mxu0 0
        %3091 = vmatpush2.bf16.xpose.msra.mxu0 0
        %3092 = vmatprep.subr.bf16.mxu0 0
        %3093 = vmatpush2.bf16.xpose.msra.mxu0 0
        %3094 = vmatprep.mubr.bf16.mxu0 0
        %3095 = vmatmul.mubr.bf16.gmra.mxu0 %v3057
        %v3096 = vpop.f32.mrf.mxu0
        %v3097 = vadd.f32 %v2818, %v3096
        %v3098 = vpop.f32.mrf.mxu0
        %v3099 = vpop.f32.mrf.mxu0
        %v3100 = vadd.f32 %v2819, %v3099
        %v3101 = vpop.f32.mrf.mxu0
        %3102 = vdwg.mxu0
        %v3104 = vsel %vm2820, %v1625, 0
        %v3107 = vsel %vm2820, %v2217, 0
        %3109 = vmatprep.subr.bf16.mxu0 0
        %3110 = vmatpush1.bf16.xpose.msra.mxu0 0
        %3111 = vmatprep.subr.bf16.mxu0 0
        %3112 = vmatpush1.bf16.xpose.msra.mxu0 0
        %3113 = vmatprep.subr.bf16.mxu0 0
        %3114 = vmatpush1.bf16.xpose.msra.mxu0 0
        %3115 = vmatprep.subr.bf16.mxu0 0
        %3116 = vmatpush1.bf16.xpose.msra.mxu0 0
        %3117 = vmatprep.subr.bf16.mxu0 0
        %3118 = vmatpush1.bf16.xpose.msra.mxu0 0
        %3119 = vmatprep.subr.bf16.mxu0 0
        %3120 = vmatpush1.bf16.xpose.msra.mxu0 0
        %3121 = vmatprep.subr.bf16.mxu0 0
        %3122 = vmatpush1.bf16.xpose.msra.mxu0 0
        %3123 = vmatprep.subr.bf16.mxu0 0
        %3124 = vmatpush1.bf16.xpose.msra.mxu0 %v3107
        %3125 = vmatprep.subr.bf16.mxu0 0
        %3126 = vmatpush2.bf16.xpose.msra.mxu0 0
        %3127 = vmatprep.subr.bf16.mxu0 0
        %3128 = vmatpush2.bf16.xpose.msra.mxu0 0
        %3129 = vmatprep.subr.bf16.mxu0 0
        %3130 = vmatpush2.bf16.xpose.msra.mxu0 0
        %3131 = vmatprep.subr.bf16.mxu0 0
        %3132 = vmatpush2.bf16.xpose.msra.mxu0 0
        %3133 = vmatprep.subr.bf16.mxu0 0
        %3134 = vmatpush2.bf16.xpose.msra.mxu0 0
        %3135 = vmatprep.subr.bf16.mxu0 0
        %3136 = vmatpush2.bf16.xpose.msra.mxu0 0
        %3137 = vmatprep.subr.bf16.mxu0 0
        %3138 = vmatpush2.bf16.xpose.msra.mxu0 0
        %3139 = vmatprep.subr.bf16.mxu0 0
        %3140 = vmatpush2.bf16.xpose.msra.mxu0 0
        %3141 = vmatprep.mubr.bf16.mxu0 0
        %3142 = vmatmul.mubr.bf16.gmra.mxu0 %v3104
        %v3143 = vpop.f32.mrf.mxu0
        %v3144 = vadd.f32 %v2818, %v3143
        %v3145 = vpop.f32.mrf.mxu0
        %v3146 = vpop.f32.mrf.mxu0
        %v3147 = vadd.f32 %v2819, %v3146
        %v3148 = vpop.f32.mrf.mxu0
        %3149 = vdwg.mxu0
        %v3151 = vsel %vm2820, %v1626, 0
        %v3154 = vsel %vm2820, %v2218, 0
        %3156 = vmatprep.subr.bf16.mxu0 0
        %3157 = vmatpush1.bf16.xpose.msra.mxu0 0
        %3158 = vmatprep.subr.bf16.mxu0 0
        %3159 = vmatpush1.bf16.xpose.msra.mxu0 0
        %3160 = vmatprep.subr.bf16.mxu0 0
        %3161 = vmatpush1.bf16.xpose.msra.mxu0 0
        %3162 = vmatprep.subr.bf16.mxu0 0
        %3163 = vmatpush1.bf16.xpose.msra.mxu0 0
        %3164 = vmatprep.subr.bf16.mxu0 0
        %3165 = vmatpush1.bf16.xpose.msra.mxu0 0
        %3166 = vmatprep.subr.bf16.mxu0 0
        %3167 = vmatpush1.bf16.xpose.msra.mxu0 0
        %3168 = vmatprep.subr.bf16.mxu0 0
        %3169 = vmatpush1.bf16.xpose.msra.mxu0 0
        %3170 = vmatprep.subr.bf16.mxu0 0
        %3171 = vmatpush1.bf16.xpose.msra.mxu0 %v3154
        %3172 = vmatprep.subr.bf16.mxu0 0
        %3173 = vmatpush2.bf16.xpose.msra.mxu0 0
        %3174 = vmatprep.subr.bf16.mxu0 0
        %3175 = vmatpush2.bf16.xpose.msra.mxu0 0
        %3176 = vmatprep.subr.bf16.mxu0 0
        %3177 = vmatpush2.bf16.xpose.msra.mxu0 0
        %3178 = vmatprep.subr.bf16.mxu0 0
        %3179 = vmatpush2.bf16.xpose.msra.mxu0 0
        %3180 = vmatprep.subr.bf16.mxu0 0
        %3181 = vmatpush2.bf16.xpose.msra.mxu0 0
        %3182 = vmatprep.subr.bf16.mxu0 0
        %3183 = vmatpush2.bf16.xpose.msra.mxu0 0
        %3184 = vmatprep.subr.bf16.mxu0 0
        %3185 = vmatpush2.bf16.xpose.msra.mxu0 0
        %3186 = vmatprep.subr.bf16.mxu0 0
        %3187 = vmatpush2.bf16.xpose.msra.mxu0 0
        %3188 = vmatprep.mubr.bf16.mxu0 0
        %3189 = vmatmul.mubr.bf16.gmra.mxu0 %v3151
        %v3190 = vpop.f32.mrf.mxu0
        %v3191 = vadd.f32 %v2818, %v3190
        %v3192 = vpop.f32.mrf.mxu0
        %v3193 = vpop.f32.mrf.mxu0
        %v3194 = vadd.f32 %v2819, %v3193
        %v3195 = vpop.f32.mrf.mxu0
        %3196 = vdwg.mxu0
        %vm3197 = vcmask 130048
        %v3198 = vsel %vm3197, %v2862, -inf
        %3199 = vmax.xlane.f32.xlu0 %v3198
        %v3200 = vpop.xlane.xlu0 %3199
        %v3201 = vsel %vm3197, %v2865, -inf
        %3202 = vmax.xlane.f32.xlu0 %v3201
        %v3203 = vpop.xlane.xlu0 %3202
        %v3204 = vsel %vm3197, %v2909, -inf
        %3205 = vmax.xlane.f32.xlu0 %v3204
        %v3206 = vpop.xlane.xlu0 %3205
        %v3207 = vsel %vm3197, %v2912, -inf
        %3208 = vmax.xlane.f32.xlu0 %v3207
        %v3209 = vpop.xlane.xlu0 %3208
        %v3210 = vsel %vm3197, %v2956, -inf
        %3211 = vmax.xlane.f32.xlu0 %v3210
        %v3212 = vpop.xlane.xlu0 %3211
        %v3213 = vsel %vm3197, %v2959, -inf
        %3214 = vmax.xlane.f32.xlu0 %v3213
        %v3215 = vpop.xlane.xlu0 %3214
        %v3216 = vsel %vm3197, %v3003, -inf
        %3217 = vmax.xlane.f32.xlu0 %v3216
        %v3218 = vpop.xlane.xlu0 %3217
        %v3219 = vsel %vm3197, %v3006, -inf
        %3220 = vmax.xlane.f32.xlu0 %v3219
        %v3221 = vpop.xlane.xlu0 %3220
        %v3222 = vsel %vm3197, %v3050, -inf
        %3223 = vmax.xlane.f32.xlu0 %v3222
        %v3224 = vpop.xlane.xlu0 %3223
        %v3225 = vsel %vm3197, %v3053, -inf
        %3226 = vmax.xlane.f32.xlu0 %v3225
        %v3227 = vpop.xlane.xlu0 %3226
        %v3228 = vsel %vm3197, %v3097, -inf
        %3229 = vmax.xlane.f32.xlu0 %v3228
        %v3230 = vpop.xlane.xlu0 %3229
        %v3231 = vsel %vm3197, %v3100, -inf
        %3232 = vmax.xlane.f32.xlu0 %v3231
        %v3233 = vpop.xlane.xlu0 %3232
        %v3234 = vsel %vm3197, %v3144, -inf
        %3235 = vmax.xlane.f32.xlu0 %v3234
        %v3236 = vpop.xlane.xlu0 %3235
        %v3237 = vsel %vm3197, %v3147, -inf
        %3238 = vmax.xlane.f32.xlu0 %v3237
        %v3239 = vpop.xlane.xlu0 %3238
        %v3240 = vsel %vm3197, %v3191, -inf
        %3241 = vmax.xlane.f32.xlu0 %v3240
        %v3242 = vpop.xlane.xlu0 %3241
        %v3243 = vsel %vm3197, %v3194, -inf
        %3244 = vmax.xlane.f32.xlu0 %v3243
        %v3245 = vpop.xlane.xlu0 %3244
        %v3246 = vsub.f32 %v2862, %v3200
        %v3247 = vsub.f32 %v2865, %v3203
        %v3248 = vsub.f32 %v2909, %v3206
        %v3249 = vsub.f32 %v2912, %v3209
        %v3250 = vsub.f32 %v2956, %v3212
        %v3251 = vsub.f32 %v2959, %v3215
        %v3252 = vsub.f32 %v3003, %v3218
        %v3253 = vsub.f32 %v3006, %v3221
        %v3254 = vsub.f32 %v3050, %v3224
        %v3255 = vsub.f32 %v3053, %v3227
        %v3256 = vsub.f32 %v3097, %v3230
        %v3257 = vsub.f32 %v3100, %v3233
        %v3258 = vsub.f32 %v3144, %v3236
        %v3259 = vsub.f32 %v3147, %v3239
        %v3260 = vsub.f32 %v3191, %v3242
        %v3261 = vsub.f32 %v3194, %v3245
        %v3262 = vmul.f32 %v3246, 1.442695
        %v3263 = vpow.pop %v3262
        %v3264 = vmul.f32 %v3247, 1.442695
        %v3265 = vpow.pop %v3264
        %v3266 = vmul.f32 %v3248, 1.442695
        %v3267 = vpow.pop %v3266
        %v3268 = vmul.f32 %v3249, 1.442695
        %v3269 = vpow.pop %v3268
        %v3270 = vmul.f32 %v3250, 1.442695
        %v3271 = vpow.pop %v3270
        %v3272 = vmul.f32 %v3251, 1.442695
        %v3273 = vpow.pop %v3272
        %v3274 = vmul.f32 %v3252, 1.442695
        %v3275 = vpow.pop %v3274
        %v3276 = vmul.f32 %v3253, 1.442695
        %v3277 = vpow.pop %v3276
        %v3278 = vmul.f32 %v3254, 1.442695
        %v3279 = vpow.pop %v3278
        %v3280 = vmul.f32 %v3255, 1.442695
        %v3281 = vpow.pop %v3280
        %v3282 = vmul.f32 %v3256, 1.442695
        %v3283 = vpow.pop %v3282
        %v3284 = vmul.f32 %v3257, 1.442695
        %v3285 = vpow.pop %v3284
        %v3286 = vmul.f32 %v3258, 1.442695
        %v3287 = vpow.pop %v3286
        %v3288 = vmul.f32 %v3259, 1.442695
        %v3289 = vpow.pop %v3288
        %v3290 = vmul.f32 %v3260, 1.442695
        %v3291 = vpow.pop %v3290
        %v3292 = vmul.f32 %v3261, 1.442695
        %v3293 = vpow.pop %v3292
        %v3294 = vsel %vm3197, %v3263, 0.0
        %3295 = vadd.xlane.f32.xlu0 %v3294
        %v3296 = vpop.xlane.xlu0 %3295
        %v3297 = vsel %vm3197, %v3265, 0.0
        %3298 = vadd.xlane.f32.xlu0 %v3297
        %v3299 = vpop.xlane.xlu0 %3298
        %v3300 = vsel %vm3197, %v3267, 0.0
        %3301 = vadd.xlane.f32.xlu0 %v3300
        %v3302 = vpop.xlane.xlu0 %3301
        %v3303 = vsel %vm3197, %v3269, 0.0
        %3304 = vadd.xlane.f32.xlu0 %v3303
        %v3305 = vpop.xlane.xlu0 %3304
        %v3306 = vsel %vm3197, %v3271, 0.0
        %3307 = vadd.xlane.f32.xlu0 %v3306
        %v3308 = vpop.xlane.xlu0 %3307
        %v3309 = vsel %vm3197, %v3273, 0.0
        %3310 = vadd.xlane.f32.xlu0 %v3309
        %v3311 = vpop.xlane.xlu0 %3310
        %v3312 = vsel %vm3197, %v3275, 0.0
        %3313 = vadd.xlane.f32.xlu0 %v3312
        %v3314 = vpop.xlane.xlu0 %3313
        %v3315 = vsel %vm3197, %v3277, 0.0
        %3316 = vadd.xlane.f32.xlu0 %v3315
        %v3317 = vpop.xlane.xlu0 %3316
        %v3318 = vsel %vm3197, %v3279, 0.0
        %3319 = vadd.xlane.f32.xlu0 %v3318
        %v3320 = vpop.xlane.xlu0 %3319
        %v3321 = vsel %vm3197, %v3281, 0.0
        %3322 = vadd.xlane.f32.xlu0 %v3321
        %v3323 = vpop.xlane.xlu0 %3322
        %v3324 = vsel %vm3197, %v3283, 0.0
        %3325 = vadd.xlane.f32.xlu0 %v3324
        %v3326 = vpop.xlane.xlu0 %3325
        %v3327 = vsel %vm3197, %v3285, 0.0
        %3328 = vadd.xlane.f32.xlu0 %v3327
        %v3329 = vpop.xlane.xlu0 %3328
        %v3330 = vsel %vm3197, %v3287, 0.0
        %3331 = vadd.xlane.f32.xlu0 %v3330
        %v3332 = vpop.xlane.xlu0 %3331
        %v3333 = vsel %vm3197, %v3289, 0.0
        %3334 = vadd.xlane.f32.xlu0 %v3333
        %v3335 = vpop.xlane.xlu0 %3334
        %v3336 = vsel %vm3197, %v3291, 0.0
        %3337 = vadd.xlane.f32.xlu0 %v3336
        %v3338 = vpop.xlane.xlu0 %3337
        %v3339 = vsel %vm3197, %v3293, 0.0
        %3340 = vadd.xlane.f32.xlu0 %v3339
        %v3341 = vpop.xlane.xlu0 %3340
        %v3342 = vpack.c.bf16 %v3265, %v3263
        %v3343 = vpack.c.bf16 %v3269, %v3267
        %v3344 = vpack.c.bf16 %v3273, %v3271
        %v3345 = vpack.c.bf16 %v3277, %v3275
        %v3346 = vpack.c.bf16 %v3281, %v3279
        %v3347 = vpack.c.bf16 %v3285, %v3283
        %v3348 = vpack.c.bf16 %v3289, %v3287
        %v3349 = vpack.c.bf16 %v3293, %v3291
        %v3351 = vsel %vm3197, %v3342, 0
        %3353 = vmatprep.subr.bf16.mxu0 0
        %3354 = vmatpush1.bf16.msra.mxu0 0
        %3355 = vmatprep.subr.bf16.mxu0 0
        %3356 = vmatpush1.bf16.msra.mxu0 0
        %3357 = vmatprep.subr.bf16.mxu0 0
        %3358 = vmatpush1.bf16.msra.mxu0 0
        %3359 = vmatprep.subr.bf16.mxu0 0
        %3360 = vmatpush1.bf16.msra.mxu0 0
        %3361 = vmatprep.subr.bf16.mxu0 0
        %3362 = vmatpush1.bf16.msra.mxu0 0
        %3363 = vmatprep.subr.bf16.mxu0 0
        %3364 = vmatpush1.bf16.msra.mxu0 0
        %3365 = vmatprep.subr.bf16.mxu0 0
        %3366 = vmatpush1.bf16.msra.mxu0 0
        %3367 = vmatprep.subr.bf16.mxu0 0
        %3368 = vmatpush1.bf16.msra.mxu0 %v2803
        %3369 = vmatprep.subr.bf16.mxu0 0
        %3370 = vmatpush2.bf16.msra.mxu0 0
        %3371 = vmatprep.subr.bf16.mxu0 0
        %3372 = vmatpush2.bf16.msra.mxu0 0
        %3373 = vmatprep.subr.bf16.mxu0 0
        %3374 = vmatpush2.bf16.msra.mxu0 0
        %3375 = vmatprep.subr.bf16.mxu0 0
        %3376 = vmatpush2.bf16.msra.mxu0 0
        %3377 = vmatprep.subr.bf16.mxu0 0
        %3378 = vmatpush2.bf16.msra.mxu0 0
        %3379 = vmatprep.subr.bf16.mxu0 0
        %3380 = vmatpush2.bf16.msra.mxu0 0
        %3381 = vmatprep.subr.bf16.mxu0 0
        %3382 = vmatpush2.bf16.msra.mxu0 0
        %3383 = vmatprep.subr.bf16.mxu0 0
        %3384 = vmatpush2.bf16.msra.mxu0 0
        %3385 = vmatprep.mubr.bf16.mxu0 0
        %3386 = vmatmul.mubr.bf16.gmra.mxu0 %v3351
        %v3387 = vpop.f32.mrf.mxu0
        %v3388 = vadd.f32 0.0, %v3387
        %v3389 = vpop.f32.mrf.mxu0
        %v3390 = vpop.f32.mrf.mxu0
        %v3391 = vadd.f32 0.0, %v3390
        %v3392 = vpop.f32.mrf.mxu0
        %3393 = vdwg.mxu0
        %v3395 = vsel %vm3197, %v3343, 0
        %3397 = vmatprep.subr.bf16.mxu0 0
        %3398 = vmatpush1.bf16.msra.mxu0 0
        %3399 = vmatprep.subr.bf16.mxu0 0
        %3400 = vmatpush1.bf16.msra.mxu0 0
        %3401 = vmatprep.subr.bf16.mxu0 0
        %3402 = vmatpush1.bf16.msra.mxu0 0
        %3403 = vmatprep.subr.bf16.mxu0 0
        %3404 = vmatpush1.bf16.msra.mxu0 0
        %3405 = vmatprep.subr.bf16.mxu0 0
        %3406 = vmatpush1.bf16.msra.mxu0 0
        %3407 = vmatprep.subr.bf16.mxu0 0
        %3408 = vmatpush1.bf16.msra.mxu0 0
        %3409 = vmatprep.subr.bf16.mxu0 0
        %3410 = vmatpush1.bf16.msra.mxu0 0
        %3411 = vmatprep.subr.bf16.mxu0 0
        %3412 = vmatpush1.bf16.msra.mxu0 %v2804
        %3413 = vmatprep.subr.bf16.mxu0 0
        %3414 = vmatpush2.bf16.msra.mxu0 0
        %3415 = vmatprep.subr.bf16.mxu0 0
        %3416 = vmatpush2.bf16.msra.mxu0 0
        %3417 = vmatprep.subr.bf16.mxu0 0
        %3418 = vmatpush2.bf16.msra.mxu0 0
        %3419 = vmatprep.subr.bf16.mxu0 0
        %3420 = vmatpush2.bf16.msra.mxu0 0
        %3421 = vmatprep.subr.bf16.mxu0 0
        %3422 = vmatpush2.bf16.msra.mxu0 0
        %3423 = vmatprep.subr.bf16.mxu0 0
        %3424 = vmatpush2.bf16.msra.mxu0 0
        %3425 = vmatprep.subr.bf16.mxu0 0
        %3426 = vmatpush2.bf16.msra.mxu0 0
        %3427 = vmatprep.subr.bf16.mxu0 0
        %3428 = vmatpush2.bf16.msra.mxu0 0
        %3429 = vmatprep.mubr.bf16.mxu0 0
        %3430 = vmatmul.mubr.bf16.gmra.mxu0 %v3395
        %v3431 = vpop.f32.mrf.mxu0
        %v3432 = vadd.f32 0.0, %v3431
        %v3433 = vpop.f32.mrf.mxu0
        %v3434 = vpop.f32.mrf.mxu0
        %v3435 = vadd.f32 0.0, %v3434
        %v3436 = vpop.f32.mrf.mxu0
        %3437 = vdwg.mxu0
        %v3439 = vsel %vm3197, %v3344, 0
        %3441 = vmatprep.subr.bf16.mxu0 0
        %3442 = vmatpush1.bf16.msra.mxu0 0
        %3443 = vmatprep.subr.bf16.mxu0 0
        %3444 = vmatpush1.bf16.msra.mxu0 0
        %3445 = vmatprep.subr.bf16.mxu0 0
        %3446 = vmatpush1.bf16.msra.mxu0 0
        %3447 = vmatprep.subr.bf16.mxu0 0
        %3448 = vmatpush1.bf16.msra.mxu0 0
        %3449 = vmatprep.subr.bf16.mxu0 0
        %3450 = vmatpush1.bf16.msra.mxu0 0
        %3451 = vmatprep.subr.bf16.mxu0 0
        %3452 = vmatpush1.bf16.msra.mxu0 0
        %3453 = vmatprep.subr.bf16.mxu0 0
        %3454 = vmatpush1.bf16.msra.mxu0 0
        %3455 = vmatprep.subr.bf16.mxu0 0
        %3456 = vmatpush1.bf16.msra.mxu0 %v2805
        %3457 = vmatprep.subr.bf16.mxu0 0
        %3458 = vmatpush2.bf16.msra.mxu0 0
        %3459 = vmatprep.subr.bf16.mxu0 0
        %3460 = vmatpush2.bf16.msra.mxu0 0
        %3461 = vmatprep.subr.bf16.mxu0 0
        %3462 = vmatpush2.bf16.msra.mxu0 0
        %3463 = vmatprep.subr.bf16.mxu0 0
        %3464 = vmatpush2.bf16.msra.mxu0 0
        %3465 = vmatprep.subr.bf16.mxu0 0
        %3466 = vmatpush2.bf16.msra.mxu0 0
        %3467 = vmatprep.subr.bf16.mxu0 0
        %3468 = vmatpush2.bf16.msra.mxu0 0
        %3469 = vmatprep.subr.bf16.mxu0 0
        %3470 = vmatpush2.bf16.msra.mxu0 0
        %3471 = vmatprep.subr.bf16.mxu0 0
        %3472 = vmatpush2.bf16.msra.mxu0 0
        %3473 = vmatprep.mubr.bf16.mxu0 0
        %3474 = vmatmul.mubr.bf16.gmra.mxu0 %v3439
        %v3475 = vpop.f32.mrf.mxu0
        %v3476 = vadd.f32 0.0, %v3475
        %v3477 = vpop.f32.mrf.mxu0
        %v3478 = vpop.f32.mrf.mxu0
        %v3479 = vadd.f32 0.0, %v3478
        %v3480 = vpop.f32.mrf.mxu0
        %3481 = vdwg.mxu0
        %v3483 = vsel %vm3197, %v3345, 0
        %3485 = vmatprep.subr.bf16.mxu0 0
        %3486 = vmatpush1.bf16.msra.mxu0 0
        %3487 = vmatprep.subr.bf16.mxu0 0
        %3488 = vmatpush1.bf16.msra.mxu0 0
        %3489 = vmatprep.subr.bf16.mxu0 0
        %3490 = vmatpush1.bf16.msra.mxu0 0
        %3491 = vmatprep.subr.bf16.mxu0 0
        %3492 = vmatpush1.bf16.msra.mxu0 0
        %3493 = vmatprep.subr.bf16.mxu0 0
        %3494 = vmatpush1.bf16.msra.mxu0 0
        %3495 = vmatprep.subr.bf16.mxu0 0
        %3496 = vmatpush1.bf16.msra.mxu0 0
        %3497 = vmatprep.subr.bf16.mxu0 0
        %3498 = vmatpush1.bf16.msra.mxu0 0
        %3499 = vmatprep.subr.bf16.mxu0 0
        %3500 = vmatpush1.bf16.msra.mxu0 %v2806
        %3501 = vmatprep.subr.bf16.mxu0 0
        %3502 = vmatpush2.bf16.msra.mxu0 0
        %3503 = vmatprep.subr.bf16.mxu0 0
        %3504 = vmatpush2.bf16.msra.mxu0 0
        %3505 = vmatprep.subr.bf16.mxu0 0
        %3506 = vmatpush2.bf16.msra.mxu0 0
        %3507 = vmatprep.subr.bf16.mxu0 0
        %3508 = vmatpush2.bf16.msra.mxu0 0
        %3509 = vmatprep.subr.bf16.mxu0 0
        %3510 = vmatpush2.bf16.msra.mxu0 0
        %3511 = vmatprep.subr.bf16.mxu0 0
        %3512 = vmatpush2.bf16.msra.mxu0 0
        %3513 = vmatprep.subr.bf16.mxu0 0
        %3514 = vmatpush2.bf16.msra.mxu0 0
        %3515 = vmatprep.subr.bf16.mxu0 0
        %3516 = vmatpush2.bf16.msra.mxu0 0
        %3517 = vmatprep.mubr.bf16.mxu0 0
        %3518 = vmatmul.mubr.bf16.gmra.mxu0 %v3483
        %v3519 = vpop.f32.mrf.mxu0
        %v3520 = vadd.f32 0.0, %v3519
        %v3521 = vpop.f32.mrf.mxu0
        %v3522 = vpop.f32.mrf.mxu0
        %v3523 = vadd.f32 0.0, %v3522
        %v3524 = vpop.f32.mrf.mxu0
        %3525 = vdwg.mxu0
        %v3527 = vsel %vm3197, %v3346, 0
        %3529 = vmatprep.subr.bf16.mxu0 0
        %3530 = vmatpush1.bf16.msra.mxu0 0
        %3531 = vmatprep.subr.bf16.mxu0 0
        %3532 = vmatpush1.bf16.msra.mxu0 0
        %3533 = vmatprep.subr.bf16.mxu0 0
        %3534 = vmatpush1.bf16.msra.mxu0 0
        %3535 = vmatprep.subr.bf16.mxu0 0
        %3536 = vmatpush1.bf16.msra.mxu0 0
        %3537 = vmatprep.subr.bf16.mxu0 0
        %3538 = vmatpush1.bf16.msra.mxu0 0
        %3539 = vmatprep.subr.bf16.mxu0 0
        %3540 = vmatpush1.bf16.msra.mxu0 0
        %3541 = vmatprep.subr.bf16.mxu0 0
        %3542 = vmatpush1.bf16.msra.mxu0 0
        %3543 = vmatprep.subr.bf16.mxu0 0
        %3544 = vmatpush1.bf16.msra.mxu0 %v2807
        %3545 = vmatprep.subr.bf16.mxu0 0
        %3546 = vmatpush2.bf16.msra.mxu0 0
        %3547 = vmatprep.subr.bf16.mxu0 0
        %3548 = vmatpush2.bf16.msra.mxu0 0
        %3549 = vmatprep.subr.bf16.mxu0 0
        %3550 = vmatpush2.bf16.msra.mxu0 0
        %3551 = vmatprep.subr.bf16.mxu0 0
        %3552 = vmatpush2.bf16.msra.mxu0 0
        %3553 = vmatprep.subr.bf16.mxu0 0
        %3554 = vmatpush2.bf16.msra.mxu0 0
        %3555 = vmatprep.subr.bf16.mxu0 0
        %3556 = vmatpush2.bf16.msra.mxu0 0
        %3557 = vmatprep.subr.bf16.mxu0 0
        %3558 = vmatpush2.bf16.msra.mxu0 0
        %3559 = vmatprep.subr.bf16.mxu0 0
        %3560 = vmatpush2.bf16.msra.mxu0 0
        %3561 = vmatprep.mubr.bf16.mxu0 0
        %3562 = vmatmul.mubr.bf16.gmra.mxu0 %v3527
        %v3563 = vpop.f32.mrf.mxu0
        %v3564 = vadd.f32 0.0, %v3563
        %v3565 = vpop.f32.mrf.mxu0
        %v3566 = vpop.f32.mrf.mxu0
        %v3567 = vadd.f32 0.0, %v3566
        %v3568 = vpop.f32.mrf.mxu0
        %3569 = vdwg.mxu0
        %v3571 = vsel %vm3197, %v3347, 0
        %3573 = vmatprep.subr.bf16.mxu0 0
        %3574 = vmatpush1.bf16.msra.mxu0 0
        %3575 = vmatprep.subr.bf16.mxu0 0
        %3576 = vmatpush1.bf16.msra.mxu0 0
        %3577 = vmatprep.subr.bf16.mxu0 0
        %3578 = vmatpush1.bf16.msra.mxu0 0
        %3579 = vmatprep.subr.bf16.mxu0 0
        %3580 = vmatpush1.bf16.msra.mxu0 0
        %3581 = vmatprep.subr.bf16.mxu0 0
        %3582 = vmatpush1.bf16.msra.mxu0 0
        %3583 = vmatprep.subr.bf16.mxu0 0
        %3584 = vmatpush1.bf16.msra.mxu0 0
        %3585 = vmatprep.subr.bf16.mxu0 0
        %3586 = vmatpush1.bf16.msra.mxu0 0
        %3587 = vmatprep.subr.bf16.mxu0 0
        %3588 = vmatpush1.bf16.msra.mxu0 %v2808
        %3589 = vmatprep.subr.bf16.mxu0 0
        %3590 = vmatpush2.bf16.msra.mxu0 0
        %3591 = vmatprep.subr.bf16.mxu0 0
        %3592 = vmatpush2.bf16.msra.mxu0 0
        %3593 = vmatprep.subr.bf16.mxu0 0
        %3594 = vmatpush2.bf16.msra.mxu0 0
        %3595 = vmatprep.subr.bf16.mxu0 0
        %3596 = vmatpush2.bf16.msra.mxu0 0
        %3597 = vmatprep.subr.bf16.mxu0 0
        %3598 = vmatpush2.bf16.msra.mxu0 0
        %3599 = vmatprep.subr.bf16.mxu0 0
        %3600 = vmatpush2.bf16.msra.mxu0 0
        %3601 = vmatprep.subr.bf16.mxu0 0
        %3602 = vmatpush2.bf16.msra.mxu0 0
        %3603 = vmatprep.subr.bf16.mxu0 0
        %3604 = vmatpush2.bf16.msra.mxu0 0
        %3605 = vmatprep.mubr.bf16.mxu0 0
        %3606 = vmatmul.mubr.bf16.gmra.mxu0 %v3571
        %v3607 = vpop.f32.mrf.mxu0
        %v3608 = vadd.f32 0.0, %v3607
        %v3609 = vpop.f32.mrf.mxu0
        %v3610 = vpop.f32.mrf.mxu0
        %v3611 = vadd.f32 0.0, %v3610
        %v3612 = vpop.f32.mrf.mxu0
        %3613 = vdwg.mxu0
        %v3615 = vsel %vm3197, %v3348, 0
        %3617 = vmatprep.subr.bf16.mxu0 0
        %3618 = vmatpush1.bf16.msra.mxu0 0
        %3619 = vmatprep.subr.bf16.mxu0 0
        %3620 = vmatpush1.bf16.msra.mxu0 0
        %3621 = vmatprep.subr.bf16.mxu0 0
        %3622 = vmatpush1.bf16.msra.mxu0 0
        %3623 = vmatprep.subr.bf16.mxu0 0
        %3624 = vmatpush1.bf16.msra.mxu0 0
        %3625 = vmatprep.subr.bf16.mxu0 0
        %3626 = vmatpush1.bf16.msra.mxu0 0
        %3627 = vmatprep.subr.bf16.mxu0 0
        %3628 = vmatpush1.bf16.msra.mxu0 0
        %3629 = vmatprep.subr.bf16.mxu0 0
        %3630 = vmatpush1.bf16.msra.mxu0 0
        %3631 = vmatprep.subr.bf16.mxu0 0
        %3632 = vmatpush1.bf16.msra.mxu0 %v2809
        %3633 = vmatprep.subr.bf16.mxu0 0
        %3634 = vmatpush2.bf16.msra.mxu0 0
        %3635 = vmatprep.subr.bf16.mxu0 0
        %3636 = vmatpush2.bf16.msra.mxu0 0
        %3637 = vmatprep.subr.bf16.mxu0 0
        %3638 = vmatpush2.bf16.msra.mxu0 0
        %3639 = vmatprep.subr.bf16.mxu0 0
        %3640 = vmatpush2.bf16.msra.mxu0 0
        %3641 = vmatprep.subr.bf16.mxu0 0
        %3642 = vmatpush2.bf16.msra.mxu0 0
        %3643 = vmatprep.subr.bf16.mxu0 0
        %3644 = vmatpush2.bf16.msra.mxu0 0
        %3645 = vmatprep.subr.bf16.mxu0 0
        %3646 = vmatpush2.bf16.msra.mxu0 0
        %3647 = vmatprep.subr.bf16.mxu0 0
        %3648 = vmatpush2.bf16.msra.mxu0 0
        %3649 = vmatprep.mubr.bf16.mxu0 0
        %3650 = vmatmul.mubr.bf16.gmra.mxu0 %v3615
        %v3651 = vpop.f32.mrf.mxu0
        %v3652 = vadd.f32 0.0, %v3651
        %v3653 = vpop.f32.mrf.mxu0
        %v3654 = vpop.f32.mrf.mxu0
        %v3655 = vadd.f32 0.0, %v3654
        %v3656 = vpop.f32.mrf.mxu0
        %3657 = vdwg.mxu0
        %v3659 = vsel %vm3197, %v3349, 0
        %3661 = vmatprep.subr.bf16.mxu0 0
        %3662 = vmatpush1.bf16.msra.mxu0 0
        %3663 = vmatprep.subr.bf16.mxu0 0
        %3664 = vmatpush1.bf16.msra.mxu0 0
        %3665 = vmatprep.subr.bf16.mxu0 0
        %3666 = vmatpush1.bf16.msra.mxu0 0
        %3667 = vmatprep.subr.bf16.mxu0 0
        %3668 = vmatpush1.bf16.msra.mxu0 0
        %3669 = vmatprep.subr.bf16.mxu0 0
        %3670 = vmatpush1.bf16.msra.mxu0 0
        %3671 = vmatprep.subr.bf16.mxu0 0
        %3672 = vmatpush1.bf16.msra.mxu0 0
        %3673 = vmatprep.subr.bf16.mxu0 0
        %3674 = vmatpush1.bf16.msra.mxu0 0
        %3675 = vmatprep.subr.bf16.mxu0 0
        %3676 = vmatpush1.bf16.msra.mxu0 %v2810
        %3677 = vmatprep.subr.bf16.mxu0 0
        %3678 = vmatpush2.bf16.msra.mxu0 0
        %3679 = vmatprep.subr.bf16.mxu0 0
        %3680 = vmatpush2.bf16.msra.mxu0 0
        %3681 = vmatprep.subr.bf16.mxu0 0
        %3682 = vmatpush2.bf16.msra.mxu0 0
        %3683 = vmatprep.subr.bf16.mxu0 0
        %3684 = vmatpush2.bf16.msra.mxu0 0
        %3685 = vmatprep.subr.bf16.mxu0 0
        %3686 = vmatpush2.bf16.msra.mxu0 0
        %3687 = vmatprep.subr.bf16.mxu0 0
        %3688 = vmatpush2.bf16.msra.mxu0 0
        %3689 = vmatprep.subr.bf16.mxu0 0
        %3690 = vmatpush2.bf16.msra.mxu0 0
        %3691 = vmatprep.subr.bf16.mxu0 0
        %3692 = vmatpush2.bf16.msra.mxu0 0
        %3693 = vmatprep.mubr.bf16.mxu0 0
        %3694 = vmatmul.mubr.bf16.gmra.mxu0 %v3659
        %v3695 = vpop.f32.mrf.mxu0
        %v3696 = vadd.f32 0.0, %v3695
        %v3697 = vpop.f32.mrf.mxu0
        %v3698 = vpop.f32.mrf.mxu0
        %v3699 = vadd.f32 0.0, %v3698
        %v3700 = vpop.f32.mrf.mxu0
        %3701 = vdwg.mxu0
        %v3702 = vrcp.pop %v3296
        %v3703 = vrcp.pop %v3299
        %v3704 = vrcp.pop %v3302
        %v3705 = vrcp.pop %v3305
        %v3706 = vrcp.pop %v3308
        %v3707 = vrcp.pop %v3311
        %v3708 = vrcp.pop %v3314
        %v3709 = vrcp.pop %v3317
        %v3710 = vrcp.pop %v3320
        %v3711 = vrcp.pop %v3323
        %v3712 = vrcp.pop %v3326
        %v3713 = vrcp.pop %v3329
        %v3714 = vrcp.pop %v3332
        %v3715 = vrcp.pop %v3335
        %v3716 = vrcp.pop %v3338
        %v3717 = vrcp.pop %v3341
        %v3718 = vmul.f32 %v3388, %v3702
        %v3719 = vmul.f32 %v3391, %v3703
        %v3720 = vmul.f32 %v3432, %v3704
        %v3721 = vmul.f32 %v3435, %v3705
        %v3722 = vmul.f32 %v3476, %v3706
        %v3723 = vmul.f32 %v3479, %v3707
        %v3724 = vmul.f32 %v3520, %v3708
        %v3725 = vmul.f32 %v3523, %v3709
        %v3726 = vmul.f32 %v3564, %v3710
        %v3727 = vmul.f32 %v3567, %v3711
        %v3728 = vmul.f32 %v3608, %v3712
        %v3729 = vmul.f32 %v3611, %v3713
        %v3730 = vmul.f32 %v3652, %v3714
        %v3731 = vmul.f32 %v3655, %v3715
        %v3732 = vmul.f32 %v3696, %v3716
        %v3733 = vmul.f32 %v3699, %v3717
        %v3734 = vcombine.low %v3718, %v3722
        %v3735 = vcombine.high %v3718, %v3722
        %v3737 = vunpack.c.l.s4 1983009808
        %v3738 = vunpack.c.0.s8 %v3737
        %v3739 = vlaneseq
        %v3740 = vshrl.u32 %v3739, 7
        %v3741 = vsub.s32 %v3738, %v3740
        %v3742 = vrot.slane %v3734, %v3741
        %v3744 = vunpack.c.l.s4 1983009808
        %v3745 = vunpack.c.0.s8 %v3744
        %v3746 = vlaneseq
        %v3747 = vshrl.u32 %v3746, 7
        %v3748 = vsub.s32 %v3745, %v3747
        %v3749 = vrot.slane %v3735, %v3748
        %v3750 = vcombine.low %v3720, %v3724
        %v3751 = vcombine.high %v3720, %v3724
        %v3753 = vunpack.c.l.s4 1983009808
        %v3754 = vunpack.c.0.s8 %v3753
        %v3755 = vlaneseq
        %v3756 = vshrl.u32 %v3755, 7
        %v3757 = vsub.s32 %v3754, %v3756
        %v3758 = vrot.slane %v3750, %v3757
        %v3760 = vunpack.c.l.s4 1983009808
        %v3761 = vunpack.c.0.s8 %v3760
        %v3762 = vlaneseq
        %v3763 = vshrl.u32 %v3762, 7
        %v3764 = vsub.s32 %v3761, %v3763
        %v3765 = vrot.slane %v3751, %v3764
        %v3766 = vcombine.low %v3726, %v3730
        %v3767 = vcombine.high %v3726, %v3730
        %v3769 = vunpack.c.l.s4 1983009808
        %v3770 = vunpack.c.0.s8 %v3769
        %v3771 = vlaneseq
        %v3772 = vshrl.u32 %v3771, 7
        %v3773 = vsub.s32 %v3770, %v3772
        %v3774 = vrot.slane %v3766, %v3773
        %v3776 = vunpack.c.l.s4 1983009808
        %v3777 = vunpack.c.0.s8 %v3776
        %v3778 = vlaneseq
        %v3779 = vshrl.u32 %v3778, 7
        %v3780 = vsub.s32 %v3777, %v3779
        %v3781 = vrot.slane %v3767, %v3780
        %v3782 = vcombine.low %v3728, %v3732
        %v3783 = vcombine.high %v3728, %v3732
        %v3785 = vunpack.c.l.s4 1983009808
        %v3786 = vunpack.c.0.s8 %v3785
        %v3787 = vlaneseq
        %v3788 = vshrl.u32 %v3787, 7
        %v3789 = vsub.s32 %v3786, %v3788
        %v3790 = vrot.slane %v3782, %v3789
        %v3792 = vunpack.c.l.s4 1983009808
        %v3793 = vunpack.c.0.s8 %v3792
        %v3794 = vlaneseq
        %v3795 = vshrl.u32 %v3794, 7
        %v3796 = vsub.s32 %v3793, %v3795
        %v3797 = vrot.slane %v3783, %v3796
        %v3798 = vcombine.low %v3742, %v3758
        %v3799 = vcombine.high %v3742, %v3758
        %v3801 = vunpack.c.l.s4 1934713408
        %v3802 = vunpack.c.0.s8 %v3801
        %v3803 = vlaneseq
        %v3804 = vshrl.u32 %v3803, 7
        %v3805 = vsub.s32 %v3802, %v3804
        %v3806 = vrot.slane %v3798, %v3805
        %v3808 = vunpack.c.l.s4 1934713408
        %v3809 = vunpack.c.0.s8 %v3808
        %v3810 = vlaneseq
        %v3811 = vshrl.u32 %v3810, 7
        %v3812 = vsub.s32 %v3809, %v3811
        %v3813 = vrot.slane %v3799, %v3812
        %v3814 = vcombine.low %v3749, %v3765
        %v3815 = vcombine.high %v3749, %v3765
        %v3817 = vunpack.c.l.s4 1934713408
        %v3818 = vunpack.c.0.s8 %v3817
        %v3819 = vlaneseq
        %v3820 = vshrl.u32 %v3819, 7
        %v3821 = vsub.s32 %v3818, %v3820
        %v3822 = vrot.slane %v3814, %v3821
        %v3824 = vunpack.c.l.s4 1934713408
        %v3825 = vunpack.c.0.s8 %v3824
        %v3826 = vlaneseq
        %v3827 = vshrl.u32 %v3826, 7
        %v3828 = vsub.s32 %v3825, %v3827
        %v3829 = vrot.slane %v3815, %v3828
        %v3830 = vcombine.low %v3774, %v3790
        %v3831 = vcombine.high %v3774, %v3790
        %v3833 = vunpack.c.l.s4 1934713408
        %v3834 = vunpack.c.0.s8 %v3833
        %v3835 = vlaneseq
        %v3836 = vshrl.u32 %v3835, 7
        %v3837 = vsub.s32 %v3834, %v3836
        %v3838 = vrot.slane %v3830, %v3837
        %v3840 = vunpack.c.l.s4 1934713408
        %v3841 = vunpack.c.0.s8 %v3840
        %v3842 = vlaneseq
        %v3843 = vshrl.u32 %v3842, 7
        %v3844 = vsub.s32 %v3841, %v3843
        %v3845 = vrot.slane %v3831, %v3844
        %v3846 = vcombine.low %v3781, %v3797
        %v3847 = vcombine.high %v3781, %v3797
        %v3849 = vunpack.c.l.s4 1934713408
        %v3850 = vunpack.c.0.s8 %v3849
        %v3851 = vlaneseq
        %v3852 = vshrl.u32 %v3851, 7
        %v3853 = vsub.s32 %v3850, %v3852
        %v3854 = vrot.slane %v3846, %v3853
        %v3856 = vunpack.c.l.s4 1934713408
        %v3857 = vunpack.c.0.s8 %v3856
        %v3858 = vlaneseq
        %v3859 = vshrl.u32 %v3858, 7
        %v3860 = vsub.s32 %v3857, %v3859
        %v3861 = vrot.slane %v3847, %v3860
        %v3862 = vcombine.low %v3806, %v3838
        %v3863 = vcombine.high %v3806, %v3838
        %v3864 = vcombine.low %v3813, %v3845
        %v3865 = vcombine.high %v3813, %v3845
        %v3866 = vcombine.low %v3822, %v3854
        %v3867 = vcombine.high %v3822, %v3854
        %v3868 = vcombine.low %v3829, %v3861
        %v3869 = vcombine.high %v3829, %v3861
        %v3870 = vcombine.low %v3719, %v3723
        %v3871 = vcombine.high %v3719, %v3723
        %v3873 = vunpack.c.l.s4 1983009808
        %v3874 = vunpack.c.0.s8 %v3873
        %v3875 = vlaneseq
        %v3876 = vshrl.u32 %v3875, 7
        %v3877 = vsub.s32 %v3874, %v3876
        %v3878 = vrot.slane %v3870, %v3877
        %v3880 = vunpack.c.l.s4 1983009808
        %v3881 = vunpack.c.0.s8 %v3880
        %v3882 = vlaneseq
        %v3883 = vshrl.u32 %v3882, 7
        %v3884 = vsub.s32 %v3881, %v3883
        %v3885 = vrot.slane %v3871, %v3884
        %v3886 = vcombine.low %v3721, %v3725
        %v3887 = vcombine.high %v3721, %v3725
        %v3889 = vunpack.c.l.s4 1983009808
        %v3890 = vunpack.c.0.s8 %v3889
        %v3891 = vlaneseq
        %v3892 = vshrl.u32 %v3891, 7
        %v3893 = vsub.s32 %v3890, %v3892
        %v3894 = vrot.slane %v3886, %v3893
        %v3896 = vunpack.c.l.s4 1983009808
        %v3897 = vunpack.c.0.s8 %v3896
        %v3898 = vlaneseq
        %v3899 = vshrl.u32 %v3898, 7
        %v3900 = vsub.s32 %v3897, %v3899
        %v3901 = vrot.slane %v3887, %v3900
        %v3902 = vcombine.low %v3727, %v3731
        %v3903 = vcombine.high %v3727, %v3731
        %v3905 = vunpack.c.l.s4 1983009808
        %v3906 = vunpack.c.0.s8 %v3905
        %v3907 = vlaneseq
        %v3908 = vshrl.u32 %v3907, 7
        %v3909 = vsub.s32 %v3906, %v3908
        %v3910 = vrot.slane %v3902, %v3909
        %v3912 = vunpack.c.l.s4 1983009808
        %v3913 = vunpack.c.0.s8 %v3912
        %v3914 = vlaneseq
        %v3915 = vshrl.u32 %v3914, 7
        %v3916 = vsub.s32 %v3913, %v3915
        %v3917 = vrot.slane %v3903, %v3916
        %v3918 = vcombine.low %v3729, %v3733
        %v3919 = vcombine.high %v3729, %v3733
        %v3921 = vunpack.c.l.s4 1983009808
        %v3922 = vunpack.c.0.s8 %v3921
        %v3923 = vlaneseq
        %v3924 = vshrl.u32 %v3923, 7
        %v3925 = vsub.s32 %v3922, %v3924
        %v3926 = vrot.slane %v3918, %v3925
        %v3928 = vunpack.c.l.s4 1983009808
        %v3929 = vunpack.c.0.s8 %v3928
        %v3930 = vlaneseq
        %v3931 = vshrl.u32 %v3930, 7
        %v3932 = vsub.s32 %v3929, %v3931
        %v3933 = vrot.slane %v3919, %v3932
        %v3934 = vcombine.low %v3878, %v3894
        %v3935 = vcombine.high %v3878, %v3894
        %v3937 = vunpack.c.l.s4 1934713408
        %v3938 = vunpack.c.0.s8 %v3937
        %v3939 = vlaneseq
        %v3940 = vshrl.u32 %v3939, 7
        %v3941 = vsub.s32 %v3938, %v3940
        %v3942 = vrot.slane %v3934, %v3941
        %v3944 = vunpack.c.l.s4 1934713408
        %v3945 = vunpack.c.0.s8 %v3944
        %v3946 = vlaneseq
        %v3947 = vshrl.u32 %v3946, 7
        %v3948 = vsub.s32 %v3945, %v3947
        %v3949 = vrot.slane %v3935, %v3948
        %v3950 = vcombine.low %v3885, %v3901
        %v3951 = vcombine.high %v3885, %v3901
        %v3953 = vunpack.c.l.s4 1934713408
        %v3954 = vunpack.c.0.s8 %v3953
        %v3955 = vlaneseq
        %v3956 = vshrl.u32 %v3955, 7
        %v3957 = vsub.s32 %v3954, %v3956
        %v3958 = vrot.slane %v3950, %v3957
        %v3960 = vunpack.c.l.s4 1934713408
        %v3961 = vunpack.c.0.s8 %v3960
        %v3962 = vlaneseq
        %v3963 = vshrl.u32 %v3962, 7
        %v3964 = vsub.s32 %v3961, %v3963
        %v3965 = vrot.slane %v3951, %v3964
        %v3966 = vcombine.low %v3910, %v3926
        %v3967 = vcombine.high %v3910, %v3926
        %v3969 = vunpack.c.l.s4 1934713408
        %v3970 = vunpack.c.0.s8 %v3969
        %v3971 = vlaneseq
        %v3972 = vshrl.u32 %v3971, 7
        %v3973 = vsub.s32 %v3970, %v3972
        %v3974 = vrot.slane %v3966, %v3973
        %v3976 = vunpack.c.l.s4 1934713408
        %v3977 = vunpack.c.0.s8 %v3976
        %v3978 = vlaneseq
        %v3979 = vshrl.u32 %v3978, 7
        %v3980 = vsub.s32 %v3977, %v3979
        %v3981 = vrot.slane %v3967, %v3980
        %v3982 = vcombine.low %v3917, %v3933
        %v3983 = vcombine.high %v3917, %v3933
        %v3985 = vunpack.c.l.s4 1934713408
        %v3986 = vunpack.c.0.s8 %v3985
        %v3987 = vlaneseq
        %v3988 = vshrl.u32 %v3987, 7
        %v3989 = vsub.s32 %v3986, %v3988
        %v3990 = vrot.slane %v3982, %v3989
        %v3992 = vunpack.c.l.s4 1934713408
        %v3993 = vunpack.c.0.s8 %v3992
        %v3994 = vlaneseq
        %v3995 = vshrl.u32 %v3994, 7
        %v3996 = vsub.s32 %v3993, %v3995
        %v3997 = vrot.slane %v3983, %v3996
        %v3998 = vcombine.low %v3942, %v3974
        %v3999 = vcombine.high %v3942, %v3974
        %v4000 = vcombine.low %v3949, %v3981
        %v4001 = vcombine.high %v3949, %v3981
        %v4002 = vcombine.low %v3958, %v3990
        %v4003 = vcombine.high %v3958, %v3990
        %v4004 = vcombine.low %v3965, %v3997
        %v4005 = vcombine.high %v3965, %v3997
        %v4006 = vcombine.low %v3862, %v3864
        %v4007 = vcombine.high %v3862, %v3864
        %v4009 = vunpack.c.l.s4 1983009808
        %v4010 = vunpack.c.0.s8 %v4009
        %v4011 = vlaneseq
        %v4012 = vshrl.u32 %v4011, 7
        %v4013 = vsub.s32 %v4010, %v4012
        %v4014 = vrot.slane %v4006, %v4013
        %v4016 = vunpack.c.l.s4 1983009808
        %v4017 = vunpack.c.0.s8 %v4016
        %v4018 = vlaneseq
        %v4019 = vshrl.u32 %v4018, 7
        %v4020 = vsub.s32 %v4017, %v4019
        %v4021 = vrot.slane %v4007, %v4020
        %v4022 = vcombine.low %v3863, %v3865
        %v4023 = vcombine.high %v3863, %v3865
        %v4025 = vunpack.c.l.s4 1983009808
        %v4026 = vunpack.c.0.s8 %v4025
        %v4027 = vlaneseq
        %v4028 = vshrl.u32 %v4027, 7
        %v4029 = vsub.s32 %v4026, %v4028
        %v4030 = vrot.slane %v4022, %v4029
        %v4032 = vunpack.c.l.s4 1983009808
        %v4033 = vunpack.c.0.s8 %v4032
        %v4034 = vlaneseq
        %v4035 = vshrl.u32 %v4034, 7
        %v4036 = vsub.s32 %v4033, %v4035
        %v4037 = vrot.slane %v4023, %v4036
        %v4038 = vcombine.low %v3866, %v3868
        %v4039 = vcombine.high %v3866, %v3868
        %v4041 = vunpack.c.l.s4 1983009808
        %v4042 = vunpack.c.0.s8 %v4041
        %v4043 = vlaneseq
        %v4044 = vshrl.u32 %v4043, 7
        %v4045 = vsub.s32 %v4042, %v4044
        %v4046 = vrot.slane %v4038, %v4045
        %v4048 = vunpack.c.l.s4 1983009808
        %v4049 = vunpack.c.0.s8 %v4048
        %v4050 = vlaneseq
        %v4051 = vshrl.u32 %v4050, 7
        %v4052 = vsub.s32 %v4049, %v4051
        %v4053 = vrot.slane %v4039, %v4052
        %v4054 = vcombine.low %v3867, %v3869
        %v4055 = vcombine.high %v3867, %v3869
        %v4057 = vunpack.c.l.s4 1983009808
        %v4058 = vunpack.c.0.s8 %v4057
        %v4059 = vlaneseq
        %v4060 = vshrl.u32 %v4059, 7
        %v4061 = vsub.s32 %v4058, %v4060
        %v4062 = vrot.slane %v4054, %v4061
        %v4064 = vunpack.c.l.s4 1983009808
        %v4065 = vunpack.c.0.s8 %v4064
        %v4066 = vlaneseq
        %v4067 = vshrl.u32 %v4066, 7
        %v4068 = vsub.s32 %v4065, %v4067
        %v4069 = vrot.slane %v4055, %v4068
        %v4070 = vcombine.low %v4014, %v4030
        %v4071 = vcombine.high %v4014, %v4030
        %v4073 = vunpack.c.l.s4 1934713408
        %v4074 = vunpack.c.0.s8 %v4073
        %v4075 = vlaneseq
        %v4076 = vshrl.u32 %v4075, 7
        %v4077 = vsub.s32 %v4074, %v4076
        %v4078 = vrot.slane %v4070, %v4077
        %v4080 = vunpack.c.l.s4 1934713408
        %v4081 = vunpack.c.0.s8 %v4080
        %v4082 = vlaneseq
        %v4083 = vshrl.u32 %v4082, 7
        %v4084 = vsub.s32 %v4081, %v4083
        %v4085 = vrot.slane %v4071, %v4084
        %v4086 = vcombine.low %v4021, %v4037
        %v4087 = vcombine.high %v4021, %v4037
        %v4089 = vunpack.c.l.s4 1934713408
        %v4090 = vunpack.c.0.s8 %v4089
        %v4091 = vlaneseq
        %v4092 = vshrl.u32 %v4091, 7
        %v4093 = vsub.s32 %v4090, %v4092
        %v4094 = vrot.slane %v4086, %v4093
        %v4096 = vunpack.c.l.s4 1934713408
        %v4097 = vunpack.c.0.s8 %v4096
        %v4098 = vlaneseq
        %v4099 = vshrl.u32 %v4098, 7
        %v4100 = vsub.s32 %v4097, %v4099
        %v4101 = vrot.slane %v4087, %v4100
        %v4102 = vcombine.low %v4046, %v4062
        %v4103 = vcombine.high %v4046, %v4062
        %v4105 = vunpack.c.l.s4 1934713408
        %v4106 = vunpack.c.0.s8 %v4105
        %v4107 = vlaneseq
        %v4108 = vshrl.u32 %v4107, 7
        %v4109 = vsub.s32 %v4106, %v4108
        %v4110 = vrot.slane %v4102, %v4109
        %v4112 = vunpack.c.l.s4 1934713408
        %v4113 = vunpack.c.0.s8 %v4112
        %v4114 = vlaneseq
        %v4115 = vshrl.u32 %v4114, 7
        %v4116 = vsub.s32 %v4113, %v4115
        %v4117 = vrot.slane %v4103, %v4116
        %v4118 = vcombine.low %v4053, %v4069
        %v4119 = vcombine.high %v4053, %v4069
        %v4121 = vunpack.c.l.s4 1934713408
        %v4122 = vunpack.c.0.s8 %v4121
        %v4123 = vlaneseq
        %v4124 = vshrl.u32 %v4123, 7
        %v4125 = vsub.s32 %v4122, %v4124
        %v4126 = vrot.slane %v4118, %v4125
        %v4128 = vunpack.c.l.s4 1934713408
        %v4129 = vunpack.c.0.s8 %v4128
        %v4130 = vlaneseq
        %v4131 = vshrl.u32 %v4130, 7
        %v4132 = vsub.s32 %v4129, %v4131
        %v4133 = vrot.slane %v4119, %v4132
        %v4134 = vcombine.low %v4078, %v4110
        %v4135 = vcombine.high %v4078, %v4110
        %v4136 = vcombine.low %v4085, %v4117
        %v4137 = vcombine.high %v4085, %v4117
        %v4138 = vcombine.low %v4094, %v4126
        %v4139 = vcombine.high %v4094, %v4126
        %v4140 = vcombine.low %v4101, %v4133
        %v4141 = vcombine.high %v4101, %v4133
        %v4142 = vcombine.low %v3998, %v4000
        %v4143 = vcombine.high %v3998, %v4000
        %v4145 = vunpack.c.l.s4 1983009808
        %v4146 = vunpack.c.0.s8 %v4145
        %v4147 = vlaneseq
        %v4148 = vshrl.u32 %v4147, 7
        %v4149 = vsub.s32 %v4146, %v4148
        %v4150 = vrot.slane %v4142, %v4149
        %v4152 = vunpack.c.l.s4 1983009808
        %v4153 = vunpack.c.0.s8 %v4152
        %v4154 = vlaneseq
        %v4155 = vshrl.u32 %v4154, 7
        %v4156 = vsub.s32 %v4153, %v4155
        %v4157 = vrot.slane %v4143, %v4156
        %v4158 = vcombine.low %v3999, %v4001
        %v4159 = vcombine.high %v3999, %v4001
        %v4161 = vunpack.c.l.s4 1983009808
        %v4162 = vunpack.c.0.s8 %v4161
        %v4163 = vlaneseq
        %v4164 = vshrl.u32 %v4163, 7
        %v4165 = vsub.s32 %v4162, %v4164
        %v4166 = vrot.slane %v4158, %v4165
        %v4168 = vunpack.c.l.s4 1983009808
        %v4169 = vunpack.c.0.s8 %v4168
        %v4170 = vlaneseq
        %v4171 = vshrl.u32 %v4170, 7
        %v4172 = vsub.s32 %v4169, %v4171
        %v4173 = vrot.slane %v4159, %v4172
        %v4174 = vcombine.low %v4002, %v4004
        %v4175 = vcombine.high %v4002, %v4004
        %v4177 = vunpack.c.l.s4 1983009808
        %v4178 = vunpack.c.0.s8 %v4177
        %v4179 = vlaneseq
        %v4180 = vshrl.u32 %v4179, 7
        %v4181 = vsub.s32 %v4178, %v4180
        %v4182 = vrot.slane %v4174, %v4181
        %v4184 = vunpack.c.l.s4 1983009808
        %v4185 = vunpack.c.0.s8 %v4184
        %v4186 = vlaneseq
        %v4187 = vshrl.u32 %v4186, 7
        %v4188 = vsub.s32 %v4185, %v4187
        %v4189 = vrot.slane %v4175, %v4188
        %v4190 = vcombine.low %v4003, %v4005
        %v4191 = vcombine.high %v4003, %v4005
        %v4193 = vunpack.c.l.s4 1983009808
        %v4194 = vunpack.c.0.s8 %v4193
        %v4195 = vlaneseq
        %v4196 = vshrl.u32 %v4195, 7
        %v4197 = vsub.s32 %v4194, %v4196
        %v4198 = vrot.slane %v4190, %v4197
        %v4200 = vunpack.c.l.s4 1983009808
        %v4201 = vunpack.c.0.s8 %v4200
        %v4202 = vlaneseq
        %v4203 = vshrl.u32 %v4202, 7
        %v4204 = vsub.s32 %v4201, %v4203
        %v4205 = vrot.slane %v4191, %v4204
        %v4206 = vcombine.low %v4150, %v4166
        %v4207 = vcombine.high %v4150, %v4166
        %v4209 = vunpack.c.l.s4 1934713408
        %v4210 = vunpack.c.0.s8 %v4209
        %v4211 = vlaneseq
        %v4212 = vshrl.u32 %v4211, 7
        %v4213 = vsub.s32 %v4210, %v4212
        %v4214 = vrot.slane %v4206, %v4213
        %v4216 = vunpack.c.l.s4 1934713408
        %v4217 = vunpack.c.0.s8 %v4216
        %v4218 = vlaneseq
        %v4219 = vshrl.u32 %v4218, 7
        %v4220 = vsub.s32 %v4217, %v4219
        %v4221 = vrot.slane %v4207, %v4220
        %v4222 = vcombine.low %v4157, %v4173
        %v4223 = vcombine.high %v4157, %v4173
        %v4225 = vunpack.c.l.s4 1934713408
        %v4226 = vunpack.c.0.s8 %v4225
        %v4227 = vlaneseq
        %v4228 = vshrl.u32 %v4227, 7
        %v4229 = vsub.s32 %v4226, %v4228
        %v4230 = vrot.slane %v4222, %v4229
        %v4232 = vunpack.c.l.s4 1934713408
        %v4233 = vunpack.c.0.s8 %v4232
        %v4234 = vlaneseq
        %v4235 = vshrl.u32 %v4234, 7
        %v4236 = vsub.s32 %v4233, %v4235
        %v4237 = vrot.slane %v4223, %v4236
        %v4238 = vcombine.low %v4182, %v4198
        %v4239 = vcombine.high %v4182, %v4198
        %v4241 = vunpack.c.l.s4 1934713408
        %v4242 = vunpack.c.0.s8 %v4241
        %v4243 = vlaneseq
        %v4244 = vshrl.u32 %v4243, 7
        %v4245 = vsub.s32 %v4242, %v4244
        %v4246 = vrot.slane %v4238, %v4245
        %v4248 = vunpack.c.l.s4 1934713408
        %v4249 = vunpack.c.0.s8 %v4248
        %v4250 = vlaneseq
        %v4251 = vshrl.u32 %v4250, 7
        %v4252 = vsub.s32 %v4249, %v4251
        %v4253 = vrot.slane %v4239, %v4252
        %v4254 = vcombine.low %v4189, %v4205
        %v4255 = vcombine.high %v4189, %v4205
        %v4257 = vunpack.c.l.s4 1934713408
        %v4258 = vunpack.c.0.s8 %v4257
        %v4259 = vlaneseq
        %v4260 = vshrl.u32 %v4259, 7
        %v4261 = vsub.s32 %v4258, %v4260
        %v4262 = vrot.slane %v4254, %v4261
        %v4264 = vunpack.c.l.s4 1934713408
        %v4265 = vunpack.c.0.s8 %v4264
        %v4266 = vlaneseq
        %v4267 = vshrl.u32 %v4266, 7
        %v4268 = vsub.s32 %v4265, %v4267
        %v4269 = vrot.slane %v4255, %v4268
        %v4270 = vcombine.low %v4214, %v4246
        %v4271 = vcombine.high %v4214, %v4246
        %v4272 = vcombine.low %v4221, %v4253
        %v4273 = vcombine.high %v4221, %v4253
        %v4274 = vcombine.low %v4230, %v4262
        %v4275 = vcombine.high %v4230, %v4262
        %v4276 = vcombine.low %v4237, %v4269
        %v4277 = vcombine.high %v4237, %v4269
        %4280 = vrot.lane.b32.xlu0 %v4135, 32
        %v4281 = vpop.permute.xlu0 %4280
        %4282 = vrot.lane.b32.xlu0 %v4271, 32
        %v4283 = vpop.permute.xlu0 %4282
        %4288 = vrot.lane.b32.xlu0 %v4136, 64
        %v4289 = vpop.permute.xlu0 %4288
        %4290 = vrot.lane.b32.xlu0 %v4272, 64
        %v4291 = vpop.permute.xlu0 %4290
        %4296 = vrot.lane.b32.xlu0 %v4137, 96
        %v4297 = vpop.permute.xlu0 %4296
        %4298 = vrot.lane.b32.xlu0 %v4273, 96
        %v4299 = vpop.permute.xlu0 %4298
        %4304 = vrot.lane.b32.xlu0 %v4139, 32
        %v4305 = vpop.permute.xlu0 %4304
        %4306 = vrot.lane.b32.xlu0 %v4275, 32
        %v4307 = vpop.permute.xlu0 %4306
        %4312 = vrot.lane.b32.xlu0 %v4140, 64
        %v4313 = vpop.permute.xlu0 %4312
        %4314 = vrot.lane.b32.xlu0 %v4276, 64
        %v4315 = vpop.permute.xlu0 %4314
        %4320 = vrot.lane.b32.xlu0 %v4141, 96
        %v4321 = vpop.permute.xlu0 %4320
        %4322 = vrot.lane.b32.xlu0 %v4277, 96
        %v4323 = vpop.permute.xlu0 %4322
        %v4326 = vsel %vm2820, %v4134, %v4281
        %v4327 = vsel %vm2820, %v4270, %v4283
        %vm4328 = vcmask 523264
        %v4329 = vsel %vm4328, %v4326, %v4289
        %v4330 = vsel %vm4328, %v4327, %v4291
        %vm4331 = vcmask 785408
        %v4332 = vsel %vm4331, %v4329, %v4297
        %v4333 = vsel %vm4331, %v4330, %v4299
        %v4334 = vsel %vm2820, %v4138, %v4305
        %v4335 = vsel %vm2820, %v4274, %v4307
        %v4336 = vsel %vm4328, %v4334, %v4313
        %v4337 = vsel %vm4328, %v4335, %v4315
        %v4338 = vsel %vm4331, %v4336, %v4321
        %v4339 = vsel %vm4331, %v4337, %v4323
        %v4340 = vpack.c.bf16 %v4333, %v4332
        %v4341 = vpack.c.bf16 %v4339, %v4338
        %v4342 = vld [vmem:[#allocation8] sm:$0xff]
        %v4343 = vld [vmem:[#allocation8 + $0x8] sm:$0xff]
        %v4344 = vld [vmem:[#allocation8 + $0x10] sm:$0xff]
        %v4345 = vld [vmem:[#allocation8 + $0x18] sm:$0xff]
        %v4346 = vld [vmem:[#allocation8 + $0x20] sm:$0xff]
        %v4347 = vld [vmem:[#allocation8 + $0x28] sm:$0xff]
        %v4348 = vld [vmem:[#allocation8 + $0x30] sm:$0xff]
        %v4349 = vld [vmem:[#allocation8 + $0x38] sm:$0xff]
        %v4350 = vld [vmem:[#allocation8 + $0x40] sm:$0xff]
        %v4351 = vld [vmem:[#allocation8 + $0x48] sm:$0xff]
        %v4352 = vld [vmem:[#allocation8 + $0x50] sm:$0xff]
        %v4353 = vld [vmem:[#allocation8 + $0x58] sm:$0xff]
        %v4354 = vld [vmem:[#allocation8 + $0x60] sm:$0xff]
        %v4355 = vld [vmem:[#allocation8 + $0x68] sm:$0xff]
        %v4356 = vld [vmem:[#allocation8 + $0x70] sm:$0xff]
        %v4357 = vld [vmem:[#allocation8 + $0x78] sm:$0xff]
        %v4358 = vld [vmem:[#allocation8 + $0x80] sm:$0xff]
        %v4359 = vld [vmem:[#allocation8 + $0x88] sm:$0xff]
        %v4360 = vld [vmem:[#allocation8 + $0x90] sm:$0xff]
        %v4361 = vld [vmem:[#allocation8 + $0x98] sm:$0xff]
        %v4362 = vld [vmem:[#allocation8 + $0xa0] sm:$0xff]
        %v4363 = vld [vmem:[#allocation8 + $0xa8] sm:$0xff]
        %v4364 = vld [vmem:[#allocation8 + $0xb0] sm:$0xff]
        %v4365 = vld [vmem:[#allocation8 + $0xb8] sm:$0xff]
        %v4366 = vld [vmem:[#allocation8 + $0xc0] sm:$0xff]
        %v4367 = vld [vmem:[#allocation8 + $0xc8] sm:$0xff]
        %v4368 = vld [vmem:[#allocation8 + $0xd0] sm:$0xff]
        %v4369 = vld [vmem:[#allocation8 + $0xd8] sm:$0xff]
        %v4370 = vld [vmem:[#allocation8 + $0xe0] sm:$0xff]
        %v4371 = vld [vmem:[#allocation8 + $0xe8] sm:$0xff]
        %v4372 = vld [vmem:[#allocation8 + $0xf0] sm:$0xff]
        %v4373 = vld [vmem:[#allocation8 + $0xf8] sm:$0xff]
        %v4374 = vld [vmem:[%s4] sm:$0x3]
        %v4376 = vlaneseq
        %v4377 = vshrl.u32 %v4376, 7
        %v4378 = vsub.s32 0, %v4377
        %v4379 = vrot.slane %v4374, %v4378
        %v4380 = vlaneseq
        %v4381 = vshrl.u32 %v4380, 7
        %v4382 = vsub.s32 1, %v4381
        %v4383 = vrot.slane %v4374, %v4382
        %v4418 = vunpack.c.l.b16 %v4342
        %v4419 = vunpack.c.h.b16 %v4342
        %v4420 = vunpack.c.l.b16 %v4343
        %v4421 = vunpack.c.h.b16 %v4343
        %v4422 = vunpack.c.l.b16 %v4344
        %v4423 = vunpack.c.h.b16 %v4344
        %v4424 = vunpack.c.l.b16 %v4345
        %v4425 = vunpack.c.h.b16 %v4345
        %v4426 = vunpack.c.l.b16 %v4346
        %v4427 = vunpack.c.h.b16 %v4346
        %v4428 = vunpack.c.l.b16 %v4347
        %v4429 = vunpack.c.h.b16 %v4347
        %v4430 = vunpack.c.l.b16 %v4348
        %v4431 = vunpack.c.h.b16 %v4348
        %v4432 = vunpack.c.l.b16 %v4349
        %v4433 = vunpack.c.h.b16 %v4349
        %v4434 = vunpack.c.l.b16 %v4350
        %v4435 = vunpack.c.h.b16 %v4350
        %v4436 = vunpack.c.l.b16 %v4351
        %v4437 = vunpack.c.h.b16 %v4351
        %v4438 = vunpack.c.l.b16 %v4352
        %v4439 = vunpack.c.h.b16 %v4352
        %v4440 = vunpack.c.l.b16 %v4353
        %v4441 = vunpack.c.h.b16 %v4353
        %v4442 = vunpack.c.l.b16 %v4354
        %v4443 = vunpack.c.h.b16 %v4354
        %v4444 = vunpack.c.l.b16 %v4355
        %v4445 = vunpack.c.h.b16 %v4355
        %v4446 = vunpack.c.l.b16 %v4356
        %v4447 = vunpack.c.h.b16 %v4356
        %v4448 = vunpack.c.l.b16 %v4357
        %v4449 = vunpack.c.h.b16 %v4357
        %v4450 = vunpack.c.l.b16 %v4358
        %v4451 = vunpack.c.h.b16 %v4358
        %v4452 = vunpack.c.l.b16 %v4359
        %v4453 = vunpack.c.h.b16 %v4359
        %v4454 = vunpack.c.l.b16 %v4360
        %v4455 = vunpack.c.h.b16 %v4360
        %v4456 = vunpack.c.l.b16 %v4361
        %v4457 = vunpack.c.h.b16 %v4361
        %v4458 = vunpack.c.l.b16 %v4362
        %v4459 = vunpack.c.h.b16 %v4362
        %v4460 = vunpack.c.l.b16 %v4363
        %v4461 = vunpack.c.h.b16 %v4363
        %v4462 = vunpack.c.l.b16 %v4364
        %v4463 = vunpack.c.h.b16 %v4364
        %v4464 = vunpack.c.l.b16 %v4365
        %v4465 = vunpack.c.h.b16 %v4365
        %v4466 = vunpack.c.l.b16 %v4366
        %v4467 = vunpack.c.h.b16 %v4366
        %v4468 = vunpack.c.l.b16 %v4367
        %v4469 = vunpack.c.h.b16 %v4367
        %v4470 = vunpack.c.l.b16 %v4368
        %v4471 = vunpack.c.h.b16 %v4368
        %v4472 = vunpack.c.l.b16 %v4369
        %v4473 = vunpack.c.h.b16 %v4369
        %v4474 = vunpack.c.l.b16 %v4370
        %v4475 = vunpack.c.h.b16 %v4370
        %v4476 = vunpack.c.l.b16 %v4371
        %v4477 = vunpack.c.h.b16 %v4371
        %v4478 = vunpack.c.l.b16 %v4372
        %v4479 = vunpack.c.h.b16 %v4372
        %v4480 = vunpack.c.l.b16 %v4373
        %v4481 = vunpack.c.h.b16 %v4373
        %v4482 = vpack.c.b16 %v4420, %v4418
        %v4483 = vpack.c.b16 %v4421, %v4419
        %v4484 = vpack.c.b16 %v4424, %v4422
        %v4485 = vpack.c.b16 %v4425, %v4423
        %v4486 = vpack.c.b16 %v4428, %v4426
        %v4487 = vpack.c.b16 %v4429, %v4427
        %v4488 = vpack.c.b16 %v4432, %v4430
        %v4489 = vpack.c.b16 %v4433, %v4431
        %v4490 = vpack.c.b16 %v4436, %v4434
        %v4491 = vpack.c.b16 %v4437, %v4435
        %v4492 = vpack.c.b16 %v4440, %v4438
        %v4493 = vpack.c.b16 %v4441, %v4439
        %v4494 = vpack.c.b16 %v4444, %v4442
        %v4495 = vpack.c.b16 %v4445, %v4443
        %v4496 = vpack.c.b16 %v4448, %v4446
        %v4497 = vpack.c.b16 %v4449, %v4447
        %v4498 = vpack.c.b16 %v4452, %v4450
        %v4499 = vpack.c.b16 %v4453, %v4451
        %v4500 = vpack.c.b16 %v4456, %v4454
        %v4501 = vpack.c.b16 %v4457, %v4455
        %v4502 = vpack.c.b16 %v4460, %v4458
        %v4503 = vpack.c.b16 %v4461, %v4459
        %v4504 = vpack.c.b16 %v4464, %v4462
        %v4505 = vpack.c.b16 %v4465, %v4463
        %v4506 = vpack.c.b16 %v4468, %v4466
        %v4507 = vpack.c.b16 %v4469, %v4467
        %v4508 = vpack.c.b16 %v4472, %v4470
        %v4509 = vpack.c.b16 %v4473, %v4471
        %v4510 = vpack.c.b16 %v4476, %v4474
        %v4511 = vpack.c.b16 %v4477, %v4475
        %v4512 = vpack.c.b16 %v4480, %v4478
        %v4513 = vpack.c.b16 %v4481, %v4479
        %4546 = vmatprep.subr.bf16.mxu0 %v4497
        %4547 = vmatpush1.bf16.msra.mxu0 %v4496
        %4548 = vmatprep.subr.bf16.mxu0 %v4495
        %4549 = vmatpush1.bf16.msra.mxu0 %v4494
        %4550 = vmatprep.subr.bf16.mxu0 %v4493
        %4551 = vmatpush1.bf16.msra.mxu0 %v4492
        %4552 = vmatprep.subr.bf16.mxu0 %v4491
        %4553 = vmatpush1.bf16.msra.mxu0 %v4490
        %4554 = vmatprep.subr.bf16.mxu0 %v4489
        %4555 = vmatpush1.bf16.msra.mxu0 %v4488
        %4556 = vmatprep.subr.bf16.mxu0 %v4487
        %4557 = vmatpush1.bf16.msra.mxu0 %v4486
        %4558 = vmatprep.subr.bf16.mxu0 %v4485
        %4559 = vmatpush1.bf16.msra.mxu0 %v4484
        %4560 = vmatprep.subr.bf16.mxu0 %v4483
        %4561 = vmatpush1.bf16.msra.mxu0 %v4482
        %4562 = vmatprep.subr.bf16.mxu0 %v4513
        %4563 = vmatpush2.bf16.msra.mxu0 %v4512
        %4564 = vmatprep.subr.bf16.mxu0 %v4511
        %4565 = vmatpush2.bf16.msra.mxu0 %v4510
        %4566 = vmatprep.subr.bf16.mxu0 %v4509
        %4567 = vmatpush2.bf16.msra.mxu0 %v4508
        %4568 = vmatprep.subr.bf16.mxu0 %v4507
        %4569 = vmatpush2.bf16.msra.mxu0 %v4506
        %4570 = vmatprep.subr.bf16.mxu0 %v4505
        %4571 = vmatpush2.bf16.msra.mxu0 %v4504
        %4572 = vmatprep.subr.bf16.mxu0 %v4503
        %4573 = vmatpush2.bf16.msra.mxu0 %v4502
        %4574 = vmatprep.subr.bf16.mxu0 %v4501
        %4575 = vmatpush2.bf16.msra.mxu0 %v4500
        %4576 = vmatprep.subr.bf16.mxu0 %v4499
        %4577 = vmatpush2.bf16.msra.mxu0 %v4498
        %4578 = vmatprep.mubr.bf16.mxu0 %v4341
        %4579 = vmatmul.mubr.bf16.gmra.mxu0 %v4340
        %v4580 = vpop.f32.mrf.mxu0
        %v4581 = vadd.f32 %v4379, %v4580
        %v4582 = vpop.f32.mrf.mxu0
        %v4583 = vadd.f32 %v4383, %v4582
        %v4584 = vpop.f32.mrf.mxu0
        %v4585 = vadd.f32 %v4379, %v4584
        %v4586 = vpop.f32.mrf.mxu0
        %v4587 = vadd.f32 %v4383, %v4586
        %4588 = vdwg.mxu0
        %4589 = vst [vmem:[%s284] sm:$0xff] %v4581
        %4590 = vst [vmem:[%s284 + $0x8] sm:$0xff] %v4583
        %4591 = vst [vmem:[%s284 + $0x10] sm:$0xff] %v4585
        %4592 = vst [vmem:[%s284 + $0x18] sm:$0xff] %v4587
        %s4593 = sand.u32 %s142, 1
        %s4594 = scalar_lea.sflag [#allocation4], %s4593
        %s4595 = sand.u32 %s142, 1
        %s4596 = smul.addr %s4595, 32
        %s4597 = scalar_lea.vmem [#allocation10], %s4596
        // Predicated region
        $region57: #{tpu_custom_call.1} parent=39 // pred_check
          %p4598 = pneg %p152
        $region58: #{tpu_custom_call.1} parent=39 // pred_check_branch
          %4600 = sbr.rel (%p4598) target = $region60
        $region59: #{tpu_custom_call.1} parent=39 // pred_region
          %s4602 = ssub.s32 512, 512
          %4603 = vsyncadd %s4594, %s4602
          %s4604 = smul.addr %s24, 4
          %s4605 = smul.addr %s4604, 128
          %s4606 = scalar_lea.hbm %s5, %s4605
          %s4607 = sshll.u32 %s4597, 4
          %s4608 = int_to_ptr.vmem [resolvable:$true] %s4607
          %4613 = dma.vmem_to_hbm [thread:$0]  %s4608, 512, %s4606, %s4594, 256, 256, 16
        $region60: #{tpu_custom_call.1} parent=39 // pred_fallthru
          _
      $region40: #{tpu_custom_call.1} parent=5 // pred_fallthru
        _
      %p4614 = scmp.le.s32.totalorder 2, %s19
      // Predicated region
      $region61: #{tpu_custom_call.1} parent=5 // pred_check
        %p4615 = pneg %p4614
      $region62: #{tpu_custom_call.1} parent=5 // pred_check_branch
        %4617 = sbr.rel (%p4615) target = $region64
      $region63: #{tpu_custom_call.1} parent=5 // pred_region
        %s4618 = ssub.s32 %s19, 2
        // Predicated region
        $region65: #{tpu_custom_call.1} parent=63 // pred_check
          %p4619 = pneg %p158
        $region66: #{tpu_custom_call.1} parent=63 // pred_check_branch
          %4621 = sbr.rel (%p4619) target = $region68
        $region67: #{tpu_custom_call.1} parent=63 // pred_region
          %s4622 = sand.u32 %s143, 1
          %s4623 = scalar_lea.sflag [#allocation4], %s4622
          %s4624 = sand.u32 %s143, 1
          %s4625 = smul.addr %s4624, 32
          %s4626 = scalar_lea.vmem [#allocation10], %s4625
          %4627 = dma.done %s4623, 512
        $region68: #{tpu_custom_call.1} parent=63 // pred_fallthru
          _
      $region64: #{tpu_custom_call.1} parent=5 // pred_fallthru
        _
    $region6: #{tpu_custom_call.1} parent=1 // loop_footer
      %s23 = sadd.s32 1, %s19
    $region7: #{tpu_custom_call.1} parent=1 // loop_footer_branch
      %18 = sbr.rel target = $region3
    $region8: #{tpu_custom_call.1} parent=1 // loop_exit
      _
    %4628 = vsyncpa [#allocation3], 1
    %s4629 = scalar_lea.sflag [#allocation3], 1
    %4630 = vsyncpa %s4629, 1
    %4631 = vsyncpa [#allocation6], 1
    %4632 = vsyncpa [#allocation9], 1
    %4633 = vsyncpa [#allocation4], 1
    %s4634 = scalar_lea.sflag [#allocation4], 1
    %4635 = vsyncpa %s4634, 1

</llo_original>
